<compile_context>
chip_gen: v5e
topology: v5e:2x2
jax: 0.10.0
libtpu: 0.0.40
codegen_flags: <defaults>
</compile_context>

<pallas_src>
import functools
import math

import jax
import jax.numpy as jnp
from jax import lax
from jax.experimental import pallas as pl
from jax.experimental.pallas import tpu as pltpu

_LN_EPS = 1e-5
_INV_SQRT2 = 0.7071067811865476


# ----------------------------------------------------------------------------
# In-kernel math helpers (all f32)
# ----------------------------------------------------------------------------
def _erf(x):
    # Abramowitz & Stegun 7.1.26 rational/exp approximation, |err| <= 1.5e-7
    # (f32-exact for practical purposes); uses only mul/add/div/exp -> always lowers.
    a1, a2, a3, a4, a5 = 0.254829592, -0.284496736, 1.421413741, -1.453152027, 1.061405429
    p = 0.3275911
    sgn = jnp.where(x >= 0.0, 1.0, -1.0)
    ax = jnp.abs(x)
    t = 1.0 / (1.0 + p * ax)
    poly = ((((a5 * t + a4) * t + a3) * t + a2) * t + a1) * t
    return sgn * (1.0 - poly * jnp.exp(-ax * ax))


def _gelu(x):
    # exact (erf-based) GELU, matching torch.nn.functional.gelu default
    return 0.5 * x * (1.0 + _erf(x * _INV_SQRT2))


def _layer_norm(x, g, b):
    # x: (S, D) f32; g, b: (1, D) f32
    mean = jnp.mean(x, axis=-1, keepdims=True)
    var = jnp.mean(jnp.square(x - mean), axis=-1, keepdims=True)
    return (x - mean) * lax.rsqrt(var + _LN_EPS) * g + b


def _mha(xq, xkv, wqkv, bqkv, wo, bo, *, num_heads, head_dim):
    """Multi-head attention for one batch element; heads live on the leading
    (batch) axis of every matmul -> no per-head lane slicing / masked stores.

    xq:   (Sq, D) f32   query-side input (already normed by caller)
    xkv:  (Sk, D) f32   key/value-side input
    wqkv: (3, H, D, Dh) f32, bqkv: (3, H, 1, Dh) f32
    wo:   (H, Dh, D) f32,    bo:   (1, D) f32
    returns (Sq, D) f32
    """
    h = num_heads
    sq, d = xq.shape
    sk = xkv.shape[0]
    xq_b = jnp.broadcast_to(xq[None, :, :], (h, sq, d))
    xkv_b = jnp.broadcast_to(xkv[None, :, :], (h, sk, d))

    proj_dims = (((2,), (1,)), ((0,), (0,)))          # 'hsd,hdf->hsf'
    q = lax.dot_general(xq_b, wqkv[0], proj_dims,
                        preferred_element_type=jnp.float32) + bqkv[0]   # (H,Sq,Dh)
    k = lax.dot_general(xkv_b, wqkv[1], proj_dims,
                        preferred_element_type=jnp.float32) + bqkv[1]   # (H,Sk,Dh)
    v = lax.dot_general(xkv_b, wqkv[2], proj_dims,
                        preferred_element_type=jnp.float32) + bqkv[2]   # (H,Sk,Dh)

    # scores: 'hqd,hkd->hqk'
    s = lax.dot_general(q, k, (((2,), (2,)), ((0,), (0,))),
                        preferred_element_type=jnp.float32)
    s = s * (1.0 / math.sqrt(float(head_dim)))
    s = s - jnp.max(s, axis=-1, keepdims=True)        # stable softmax (f32)
    p = jnp.exp(s)
    p = p / jnp.sum(p, axis=-1, keepdims=True)        # exact division

    # attention output: 'hqk,hkd->hqd'
    o = lax.dot_general(p, v, (((2,), (1,)), ((0,), (0,))),
                        preferred_element_type=jnp.float32)             # (H,Sq,Dh)

    # out-projection: sum_h o[h] @ wo[h]   ('hqd,hdf->hqf' then reduce over h)
    proj = lax.dot_general(o, wo, (((2,), (1,)), ((0,), (0,))),
                           preferred_element_type=jnp.float32)          # (H,Sq,D)
    out = proj[0]
    for i in range(1, h):
        out = out + proj[i]
    return out + bo


# ----------------------------------------------------------------------------
# Fused per-layer kernels (grid = (batch,), one batch element per grid step)
# ----------------------------------------------------------------------------
def _encoder_layer_kernel(x_ref,
                          ln1g_ref, ln1b_ref, wqkv_ref, bqkv_ref, wo_ref, bo_ref,
                          ln2g_ref, ln2b_ref, w1_ref, b1_ref, w2_ref, b2_ref,
                          o_ref, *, num_heads, head_dim):
    x = x_ref[0]                                                       # (S, D) f32
    # --- pre-norm self-attention + residual ---
    xn = _layer_norm(x, ln1g_ref[...], ln1b_ref[...])
    x = x + _mha(xn, xn, wqkv_ref[...], bqkv_ref[...], wo_ref[...], bo_ref[...],
                 num_heads=num_heads, head_dim=head_dim)
    # --- pre-norm feed-forward + residual ---
    xn = _layer_norm(x, ln2g_ref[...], ln2b_ref[...])
    hdn = _gelu(jnp.dot(xn, w1_ref[...], preferred_element_type=jnp.float32) + b1_ref[...])
    ff = jnp.dot(hdn, w2_ref[...], preferred_element_type=jnp.float32) + b2_ref[...]
    o_ref[0] = (x + ff).astype(o_ref.dtype)


def _decoder_layer_kernel(y_ref, enc_ref,
                          ln1g_ref, ln1b_ref, sa_wqkv_ref, sa_bqkv_ref, sa_wo_ref, sa_bo_ref,
                          ln2g_ref, ln2b_ref, ca_wqkv_ref, ca_bqkv_ref, ca_wo_ref, ca_bo_ref,
                          ln3g_ref, ln3b_ref, w1_ref, b1_ref, w2_ref, b2_ref,
                          o_ref, *, num_heads, head_dim):
    y = y_ref[0]                                                       # (St, D) f32
    enc = enc_ref[0]                                                   # (Ss, D) f32
    # --- pre-norm self-attention + residual ---
    yn = _layer_norm(y, ln1g_ref[...], ln1b_ref[...])
    y = y + _mha(yn, yn, sa_wqkv_ref[...], sa_bqkv_ref[...], sa_wo_ref[...], sa_bo_ref[...],
                 num_heads=num_heads, head_dim=head_dim)
    # --- pre-norm cross-attention + residual (K/V from raw encoder output) ---
    yn = _layer_norm(y, ln2g_ref[...], ln2b_ref[...])
    y = y + _mha(yn, enc, ca_wqkv_ref[...], ca_bqkv_ref[...], ca_wo_ref[...], ca_bo_ref[...],
                 num_heads=num_heads, head_dim=head_dim)
    # --- pre-norm feed-forward + residual ---
    yn = _layer_norm(y, ln3g_ref[...], ln3b_ref[...])
    hdn = _gelu(jnp.dot(yn, w1_ref[...], preferred_element_type=jnp.float32) + b1_ref[...])
    ff = jnp.dot(hdn, w2_ref[...], preferred_element_type=jnp.float32) + b2_ref[...]
    o_ref[0] = (y + ff).astype(o_ref.dtype)


def _fc_kernel(x_ref, w_ref, b_ref, o_ref):
    o_ref[...] = (jnp.dot(x_ref[...], w_ref[...],
                          preferred_element_type=jnp.float32) + b_ref[...]).astype(o_ref.dtype)


# ----------------------------------------------------------------------------
# pallas_call wrappers
# ----------------------------------------------------------------------------
def _rep_spec(shape):
    """Full-array block, replicated across the batch grid axis."""
    nd = len(shape)
    return pl.BlockSpec(shape, lambda b: (0,) * nd)


def _encoder_weights(p):
    a, f = p["attn"], p["ff"]
    return (p["norm1"]["g"], p["norm1"]["b"], a["wqkv"], a["bqkv"], a["wo"], a["bo"],
            p["norm2"]["g"], p["norm2"]["b"], f["w1"], f["b1"], f["w2"], f["b2"])


def _decoder_weights(p):
    sa, ca, f = p["self_attn"], p["cross_attn"], p["ff"]
    return (p["norm1"]["g"], p["norm1"]["b"], sa["wqkv"], sa["bqkv"], sa["wo"], sa["bo"],
            p["norm2"]["g"], p["norm2"]["b"], ca["wqkv"], ca["bqkv"], ca["wo"], ca["bo"],
            p["norm3"]["g"], p["norm3"]["b"], f["w1"], f["b1"], f["w2"], f["b2"])


def encoder_layer_call(p, x, num_heads):
    B, S, D = x.shape
    weights = _encoder_weights(p)
    kernel = functools.partial(_encoder_layer_kernel,
                               num_heads=num_heads, head_dim=D // num_heads)
    return pl.pallas_call(
        kernel,
        out_shape=jax.ShapeDtypeStruct((B, S, D), jnp.float32),
        grid=(B,),
        in_specs=[pl.BlockSpec((1, S, D), lambda b: (b, 0, 0))]
                 + [_rep_spec(w.shape) for w in weights],
        out_specs=pl.BlockSpec((1, S, D), lambda b: (b, 0, 0)),
        compiler_params=pltpu.CompilerParams(dimension_semantics=("parallel",)),
    )(x, *weights)


def decoder_layer_call(p, y, enc, num_heads):
    B, St, D = y.shape
    Ss = enc.shape[1]
    weights = _decoder_weights(p)
    kernel = functools.partial(_decoder_layer_kernel,
                               num_heads=num_heads, head_dim=D // num_heads)
    return pl.pallas_call(
        kernel,
        out_shape=jax.ShapeDtypeStruct((B, St, D), jnp.float32),
        grid=(B,),
        in_specs=[pl.BlockSpec((1, St, D), lambda b: (b, 0, 0)),
                  pl.BlockSpec((1, Ss, D), lambda b: (b, 0, 0))]
                 + [_rep_spec(w.shape) for w in weights],
        out_specs=pl.BlockSpec((1, St, D), lambda b: (b, 0, 0)),
        compiler_params=pltpu.CompilerParams(dimension_semantics=("parallel",)),
    )(y, enc, *weights)


def fc_call(p, x):
    B, D = x.shape
    N = p["w"].shape[1]
    return pl.pallas_call(
        _fc_kernel,
        out_shape=jax.ShapeDtypeStruct((B, N), jnp.float32),
        grid=(1,),
        in_specs=[pl.BlockSpec((B, D), lambda i: (0, 0)),
                  pl.BlockSpec((D, N), lambda i: (0, 0)),
                  pl.BlockSpec((1, N), lambda i: (0, 0))],
        out_specs=pl.BlockSpec((B, N), lambda i: (0, 0)),
    )(x, p["w"], p["b"])


def transformer_forward(params, src, tgt, num_heads):
    x = src
    for lp in params["encoder"]:
        x = encoder_layer_call(lp, x, num_heads)            # encoder stack
    y = tgt
    for lp in params["decoder"]:
        y = decoder_layer_call(lp, y, x, num_heads)         # decoder stack (cross-attn on x)
    return fc_call(params["fc"], y[:, 0, :])                # final head on token 0


# ----------------------------------------------------------------------------
# Deterministic parameter init (nn.Linear / nn.LayerNorm semantics; head-major
# attention weight layout so kernels never lane-slice per head)
# ----------------------------------------------------------------------------
def init_linear(key, din, dout):
    k1, k2 = jax.random.split(key)
    bound = 1.0 / math.sqrt(din)
    w = jax.random.uniform(k1, (din, dout), jnp.float32, -bound, bound)
    b = jax.random.uniform(k2, (dout,), jnp.float32, -bound, bound)
    return w, b


def init_mha(key, d, num_heads):
    dh = d // num_heads
    ks = jax.random.split(key, 4)
    wq, bq = init_linear(ks[0], d, d)
    wk, bk = init_linear(ks[1], d, d)
    wv, bv = init_linear(ks[2], d, d)
    wo, bo = init_linear(ks[3], d, d)

    def heads_w(w):   # (D, D) -> (H, D, Dh)
        return jnp.transpose(w.reshape(d, num_heads, dh), (1, 0, 2))

    def heads_b(b):   # (D,) -> (H, 1, Dh)
        return b.reshape(num_heads, 1, dh)

    return dict(
        wqkv=jnp.stack([heads_w(wq), heads_w(wk), heads_w(wv)]),   # (3, H, D, Dh)
        bqkv=jnp.stack([heads_b(bq), heads_b(bk), heads_b(bv)]),   # (3, H, 1, Dh)
        wo=wo.reshape(num_heads, dh, d),                           # (H, Dh, D)
        bo=bo.reshape(1, d))


def init_ff(key, d, hdim):
    k1, k2 = jax.random.split(key)
    w1, b1 = init_linear(k1, d, hdim)
    w2, b2 = init_linear(k2, hdim, d)
    return dict(w1=w1, b1=b1.reshape(1, hdim), w2=w2, b2=b2.reshape(1, d))


def init_ln(d):
    return dict(g=jnp.ones((1, d), jnp.float32), b=jnp.zeros((1, d), jnp.float32))


def init_transformer(key, input_dim, output_dim, num_layers, num_heads, hidden_dim):
    enc_layers, dec_layers = [], []
    for _ in range(num_layers):
        key, k1, k2 = jax.random.split(key, 3)
        enc_layers.append(dict(
            norm1=init_ln(input_dim), attn=init_mha(k1, input_dim, num_heads),
            norm2=init_ln(input_dim), ff=init_ff(k2, input_dim, hidden_dim)))
    for _ in range(num_layers):
        key, k1, k2, k3 = jax.random.split(key, 4)
        dec_layers.append(dict(
            norm1=init_ln(input_dim), self_attn=init_mha(k1, input_dim, num_heads),
            norm2=init_ln(input_dim), cross_attn=init_mha(k2, input_dim, num_heads),
            norm3=init_ln(input_dim), ff=init_ff(k3, input_dim, hidden_dim)))
    key, kf = jax.random.split(key)
    wf, bf = init_linear(kf, input_dim, output_dim)
    return dict(encoder=enc_layers, decoder=dec_layers,
                fc=dict(w=wf, b=bf.reshape(1, output_dim)))


# ----------------------------------------------------------------------------
if __name__ == "__main__":
    # Small shapes consistent with the module's forward pass.
    B, S = 2, 8
    input_dim, output_dim = 32, 16
    num_layers, num_heads, hidden_dim = 2, 4, 64

    root = jax.random.PRNGKey(0)
    k_params, k_src, k_tgt = jax.random.split(root, 3)

    params = init_transformer(k_params, input_dim, output_dim,
                              num_layers, num_heads, hidden_dim)
    src = jax.random.normal(k_src, (B, S, input_dim), jnp.float32)
    tgt = jax.random.normal(k_tgt, (B, S, input_dim), jnp.float32)

    fwd = jax.jit(functools.partial(transformer_forward, num_heads=num_heads))
    out = jax.block_until_ready(fwd(params, src, tgt))
    assert out.shape == (B, output_dim) and out.dtype == jnp.float32
    print("KERNEL_OK")
</pallas_src>

<mosaic_0001>
module attributes {stable_mosaic.version = 11 : i64} {
  func.func @_encoder_layer_kernel(%arg0: i32, %arg1: memref<1x8x32xf32, #tpu.memory_space<vmem>>, %arg2: memref<1x32xf32, #tpu.memory_space<vmem>>, %arg3: memref<1x32xf32, #tpu.memory_space<vmem>>, %arg4: memref<3x4x32x8xf32, #tpu.memory_space<vmem>>, %arg5: memref<3x4x1x8xf32, #tpu.memory_space<vmem>>, %arg6: memref<4x8x32xf32, #tpu.memory_space<vmem>>, %arg7: memref<1x32xf32, #tpu.memory_space<vmem>>, %arg8: memref<1x32xf32, #tpu.memory_space<vmem>>, %arg9: memref<1x32xf32, #tpu.memory_space<vmem>>, %arg10: memref<32x64xf32, #tpu.memory_space<vmem>>, %arg11: memref<1x64xf32, #tpu.memory_space<vmem>>, %arg12: memref<64x32xf32, #tpu.memory_space<vmem>>, %arg13: memref<1x32xf32, #tpu.memory_space<vmem>>, %arg14: memref<1x8x32xf32, #tpu.memory_space<vmem>>) attributes {dimension_semantics = [#tpu.dimension_semantics<parallel>], iteration_bounds = array<i64: 2>, scalar_prefetch = 0 : i64, scratch_operands = 0 : i64, tpu.core_type = #tpu.core_type<tc>, window_params = [{transform_indices = @transform_0, window_bounds = array<i64: 1, 8, 32>}, {pipeline_mode = #tpu.pipeline_mode<synchronous>, transform_indices = @transform_1, window_bounds = array<i64: 1, 32>}, {pipeline_mode = #tpu.pipeline_mode<synchronous>, transform_indices = @transform_2, window_bounds = array<i64: 1, 32>}, {pipeline_mode = #tpu.pipeline_mode<synchronous>, transform_indices = @transform_3, window_bounds = array<i64: 3, 4, 32, 8>}, {pipeline_mode = #tpu.pipeline_mode<synchronous>, transform_indices = @transform_4, window_bounds = array<i64: 3, 4, 1, 8>}, {pipeline_mode = #tpu.pipeline_mode<synchronous>, transform_indices = @transform_5, window_bounds = array<i64: 4, 8, 32>}, {pipeline_mode = #tpu.pipeline_mode<synchronous>, transform_indices = @transform_6, window_bounds = array<i64: 1, 32>}, {pipeline_mode = #tpu.pipeline_mode<synchronous>, transform_indices = @transform_7, window_bounds = array<i64: 1, 32>}, {pipeline_mode = #tpu.pipeline_mode<synchronous>, transform_indices = @transform_8, window_bounds = array<i64: 1, 32>}, {pipeline_mode = #tpu.pipeline_mode<synchronous>, transform_indices = @transform_9, window_bounds = array<i64: 32, 64>}, {pipeline_mode = #tpu.pipeline_mode<synchronous>, transform_indices = @transform_10, window_bounds = array<i64: 1, 64>}, {pipeline_mode = #tpu.pipeline_mode<synchronous>, transform_indices = @transform_11, window_bounds = array<i64: 64, 32>}, {pipeline_mode = #tpu.pipeline_mode<synchronous>, transform_indices = @transform_12, window_bounds = array<i64: 1, 32>}, {transform_indices = @transform_13, window_bounds = array<i64: 1, 8, 32>}]} {
    %c0 = arith.constant 0 : index
    %c0_0 = arith.constant 0 : index
    %c0_1 = arith.constant 0 : index
    %0 = vector.load %arg1[%c0, %c0_0, %c0_1] : memref<1x8x32xf32, #tpu.memory_space<vmem>>, vector<1x8x32xf32>
    %1 = vector.shape_cast %0 : vector<1x8x32xf32> to vector<8x32xf32>
    %c0_2 = arith.constant 0 : index
    %c0_3 = arith.constant 0 : index
    %2 = vector.load %arg2[%c0_2, %c0_3] : memref<1x32xf32, #tpu.memory_space<vmem>>, vector<1x32xf32>
    %c0_4 = arith.constant 0 : index
    %c0_5 = arith.constant 0 : index
    %3 = vector.load %arg3[%c0_4, %c0_5] : memref<1x32xf32, #tpu.memory_space<vmem>>, vector<1x32xf32>
    %cst = arith.constant dense<0.000000e+00> : vector<8xf32>
    %4 = vector.multi_reduction <add>, %1, %cst [1] : vector<8x32xf32> to vector<8xf32>
    %5 = vector.shape_cast %4 : vector<8xf32> to vector<8x1xf32>
    %cst_6 = arith.constant 3.200000e+01 : f32
    %6 = vector.broadcast %cst_6 : f32 to vector<8x1xf32>
    %7 = arith.divf %5, %6 : vector<8x1xf32>
    %8 = vector.broadcast %7 : vector<8x1xf32> to vector<8x32xf32>
    %9 = arith.subf %1, %8 : vector<8x32xf32>
    %10 = arith.mulf %9, %9 : vector<8x32xf32>
    %cst_7 = arith.constant dense<0.000000e+00> : vector<8xf32>
    %11 = vector.multi_reduction <add>, %10, %cst_7 [1] : vector<8x32xf32> to vector<8xf32>
    %12 = vector.shape_cast %11 : vector<8xf32> to vector<8x1xf32>
    %cst_8 = arith.constant 3.200000e+01 : f32
    %13 = vector.broadcast %cst_8 : f32 to vector<8x1xf32>
    %14 = arith.divf %12, %13 : vector<8x1xf32>
    %15 = vector.broadcast %7 : vector<8x1xf32> to vector<8x32xf32>
    %16 = arith.subf %1, %15 : vector<8x32xf32>
    %cst_9 = arith.constant 9.99999974E-6 : f32
    %17 = vector.broadcast %cst_9 : f32 to vector<8x1xf32>
    %18 = arith.addf %14, %17 : vector<8x1xf32>
    %19 = math.rsqrt %18 : vector<8x1xf32>
    %20 = vector.broadcast %19 : vector<8x1xf32> to vector<8x32xf32>
    %21 = arith.mulf %16, %20 : vector<8x32xf32>
    %22 = vector.broadcast %2 : vector<1x32xf32> to vector<8x32xf32>
    %23 = arith.mulf %21, %22 : vector<8x32xf32>
    %24 = vector.broadcast %3 : vector<1x32xf32> to vector<8x32xf32>
    %25 = arith.addf %23, %24 : vector<8x32xf32>
    %c0_10 = arith.constant 0 : index
    %c0_11 = arith.constant 0 : index
    %c0_12 = arith.constant 0 : index
    %c0_13 = arith.constant 0 : index
    %26 = vector.load %arg4[%c0_10, %c0_11, %c0_12, %c0_13] : memref<3x4x32x8xf32, #tpu.memory_space<vmem>>, vector<3x4x32x8xf32>
    %c0_14 = arith.constant 0 : index
    %c0_15 = arith.constant 0 : index
    %c0_16 = arith.constant 0 : index
    %c0_17 = arith.constant 0 : index
    %27 = vector.load %arg5[%c0_14, %c0_15, %c0_16, %c0_17] : memref<3x4x1x8xf32, #tpu.memory_space<vmem>>, vector<3x4x1x8xf32>
    %c0_18 = arith.constant 0 : index
    %c0_19 = arith.constant 0 : index
    %c0_20 = arith.constant 0 : index
    %28 = vector.load %arg6[%c0_18, %c0_19, %c0_20] : memref<4x8x32xf32, #tpu.memory_space<vmem>>, vector<4x8x32xf32>
    %c0_21 = arith.constant 0 : index
    %c0_22 = arith.constant 0 : index
    %29 = vector.load %arg7[%c0_21, %c0_22] : memref<1x32xf32, #tpu.memory_space<vmem>>, vector<1x32xf32>
    %30 = vector.shape_cast %25 : vector<8x32xf32> to vector<1x8x32xf32>
    %31 = vector.shape_cast %30 : vector<1x8x32xf32> to vector<1x8x32xf32>
    %32 = vector.broadcast %31 : vector<1x8x32xf32> to vector<4x8x32xf32>
    %33 = vector.shape_cast %25 : vector<8x32xf32> to vector<1x8x32xf32>
    %34 = vector.shape_cast %33 : vector<1x8x32xf32> to vector<1x8x32xf32>
    %35 = vector.broadcast %34 : vector<1x8x32xf32> to vector<4x8x32xf32>
    %36 = vector.extract_strided_slice %26 {offsets = [0, 0, 0, 0], sizes = [1, 4, 32, 8], strides = [1, 1, 1, 1]} : vector<3x4x32x8xf32> to vector<1x4x32x8xf32>
    %37 = vector.shape_cast %36 : vector<1x4x32x8xf32> to vector<4x32x8xf32>
    %cst_23 = arith.constant dense<0.000000e+00> : vector<4x8x8xf32>
    %38 = tpu.matmul %32, %37, %cst_23 {dimension_numbers = #tpu.dot_dimension_numbers<[2], [1], [1], [2], [0, 0, 0, 1, 1, 2], [0], [0]>} : vector<4x8x32xf32>, vector<4x32x8xf32>, vector<4x8x8xf32> -> vector<4x8x8xf32>
    %39 = vector.extract_strided_slice %27 {offsets = [0, 0, 0, 0], sizes = [1, 4, 1, 8], strides = [1, 1, 1, 1]} : vector<3x4x1x8xf32> to vector<1x4x1x8xf32>
    %40 = vector.shape_cast %39 : vector<1x4x1x8xf32> to vector<4x1x8xf32>
    %41 = vector.broadcast %40 : vector<4x1x8xf32> to vector<4x8x8xf32>
    %42 = arith.addf %38, %41 : vector<4x8x8xf32>
    %43 = vector.extract_strided_slice %26 {offsets = [1, 0, 0, 0], sizes = [1, 4, 32, 8], strides = [1, 1, 1, 1]} : vector<3x4x32x8xf32> to vector<1x4x32x8xf32>
    %44 = vector.shape_cast %43 : vector<1x4x32x8xf32> to vector<4x32x8xf32>
    %cst_24 = arith.constant dense<0.000000e+00> : vector<4x8x8xf32>
    %45 = tpu.matmul %35, %44, %cst_24 {dimension_numbers = #tpu.dot_dimension_numbers<[2], [1], [1], [2], [0, 0, 0, 1, 1, 2], [0], [0]>} : vector<4x8x32xf32>, vector<4x32x8xf32>, vector<4x8x8xf32> -> vector<4x8x8xf32>
    %46 = vector.extract_strided_slice %27 {offsets = [1, 0, 0, 0], sizes = [1, 4, 1, 8], strides = [1, 1, 1, 1]} : vector<3x4x1x8xf32> to vector<1x4x1x8xf32>
    %47 = vector.shape_cast %46 : vector<1x4x1x8xf32> to vector<4x1x8xf32>
    %48 = vector.broadcast %47 : vector<4x1x8xf32> to vector<4x8x8xf32>
    %49 = arith.addf %45, %48 : vector<4x8x8xf32>
    %50 = vector.extract_strided_slice %26 {offsets = [2, 0, 0, 0], sizes = [1, 4, 32, 8], strides = [1, 1, 1, 1]} : vector<3x4x32x8xf32> to vector<1x4x32x8xf32>
    %51 = vector.shape_cast %50 : vector<1x4x32x8xf32> to vector<4x32x8xf32>
    %cst_25 = arith.constant dense<0.000000e+00> : vector<4x8x8xf32>
    %52 = tpu.matmul %35, %51, %cst_25 {dimension_numbers = #tpu.dot_dimension_numbers<[2], [1], [1], [2], [0, 0, 0, 1, 1, 2], [0], [0]>} : vector<4x8x32xf32>, vector<4x32x8xf32>, vector<4x8x8xf32> -> vector<4x8x8xf32>
    %53 = vector.extract_strided_slice %27 {offsets = [2, 0, 0, 0], sizes = [1, 4, 1, 8], strides = [1, 1, 1, 1]} : vector<3x4x1x8xf32> to vector<1x4x1x8xf32>
    %54 = vector.shape_cast %53 : vector<1x4x1x8xf32> to vector<4x1x8xf32>
    %55 = vector.broadcast %54 : vector<4x1x8xf32> to vector<4x8x8xf32>
    %56 = arith.addf %52, %55 : vector<4x8x8xf32>
    %cst_26 = arith.constant dense<0.000000e+00> : vector<4x8x8xf32>
    %57 = tpu.matmul %42, %49, %cst_26 {dimension_numbers = #tpu.dot_dimension_numbers<[2], [2], [1], [1], [0, 0, 0, 1, 1, 1], [0], [0]>} : vector<4x8x8xf32>, vector<4x8x8xf32>, vector<4x8x8xf32> -> vector<4x8x8xf32>
    %cst_27 = arith.constant 0.353553385 : f32
    %58 = vector.broadcast %cst_27 : f32 to vector<4x8x8xf32>
    %59 = arith.mulf %57, %58 : vector<4x8x8xf32>
    %cst_28 = arith.constant dense<0xFF800000> : vector<4x8xf32>
    %60 = vector.multi_reduction <maximumf>, %59, %cst_28 [2] : vector<4x8x8xf32> to vector<4x8xf32>
    %61 = vector.shape_cast %60 : vector<4x8xf32> to vector<4x8x1xf32>
    %62 = vector.broadcast %61 : vector<4x8x1xf32> to vector<4x8x8xf32>
    %63 = arith.subf %59, %62 : vector<4x8x8xf32>
    %64 = math.exp %63 : vector<4x8x8xf32>
    %cst_29 = arith.constant dense<0.000000e+00> : vector<4x8xf32>
    %65 = vector.multi_reduction <add>, %64, %cst_29 [2] : vector<4x8x8xf32> to vector<4x8xf32>
    %66 = vector.shape_cast %65 : vector<4x8xf32> to vector<4x8x1xf32>
    %67 = vector.broadcast %66 : vector<4x8x1xf32> to vector<4x8x8xf32>
    %68 = arith.divf %64, %67 : vector<4x8x8xf32>
    %cst_30 = arith.constant dense<0.000000e+00> : vector<4x8x8xf32>
    %69 = tpu.matmul %68, %56, %cst_30 {dimension_numbers = #tpu.dot_dimension_numbers<[2], [1], [1], [2], [0, 0, 0, 1, 1, 2], [0], [0]>} : vector<4x8x8xf32>, vector<4x8x8xf32>, vector<4x8x8xf32> -> vector<4x8x8xf32>
    %cst_31 = arith.constant dense<0.000000e+00> : vector<4x8x32xf32>
    %70 = tpu.matmul %69, %28, %cst_31 {dimension_numbers = #tpu.dot_dimension_numbers<[2], [1], [1], [2], [0, 0, 0, 1, 1, 2], [0], [0]>} : vector<4x8x8xf32>, vector<4x8x32xf32>, vector<4x8x32xf32> -> vector<4x8x32xf32>
    %71 = vector.extract_strided_slice %70 {offsets = [0, 0, 0], sizes = [1, 8, 32], strides = [1, 1, 1]} : vector<4x8x32xf32> to vector<1x8x32xf32>
    %72 = vector.shape_cast %71 : vector<1x8x32xf32> to vector<8x32xf32>
    %73 = vector.extract_strided_slice %70 {offsets = [1, 0, 0], sizes = [1, 8, 32], strides = [1, 1, 1]} : vector<4x8x32xf32> to vector<1x8x32xf32>
    %74 = vector.shape_cast %73 : vector<1x8x32xf32> to vector<8x32xf32>
    %75 = arith.addf %72, %74 : vector<8x32xf32>
    %76 = vector.extract_strided_slice %70 {offsets = [2, 0, 0], sizes = [1, 8, 32], strides = [1, 1, 1]} : vector<4x8x32xf32> to vector<1x8x32xf32>
    %77 = vector.shape_cast %76 : vector<1x8x32xf32> to vector<8x32xf32>
    %78 = arith.addf %75, %77 : vector<8x32xf32>
    %79 = vector.extract_strided_slice %70 {offsets = [3, 0, 0], sizes = [1, 8, 32], strides = [1, 1, 1]} : vector<4x8x32xf32> to vector<1x8x32xf32>
    %80 = vector.shape_cast %79 : vector<1x8x32xf32> to vector<8x32xf32>
    %81 = arith.addf %78, %80 : vector<8x32xf32>
    %82 = vector.broadcast %29 : vector<1x32xf32> to vector<8x32xf32>
    %83 = arith.addf %81, %82 : vector<8x32xf32>
    %84 = arith.addf %1, %83 : vector<8x32xf32>
    %c0_32 = arith.constant 0 : index
    %c0_33 = arith.constant 0 : index
    %85 = vector.load %arg8[%c0_32, %c0_33] : memref<1x32xf32, #tpu.memory_space<vmem>>, vector<1x32xf32>
    %c0_34 = arith.constant 0 : index
    %c0_35 = arith.constant 0 : index
    %86 = vector.load %arg9[%c0_34, %c0_35] : memref<1x32xf32, #tpu.memory_space<vmem>>, vector<1x32xf32>
    %cst_36 = arith.constant dense<0.000000e+00> : vector<8xf32>
    %87 = vector.multi_reduction <add>, %84, %cst_36 [1] : vector<8x32xf32> to vector<8xf32>
    %88 = vector.shape_cast %87 : vector<8xf32> to vector<8x1xf32>
    %cst_37 = arith.constant 3.200000e+01 : f32
    %89 = vector.broadcast %cst_37 : f32 to vector<8x1xf32>
    %90 = arith.divf %88, %89 : vector<8x1xf32>
    %91 = vector.broadcast %90 : vector<8x1xf32> to vector<8x32xf32>
    %92 = arith.subf %84, %91 : vector<8x32xf32>
    %93 = arith.mulf %92, %92 : vector<8x32xf32>
    %cst_38 = arith.constant dense<0.000000e+00> : vector<8xf32>
    %94 = vector.multi_reduction <add>, %93, %cst_38 [1] : vector<8x32xf32> to vector<8xf32>
    %95 = vector.shape_cast %94 : vector<8xf32> to vector<8x1xf32>
    %cst_39 = arith.constant 3.200000e+01 : f32
    %96 = vector.broadcast %cst_39 : f32 to vector<8x1xf32>
    %97 = arith.divf %95, %96 : vector<8x1xf32>
    %98 = vector.broadcast %90 : vector<8x1xf32> to vector<8x32xf32>
    %99 = arith.subf %84, %98 : vector<8x32xf32>
    %cst_40 = arith.constant 9.99999974E-6 : f32
    %100 = vector.broadcast %cst_40 : f32 to vector<8x1xf32>
    %101 = arith.addf %97, %100 : vector<8x1xf32>
    %102 = math.rsqrt %101 : vector<8x1xf32>
    %103 = vector.broadcast %102 : vector<8x1xf32> to vector<8x32xf32>
    %104 = arith.mulf %99, %103 : vector<8x32xf32>
    %105 = vector.broadcast %85 : vector<1x32xf32> to vector<8x32xf32>
    %106 = arith.mulf %104, %105 : vector<8x32xf32>
    %107 = vector.broadcast %86 : vector<1x32xf32> to vector<8x32xf32>
    %108 = arith.addf %106, %107 : vector<8x32xf32>
    %c0_41 = arith.constant 0 : index
    %c0_42 = arith.constant 0 : index
    %109 = vector.load %arg10[%c0_41, %c0_42] : memref<32x64xf32, #tpu.memory_space<vmem>>, vector<32x64xf32>
    %cst_43 = arith.constant dense<0.000000e+00> : vector<8x64xf32>
    %110 = tpu.matmul %108, %109, %cst_43 {dimension_numbers = #tpu.dot_dimension_numbers<[1], [0], [0], [1], [0, 0, 1, 1], [], []>} : vector<8x32xf32>, vector<32x64xf32>, vector<8x64xf32> -> vector<8x64xf32>
    %c0_44 = arith.constant 0 : index
    %c0_45 = arith.constant 0 : index
    %111 = vector.load %arg11[%c0_44, %c0_45] : memref<1x64xf32, #tpu.memory_space<vmem>>, vector<1x64xf32>
    %112 = vector.broadcast %111 : vector<1x64xf32> to vector<8x64xf32>
    %113 = arith.addf %110, %112 : vector<8x64xf32>
    %cst_46 = arith.constant 5.000000e-01 : f32
    %114 = vector.broadcast %cst_46 : f32 to vector<8x64xf32>
    %115 = arith.mulf %114, %113 : vector<8x64xf32>
    %cst_47 = arith.constant 0.707106769 : f32
    %116 = vector.broadcast %cst_47 : f32 to vector<8x64xf32>
    %117 = arith.mulf %113, %116 : vector<8x64xf32>
    %cst_48 = arith.constant 0.000000e+00 : f32
    %118 = vector.broadcast %cst_48 : f32 to vector<8x64xf32>
    %119 = arith.cmpf oge, %117, %118 : vector<8x64xf32>
    %cst_49 = arith.constant 1.000000e+00 : f32
    %cst_50 = arith.constant -1.000000e+00 : f32
    %120 = vector.broadcast %cst_49 : f32 to vector<8x64xf32>
    %121 = vector.broadcast %cst_50 : f32 to vector<8x64xf32>
    %122 = arith.select %119, %120, %121 : vector<8x64xi1>, vector<8x64xf32>
    %123 = math.absf %117 : vector<8x64xf32>
    %cst_51 = arith.constant 0.327591091 : f32
    %124 = vector.broadcast %cst_51 : f32 to vector<8x64xf32>
    %125 = arith.mulf %124, %123 : vector<8x64xf32>
    %cst_52 = arith.constant 1.000000e+00 : f32
    %126 = vector.broadcast %cst_52 : f32 to vector<8x64xf32>
    %127 = arith.addf %126, %125 : vector<8x64xf32>
    %cst_53 = arith.constant 1.000000e+00 : f32
    %128 = vector.broadcast %cst_53 : f32 to vector<8x64xf32>
    %129 = arith.divf %128, %127 : vector<8x64xf32>
    %cst_54 = arith.constant 1.06140542 : f32
    %130 = vector.broadcast %cst_54 : f32 to vector<8x64xf32>
    %131 = arith.mulf %130, %129 : vector<8x64xf32>
    %cst_55 = arith.constant -1.45315206 : f32
    %132 = vector.broadcast %cst_55 : f32 to vector<8x64xf32>
    %133 = arith.addf %131, %132 : vector<8x64xf32>
    %134 = arith.mulf %133, %129 : vector<8x64xf32>
    %cst_56 = arith.constant 1.42141378 : f32
    %135 = vector.broadcast %cst_56 : f32 to vector<8x64xf32>
    %136 = arith.addf %134, %135 : vector<8x64xf32>
    %137 = arith.mulf %136, %129 : vector<8x64xf32>
    %cst_57 = arith.constant -0.284496725 : f32
    %138 = vector.broadcast %cst_57 : f32 to vector<8x64xf32>
    %139 = arith.addf %137, %138 : vector<8x64xf32>
    %140 = arith.mulf %139, %129 : vector<8x64xf32>
    %cst_58 = arith.constant 0.254829586 : f32
    %141 = vector.broadcast %cst_58 : f32 to vector<8x64xf32>
    %142 = arith.addf %140, %141 : vector<8x64xf32>
    %143 = arith.mulf %142, %129 : vector<8x64xf32>
    %cst_59 = arith.constant 0.000000e+00 : f32
    %144 = vector.broadcast %cst_59 : f32 to vector<8x64xf32>
    %145 = arith.subf %144, %123 : vector<8x64xf32>
    %146 = arith.mulf %145, %123 : vector<8x64xf32>
    %147 = math.exp %146 : vector<8x64xf32>
    %148 = arith.mulf %143, %147 : vector<8x64xf32>
    %cst_60 = arith.constant 1.000000e+00 : f32
    %149 = vector.broadcast %cst_60 : f32 to vector<8x64xf32>
    %150 = arith.subf %149, %148 : vector<8x64xf32>
    %151 = arith.mulf %122, %150 : vector<8x64xf32>
    %cst_61 = arith.constant 1.000000e+00 : f32
    %152 = vector.broadcast %cst_61 : f32 to vector<8x64xf32>
    %153 = arith.addf %152, %151 : vector<8x64xf32>
    %154 = arith.mulf %115, %153 : vector<8x64xf32>
    %c0_62 = arith.constant 0 : index
    %c0_63 = arith.constant 0 : index
    %155 = vector.load %arg12[%c0_62, %c0_63] : memref<64x32xf32, #tpu.memory_space<vmem>>, vector<64x32xf32>
    %cst_64 = arith.constant dense<0.000000e+00> : vector<8x32xf32>
    %156 = tpu.matmul %154, %155, %cst_64 {dimension_numbers = #tpu.dot_dimension_numbers<[1], [0], [0], [1], [0, 0, 1, 1], [], []>} : vector<8x64xf32>, vector<64x32xf32>, vector<8x32xf32> -> vector<8x32xf32>
    %c0_65 = arith.constant 0 : index
    %c0_66 = arith.constant 0 : index
    %157 = vector.load %arg13[%c0_65, %c0_66] : memref<1x32xf32, #tpu.memory_space<vmem>>, vector<1x32xf32>
    %158 = vector.broadcast %157 : vector<1x32xf32> to vector<8x32xf32>
    %159 = arith.addf %156, %158 : vector<8x32xf32>
    %160 = arith.addf %84, %159 : vector<8x32xf32>
    %c0_67 = arith.constant 0 : index
    %c0_68 = arith.constant 0 : index
    %c0_69 = arith.constant 0 : index
    %161 = vector.load %arg14[%c0_67, %c0_68, %c0_69] : memref<1x8x32xf32, #tpu.memory_space<vmem>>, vector<1x8x32xf32>
    %162 = vector.shape_cast %161 : vector<1x8x32xf32> to vector<8x32xf32>
    %163 = vector.shape_cast %160 : vector<8x32xf32> to vector<1x8x32xf32>
    tpu.vector_store %arg14[%c0_67, %c0_68, %c0_69], %163 {strides = array<i32>} : memref<1x8x32xf32, #tpu.memory_space<vmem>>, vector<1x8x32xf32>,
    return
  }
  func.func @transform_0(%arg0: i32) -> (i32, i32, i32) {
    %c0_i32 = arith.constant 0 : i32
    %c0_i32_0 = arith.constant 0 : i32
    %c0_i32_1 = arith.constant 0 : i32
    return %arg0, %c0_i32, %c0_i32_0 : i32, i32, i32
  }
  func.func @transform_1(%arg0: i32) -> (i32, i32) {
    %c0_i32 = arith.constant 0 : i32
    %c0_i32_0 = arith.constant 0 : i32
    %c0_i32_1 = arith.constant 0 : i32
    return %c0_i32, %c0_i32_0 : i32, i32
  }
  func.func @transform_2(%arg0: i32) -> (i32, i32) {
    %c0_i32 = arith.constant 0 : i32
    %c0_i32_0 = arith.constant 0 : i32
    %c0_i32_1 = arith.constant 0 : i32
    return %c0_i32, %c0_i32_0 : i32, i32
  }
  func.func @transform_3(%arg0: i32) -> (i32, i32, i32, i32) {
    %c0_i32 = arith.constant 0 : i32
    %c0_i32_0 = arith.constant 0 : i32
    %c0_i32_1 = arith.constant 0 : i32
    %c0_i32_2 = arith.constant 0 : i32
    %c0_i32_3 = arith.constant 0 : i32
    return %c0_i32, %c0_i32_0, %c0_i32_1, %c0_i32_2 : i32, i32, i32, i32
  }
  func.func @transform_4(%arg0: i32) -> (i32, i32, i32, i32) {
    %c0_i32 = arith.constant 0 : i32
    %c0_i32_0 = arith.constant 0 : i32
    %c0_i32_1 = arith.constant 0 : i32
    %c0_i32_2 = arith.constant 0 : i32
    %c0_i32_3 = arith.constant 0 : i32
    return %c0_i32, %c0_i32_0, %c0_i32_1, %c0_i32_2 : i32, i32, i32, i32
  }
  func.func @transform_5(%arg0: i32) -> (i32, i32, i32) {
    %c0_i32 = arith.constant 0 : i32
    %c0_i32_0 = arith.constant 0 : i32
    %c0_i32_1 = arith.constant 0 : i32
    %c0_i32_2 = arith.constant 0 : i32
    return %c0_i32, %c0_i32_0, %c0_i32_1 : i32, i32, i32
  }
  func.func @transform_6(%arg0: i32) -> (i32, i32) {
    %c0_i32 = arith.constant 0 : i32
    %c0_i32_0 = arith.constant 0 : i32
    %c0_i32_1 = arith.constant 0 : i32
    return %c0_i32, %c0_i32_0 : i32, i32
  }
  func.func @transform_7(%arg0: i32) -> (i32, i32) {
    %c0_i32 = arith.constant 0 : i32
    %c0_i32_0 = arith.constant 0 : i32
    %c0_i32_1 = arith.constant 0 : i32
    return %c0_i32, %c0_i32_0 : i32, i32
  }
  func.func @transform_8(%arg0: i32) -> (i32, i32) {
    %c0_i32 = arith.constant 0 : i32
    %c0_i32_0 = arith.constant 0 : i32
    %c0_i32_1 = arith.constant 0 : i32
    return %c0_i32, %c0_i32_0 : i32, i32
  }
  func.func @transform_9(%arg0: i32) -> (i32, i32) {
    %c0_i32 = arith.constant 0 : i32
    %c0_i32_0 = arith.constant 0 : i32
    %c0_i32_1 = arith.constant 0 : i32
    return %c0_i32, %c0_i32_0 : i32, i32
  }
  func.func @transform_10(%arg0: i32) -> (i32, i32) {
    %c0_i32 = arith.constant 0 : i32
    %c0_i32_0 = arith.constant 0 : i32
    %c0_i32_1 = arith.constant 0 : i32
    return %c0_i32, %c0_i32_0 : i32, i32
  }
  func.func @transform_11(%arg0: i32) -> (i32, i32) {
    %c0_i32 = arith.constant 0 : i32
    %c0_i32_0 = arith.constant 0 : i32
    %c0_i32_1 = arith.constant 0 : i32
    return %c0_i32, %c0_i32_0 : i32, i32
  }
  func.func @transform_12(%arg0: i32) -> (i32, i32) {
    %c0_i32 = arith.constant 0 : i32
    %c0_i32_0 = arith.constant 0 : i32
    %c0_i32_1 = arith.constant 0 : i32
    return %c0_i32, %c0_i32_0 : i32, i32
  }
  func.func @transform_13(%arg0: i32) -> (i32, i32, i32) {
    %c0_i32 = arith.constant 0 : i32
    %c0_i32_0 = arith.constant 0 : i32
    %c0_i32_1 = arith.constant 0 : i32
    return %arg0, %c0_i32, %c0_i32_0 : i32, i32, i32
  }
}

module attributes {stable_mosaic.version = 11 : i64} {
  func.func @_fc_kernel(%arg0: i32, %arg1: memref<2x32xf32, #tpu.memory_space<vmem>>, %arg2: memref<32x16xf32, #tpu.memory_space<vmem>>, %arg3: memref<1x16xf32, #tpu.memory_space<vmem>>, %arg4: memref<2x16xf32, #tpu.memory_space<vmem>>) attributes {dimension_semantics = [#tpu.dimension_semantics<arbitrary>], iteration_bounds = array<i64: 1>, scalar_prefetch = 0 : i64, scratch_operands = 0 : i64, tpu.core_type = #tpu.core_type<tc>, window_params = [{pipeline_mode = #tpu.pipeline_mode<synchronous>, transform_indices = @transform_0, window_bounds = array<i64: 2, 32>}, {pipeline_mode = #tpu.pipeline_mode<synchronous>, transform_indices = @transform_1, window_bounds = array<i64: 32, 16>}, {pipeline_mode = #tpu.pipeline_mode<synchronous>, transform_indices = @transform_2, window_bounds = array<i64: 1, 16>}, {pipeline_mode = #tpu.pipeline_mode<synchronous>, transform_indices = @transform_3, window_bounds = array<i64: 2, 16>}]} {
    %c0 = arith.constant 0 : index
    %c0_0 = arith.constant 0 : index
    %0 = vector.load %arg1[%c0, %c0_0] : memref<2x32xf32, #tpu.memory_space<vmem>>, vector<2x32xf32>
    %c0_1 = arith.constant 0 : index
    %c0_2 = arith.constant 0 : index
    %1 = vector.load %arg2[%c0_1, %c0_2] : memref<32x16xf32, #tpu.memory_space<vmem>>, vector<32x16xf32>
    %cst = arith.constant dense<0.000000e+00> : vector<2x16xf32>
    %2 = tpu.matmul %0, %1, %cst {dimension_numbers = #tpu.dot_dimension_numbers<[1], [0], [0], [1], [0, 0, 1, 1], [], []>} : vector<2x32xf32>, vector<32x16xf32>, vector<2x16xf32> -> vector<2x16xf32>
    %c0_3 = arith.constant 0 : index
    %c0_4 = arith.constant 0 : index
    %3 = vector.load %arg3[%c0_3, %c0_4] : memref<1x16xf32, #tpu.memory_space<vmem>>, vector<1x16xf32>
    %4 = vector.broadcast %3 : vector<1x16xf32> to vector<2x16xf32>
    %5 = arith.addf %2, %4 : vector<2x16xf32>
    %c0_5 = arith.constant 0 : index
    %c0_6 = arith.constant 0 : index
    %6 = vector.load %arg4[%c0_5, %c0_6] : memref<2x16xf32, #tpu.memory_space<vmem>>, vector<2x16xf32>
    tpu.vector_store %arg4[%c0_5, %c0_6], %5 {strides = array<i32>} : memref<2x16xf32, #tpu.memory_space<vmem>>, vector<2x16xf32>,
    return
  }
  func.func @transform_0(%arg0: i32) -> (i32, i32) {
    %c0_i32 = arith.constant 0 : i32
    %c0_i32_0 = arith.constant 0 : i32
    %c0_i32_1 = arith.constant 0 : i32
    return %c0_i32, %c0_i32_0 : i32, i32
  }
  func.func @transform_1(%arg0: i32) -> (i32, i32) {
    %c0_i32 = arith.constant 0 : i32
    %c0_i32_0 = arith.constant 0 : i32
    %c0_i32_1 = arith.constant 0 : i32
    return %c0_i32, %c0_i32_0 : i32, i32
  }
  func.func @transform_2(%arg0: i32) -> (i32, i32) {
    %c0_i32 = arith.constant 0 : i32
    %c0_i32_0 = arith.constant 0 : i32
    %c0_i32_1 = arith.constant 0 : i32
    return %c0_i32, %c0_i32_0 : i32, i32
  }
  func.func @transform_3(%arg0: i32) -> (i32, i32) {
    %c0_i32 = arith.constant 0 : i32
    %c0_i32_0 = arith.constant 0 : i32
    %c0_i32_1 = arith.constant 0 : i32
    return %c0_i32, %c0_i32_0 : i32, i32
  }
}

module attributes {stable_mosaic.version = 11 : i64} {
  func.func @_decoder_layer_kernel(%arg0: i32, %arg1: memref<1x8x32xf32, #tpu.memory_space<vmem>>, %arg2: memref<1x8x32xf32, #tpu.memory_space<vmem>>, %arg3: memref<1x32xf32, #tpu.memory_space<vmem>>, %arg4: memref<1x32xf32, #tpu.memory_space<vmem>>, %arg5: memref<3x4x32x8xf32, #tpu.memory_space<vmem>>, %arg6: memref<3x4x1x8xf32, #tpu.memory_space<vmem>>, %arg7: memref<4x8x32xf32, #tpu.memory_space<vmem>>, %arg8: memref<1x32xf32, #tpu.memory_space<vmem>>, %arg9: memref<1x32xf32, #tpu.memory_space<vmem>>, %arg10: memref<1x32xf32, #tpu.memory_space<vmem>>, %arg11: memref<3x4x32x8xf32, #tpu.memory_space<vmem>>, %arg12: memref<3x4x1x8xf32, #tpu.memory_space<vmem>>, %arg13: memref<4x8x32xf32, #tpu.memory_space<vmem>>, %arg14: memref<1x32xf32, #tpu.memory_space<vmem>>, %arg15: memref<1x32xf32, #tpu.memory_space<vmem>>, %arg16: memref<1x32xf32, #tpu.memory_space<vmem>>, %arg17: memref<32x64xf32, #tpu.memory_space<vmem>>, %arg18: memref<1x64xf32, #tpu.memory_space<vmem>>, %arg19: memref<64x32xf32, #tpu.memory_space<vmem>>, %arg20: memref<1x32xf32, #tpu.memory_space<vmem>>, %arg21: memref<1x8x32xf32, #tpu.memory_space<vmem>>) attributes {dimension_semantics = [#tpu.dimension_semantics<parallel>], iteration_bounds = array<i64: 2>, scalar_prefetch = 0 : i64, scratch_operands = 0 : i64, tpu.core_type = #tpu.core_type<tc>, window_params = [{transform_indices = @transform_0, window_bounds = array<i64: 1, 8, 32>}, {transform_indices = @transform_1, window_bounds = array<i64: 1, 8, 32>}, {pipeline_mode = #tpu.pipeline_mode<synchronous>, transform_indices = @transform_2, window_bounds = array<i64: 1, 32>}, {pipeline_mode = #tpu.pipeline_mode<synchronous>, transform_indices = @transform_3, window_bounds = array<i64: 1, 32>}, {pipeline_mode = #tpu.pipeline_mode<synchronous>, transform_indices = @transform_4, window_bounds = array<i64: 3, 4, 32, 8>}, {pipeline_mode = #tpu.pipeline_mode<synchronous>, transform_indices = @transform_5, window_bounds = array<i64: 3, 4, 1, 8>}, {pipeline_mode = #tpu.pipeline_mode<synchronous>, transform_indices = @transform_6, window_bounds = array<i64: 4, 8, 32>}, {pipeline_mode = #tpu.pipeline_mode<synchronous>, transform_indices = @transform_7, window_bounds = array<i64: 1, 32>}, {pipeline_mode = #tpu.pipeline_mode<synchronous>, transform_indices = @transform_8, window_bounds = array<i64: 1, 32>}, {pipeline_mode = #tpu.pipeline_mode<synchronous>, transform_indices = @transform_9, window_bounds = array<i64: 1, 32>}, {pipeline_mode = #tpu.pipeline_mode<synchronous>, transform_indices = @transform_10, window_bounds = array<i64: 3, 4, 32, 8>}, {pipeline_mode = #tpu.pipeline_mode<synchronous>, transform_indices = @transform_11, window_bounds = array<i64: 3, 4, 1, 8>}, {pipeline_mode = #tpu.pipeline_mode<synchronous>, transform_indices = @transform_12, window_bounds = array<i64: 4, 8, 32>}, {pipeline_mode = #tpu.pipeline_mode<synchronous>, transform_indices = @transform_13, window_bounds = array<i64: 1, 32>}, {pipeline_mode = #tpu.pipeline_mode<synchronous>, transform_indices = @transform_14, window_bounds = array<i64: 1, 32>}, {pipeline_mode = #tpu.pipeline_mode<synchronous>, transform_indices = @transform_15, window_bounds = array<i64: 1, 32>}, {pipeline_mode = #tpu.pipeline_mode<synchronous>, transform_indices = @transform_16, window_bounds = array<i64: 32, 64>}, {pipeline_mode = #tpu.pipeline_mode<synchronous>, transform_indices = @transform_17, window_bounds = array<i64: 1, 64>}, {pipeline_mode = #tpu.pipeline_mode<synchronous>, transform_indices = @transform_18, window_bounds = array<i64: 64, 32>}, {pipeline_mode = #tpu.pipeline_mode<synchronous>, transform_indices = @transform_19, window_bounds = array<i64: 1, 32>}, {transform_indices = @transform_20, window_bounds = array<i64: 1, 8, 32>}]} {
    %c0 = arith.constant 0 : index
    %c0_0 = arith.constant 0 : index
    %c0_1 = arith.constant 0 : index
    %0 = vector.load %arg1[%c0, %c0_0, %c0_1] : memref<1x8x32xf32, #tpu.memory_space<vmem>>, vector<1x8x32xf32>
    %1 = vector.shape_cast %0 : vector<1x8x32xf32> to vector<8x32xf32>
    %c0_2 = arith.constant 0 : index
    %c0_3 = arith.constant 0 : index
    %c0_4 = arith.constant 0 : index
    %2 = vector.load %arg2[%c0_2, %c0_3, %c0_4] : memref<1x8x32xf32, #tpu.memory_space<vmem>>, vector<1x8x32xf32>
    %3 = vector.shape_cast %2 : vector<1x8x32xf32> to vector<8x32xf32>
    %c0_5 = arith.constant 0 : index
    %c0_6 = arith.constant 0 : index
    %4 = vector.load %arg3[%c0_5, %c0_6] : memref<1x32xf32, #tpu.memory_space<vmem>>, vector<1x32xf32>
    %c0_7 = arith.constant 0 : index
    %c0_8 = arith.constant 0 : index
    %5 = vector.load %arg4[%c0_7, %c0_8] : memref<1x32xf32, #tpu.memory_space<vmem>>, vector<1x32xf32>
    %cst = arith.constant dense<0.000000e+00> : vector<8xf32>
    %6 = vector.multi_reduction <add>, %1, %cst [1] : vector<8x32xf32> to vector<8xf32>
    %7 = vector.shape_cast %6 : vector<8xf32> to vector<8x1xf32>
    %cst_9 = arith.constant 3.200000e+01 : f32
    %8 = vector.broadcast %cst_9 : f32 to vector<8x1xf32>
    %9 = arith.divf %7, %8 : vector<8x1xf32>
    %10 = vector.broadcast %9 : vector<8x1xf32> to vector<8x32xf32>
    %11 = arith.subf %1, %10 : vector<8x32xf32>
    %12 = arith.mulf %11, %11 : vector<8x32xf32>
    %cst_10 = arith.constant dense<0.000000e+00> : vector<8xf32>
    %13 = vector.multi_reduction <add>, %12, %cst_10 [1] : vector<8x32xf32> to vector<8xf32>
    %14 = vector.shape_cast %13 : vector<8xf32> to vector<8x1xf32>
    %cst_11 = arith.constant 3.200000e+01 : f32
    %15 = vector.broadcast %cst_11 : f32 to vector<8x1xf32>
    %16 = arith.divf %14, %15 : vector<8x1xf32>
    %17 = vector.broadcast %9 : vector<8x1xf32> to vector<8x32xf32>
    %18 = arith.subf %1, %17 : vector<8x32xf32>
    %cst_12 = arith.constant 9.99999974E-6 : f32
    %19 = vector.broadcast %cst_12 : f32 to vector<8x1xf32>
    %20 = arith.addf %16, %19 : vector<8x1xf32>
    %21 = math.rsqrt %20 : vector<8x1xf32>
    %22 = vector.broadcast %21 : vector<8x1xf32> to vector<8x32xf32>
    %23 = arith.mulf %18, %22 : vector<8x32xf32>
    %24 = vector.broadcast %4 : vector<1x32xf32> to vector<8x32xf32>
    %25 = arith.mulf %23, %24 : vector<8x32xf32>
    %26 = vector.broadcast %5 : vector<1x32xf32> to vector<8x32xf32>
    %27 = arith.addf %25, %26 : vector<8x32xf32>
    %c0_13 = arith.constant 0 : index
    %c0_14 = arith.constant 0 : index
    %c0_15 = arith.constant 0 : index
    %c0_16 = arith.constant 0 : index
    %28 = vector.load %arg5[%c0_13, %c0_14, %c0_15, %c0_16] : memref<3x4x32x8xf32, #tpu.memory_space<vmem>>, vector<3x4x32x8xf32>
    %c0_17 = arith.constant 0 : index
    %c0_18 = arith.constant 0 : index
    %c0_19 = arith.constant 0 : index
    %c0_20 = arith.constant 0 : index
    %29 = vector.load %arg6[%c0_17, %c0_18, %c0_19, %c0_20] : memref<3x4x1x8xf32, #tpu.memory_space<vmem>>, vector<3x4x1x8xf32>
    %c0_21 = arith.constant 0 : index
    %c0_22 = arith.constant 0 : index
    %c0_23 = arith.constant 0 : index
    %30 = vector.load %arg7[%c0_21, %c0_22, %c0_23] : memref<4x8x32xf32, #tpu.memory_space<vmem>>, vector<4x8x32xf32>
    %c0_24 = arith.constant 0 : index
    %c0_25 = arith.constant 0 : index
    %31 = vector.load %arg8[%c0_24, %c0_25] : memref<1x32xf32, #tpu.memory_space<vmem>>, vector<1x32xf32>
    %32 = vector.shape_cast %27 : vector<8x32xf32> to vector<1x8x32xf32>
    %33 = vector.shape_cast %32 : vector<1x8x32xf32> to vector<1x8x32xf32>
    %34 = vector.broadcast %33 : vector<1x8x32xf32> to vector<4x8x32xf32>
    %35 = vector.shape_cast %27 : vector<8x32xf32> to vector<1x8x32xf32>
    %36 = vector.shape_cast %35 : vector<1x8x32xf32> to vector<1x8x32xf32>
    %37 = vector.broadcast %36 : vector<1x8x32xf32> to vector<4x8x32xf32>
    %38 = vector.extract_strided_slice %28 {offsets = [0, 0, 0, 0], sizes = [1, 4, 32, 8], strides = [1, 1, 1, 1]} : vector<3x4x32x8xf32> to vector<1x4x32x8xf32>
    %39 = vector.shape_cast %38 : vector<1x4x32x8xf32> to vector<4x32x8xf32>
    %cst_26 = arith.constant dense<0.000000e+00> : vector<4x8x8xf32>
    %40 = tpu.matmul %34, %39, %cst_26 {dimension_numbers = #tpu.dot_dimension_numbers<[2], [1], [1], [2], [0, 0, 0, 1, 1, 2], [0], [0]>} : vector<4x8x32xf32>, vector<4x32x8xf32>, vector<4x8x8xf32> -> vector<4x8x8xf32>
    %41 = vector.extract_strided_slice %29 {offsets = [0, 0, 0, 0], sizes = [1, 4, 1, 8], strides = [1, 1, 1, 1]} : vector<3x4x1x8xf32> to vector<1x4x1x8xf32>
    %42 = vector.shape_cast %41 : vector<1x4x1x8xf32> to vector<4x1x8xf32>
    %43 = vector.broadcast %42 : vector<4x1x8xf32> to vector<4x8x8xf32>
    %44 = arith.addf %40, %43 : vector<4x8x8xf32>
    %45 = vector.extract_strided_slice %28 {offsets = [1, 0, 0, 0], sizes = [1, 4, 32, 8], strides = [1, 1, 1, 1]} : vector<3x4x32x8xf32> to vector<1x4x32x8xf32>
    %46 = vector.shape_cast %45 : vector<1x4x32x8xf32> to vector<4x32x8xf32>
    %cst_27 = arith.constant dense<0.000000e+00> : vector<4x8x8xf32>
    %47 = tpu.matmul %37, %46, %cst_27 {dimension_numbers = #tpu.dot_dimension_numbers<[2], [1], [1], [2], [0, 0, 0, 1, 1, 2], [0], [0]>} : vector<4x8x32xf32>, vector<4x32x8xf32>, vector<4x8x8xf32> -> vector<4x8x8xf32>
    %48 = vector.extract_strided_slice %29 {offsets = [1, 0, 0, 0], sizes = [1, 4, 1, 8], strides = [1, 1, 1, 1]} : vector<3x4x1x8xf32> to vector<1x4x1x8xf32>
    %49 = vector.shape_cast %48 : vector<1x4x1x8xf32> to vector<4x1x8xf32>
    %50 = vector.broadcast %49 : vector<4x1x8xf32> to vector<4x8x8xf32>
    %51 = arith.addf %47, %50 : vector<4x8x8xf32>
    %52 = vector.extract_strided_slice %28 {offsets = [2, 0, 0, 0], sizes = [1, 4, 32, 8], strides = [1, 1, 1, 1]} : vector<3x4x32x8xf32> to vector<1x4x32x8xf32>
    %53 = vector.shape_cast %52 : vector<1x4x32x8xf32> to vector<4x32x8xf32>
    %cst_28 = arith.constant dense<0.000000e+00> : vector<4x8x8xf32>
    %54 = tpu.matmul %37, %53, %cst_28 {dimension_numbers = #tpu.dot_dimension_numbers<[2], [1], [1], [2], [0, 0, 0, 1, 1, 2], [0], [0]>} : vector<4x8x32xf32>, vector<4x32x8xf32>, vector<4x8x8xf32> -> vector<4x8x8xf32>
    %55 = vector.extract_strided_slice %29 {offsets = [2, 0, 0, 0], sizes = [1, 4, 1, 8], strides = [1, 1, 1, 1]} : vector<3x4x1x8xf32> to vector<1x4x1x8xf32>
    %56 = vector.shape_cast %55 : vector<1x4x1x8xf32> to vector<4x1x8xf32>
    %57 = vector.broadcast %56 : vector<4x1x8xf32> to vector<4x8x8xf32>
    %58 = arith.addf %54, %57 : vector<4x8x8xf32>
    %cst_29 = arith.constant dense<0.000000e+00> : vector<4x8x8xf32>
    %59 = tpu.matmul %44, %51, %cst_29 {dimension_numbers = #tpu.dot_dimension_numbers<[2], [2], [1], [1], [0, 0, 0, 1, 1, 1], [0], [0]>} : vector<4x8x8xf32>, vector<4x8x8xf32>, vector<4x8x8xf32> -> vector<4x8x8xf32>
    %cst_30 = arith.constant 0.353553385 : f32
    %60 = vector.broadcast %cst_30 : f32 to vector<4x8x8xf32>
    %61 = arith.mulf %59, %60 : vector<4x8x8xf32>
    %cst_31 = arith.constant dense<0xFF800000> : vector<4x8xf32>
    %62 = vector.multi_reduction <maximumf>, %61, %cst_31 [2] : vector<4x8x8xf32> to vector<4x8xf32>
    %63 = vector.shape_cast %62 : vector<4x8xf32> to vector<4x8x1xf32>
    %64 = vector.broadcast %63 : vector<4x8x1xf32> to vector<4x8x8xf32>
    %65 = arith.subf %61, %64 : vector<4x8x8xf32>
    %66 = math.exp %65 : vector<4x8x8xf32>
    %cst_32 = arith.constant dense<0.000000e+00> : vector<4x8xf32>
    %67 = vector.multi_reduction <add>, %66, %cst_32 [2] : vector<4x8x8xf32> to vector<4x8xf32>
    %68 = vector.shape_cast %67 : vector<4x8xf32> to vector<4x8x1xf32>
    %69 = vector.broadcast %68 : vector<4x8x1xf32> to vector<4x8x8xf32>
    %70 = arith.divf %66, %69 : vector<4x8x8xf32>
    %cst_33 = arith.constant dense<0.000000e+00> : vector<4x8x8xf32>
    %71 = tpu.matmul %70, %58, %cst_33 {dimension_numbers = #tpu.dot_dimension_numbers<[2], [1], [1], [2], [0, 0, 0, 1, 1, 2], [0], [0]>} : vector<4x8x8xf32>, vector<4x8x8xf32>, vector<4x8x8xf32> -> vector<4x8x8xf32>
    %cst_34 = arith.constant dense<0.000000e+00> : vector<4x8x32xf32>
    %72 = tpu.matmul %71, %30, %cst_34 {dimension_numbers = #tpu.dot_dimension_numbers<[2], [1], [1], [2], [0, 0, 0, 1, 1, 2], [0], [0]>} : vector<4x8x8xf32>, vector<4x8x32xf32>, vector<4x8x32xf32> -> vector<4x8x32xf32>
    %73 = vector.extract_strided_slice %72 {offsets = [0, 0, 0], sizes = [1, 8, 32], strides = [1, 1, 1]} : vector<4x8x32xf32> to vector<1x8x32xf32>
    %74 = vector.shape_cast %73 : vector<1x8x32xf32> to vector<8x32xf32>
    %75 = vector.extract_strided_slice %72 {offsets = [1, 0, 0], sizes = [1, 8, 32], strides = [1, 1, 1]} : vector<4x8x32xf32> to vector<1x8x32xf32>
    %76 = vector.shape_cast %75 : vector<1x8x32xf32> to vector<8x32xf32>
    %77 = arith.addf %74, %76 : vector<8x32xf32>
    %78 = vector.extract_strided_slice %72 {offsets = [2, 0, 0], sizes = [1, 8, 32], strides = [1, 1, 1]} : vector<4x8x32xf32> to vector<1x8x32xf32>
    %79 = vector.shape_cast %78 : vector<1x8x32xf32> to vector<8x32xf32>
    %80 = arith.addf %77, %79 : vector<8x32xf32>
    %81 = vector.extract_strided_slice %72 {offsets = [3, 0, 0], sizes = [1, 8, 32], strides = [1, 1, 1]} : vector<4x8x32xf32> to vector<1x8x32xf32>
    %82 = vector.shape_cast %81 : vector<1x8x32xf32> to vector<8x32xf32>
    %83 = arith.addf %80, %82 : vector<8x32xf32>
    %84 = vector.broadcast %31 : vector<1x32xf32> to vector<8x32xf32>
    %85 = arith.addf %83, %84 : vector<8x32xf32>
    %86 = arith.addf %1, %85 : vector<8x32xf32>
    %c0_35 = arith.constant 0 : index
    %c0_36 = arith.constant 0 : index
    %87 = vector.load %arg9[%c0_35, %c0_36] : memref<1x32xf32, #tpu.memory_space<vmem>>, vector<1x32xf32>
    %c0_37 = arith.constant 0 : index
    %c0_38 = arith.constant 0 : index
    %88 = vector.load %arg10[%c0_37, %c0_38] : memref<1x32xf32, #tpu.memory_space<vmem>>, vector<1x32xf32>
    %cst_39 = arith.constant dense<0.000000e+00> : vector<8xf32>
    %89 = vector.multi_reduction <add>, %86, %cst_39 [1] : vector<8x32xf32> to vector<8xf32>
    %90 = vector.shape_cast %89 : vector<8xf32> to vector<8x1xf32>
    %cst_40 = arith.constant 3.200000e+01 : f32
    %91 = vector.broadcast %cst_40 : f32 to vector<8x1xf32>
    %92 = arith.divf %90, %91 : vector<8x1xf32>
    %93 = vector.broadcast %92 : vector<8x1xf32> to vector<8x32xf32>
    %94 = arith.subf %86, %93 : vector<8x32xf32>
    %95 = arith.mulf %94, %94 : vector<8x32xf32>
    %cst_41 = arith.constant dense<0.000000e+00> : vector<8xf32>
    %96 = vector.multi_reduction <add>, %95, %cst_41 [1] : vector<8x32xf32> to vector<8xf32>
    %97 = vector.shape_cast %96 : vector<8xf32> to vector<8x1xf32>
    %cst_42 = arith.constant 3.200000e+01 : f32
    %98 = vector.broadcast %cst_42 : f32 to vector<8x1xf32>
    %99 = arith.divf %97, %98 : vector<8x1xf32>
    %100 = vector.broadcast %92 : vector<8x1xf32> to vector<8x32xf32>
    %101 = arith.subf %86, %100 : vector<8x32xf32>
    %cst_43 = arith.constant 9.99999974E-6 : f32
    %102 = vector.broadcast %cst_43 : f32 to vector<8x1xf32>
    %103 = arith.addf %99, %102 : vector<8x1xf32>
    %104 = math.rsqrt %103 : vector<8x1xf32>
    %105 = vector.broadcast %104 : vector<8x1xf32> to vector<8x32xf32>
    %106 = arith.mulf %101, %105 : vector<8x32xf32>
    %107 = vector.broadcast %87 : vector<1x32xf32> to vector<8x32xf32>
    %108 = arith.mulf %106, %107 : vector<8x32xf32>
    %109 = vector.broadcast %88 : vector<1x32xf32> to vector<8x32xf32>
    %110 = arith.addf %108, %109 : vector<8x32xf32>
    %c0_44 = arith.constant 0 : index
    %c0_45 = arith.constant 0 : index
    %c0_46 = arith.constant 0 : index
    %c0_47 = arith.constant 0 : index
    %111 = vector.load %arg11[%c0_44, %c0_45, %c0_46, %c0_47] : memref<3x4x32x8xf32, #tpu.memory_space<vmem>>, vector<3x4x32x8xf32>
    %c0_48 = arith.constant 0 : index
    %c0_49 = arith.constant 0 : index
    %c0_50 = arith.constant 0 : index
    %c0_51 = arith.constant 0 : index
    %112 = vector.load %arg12[%c0_48, %c0_49, %c0_50, %c0_51] : memref<3x4x1x8xf32, #tpu.memory_space<vmem>>, vector<3x4x1x8xf32>
    %c0_52 = arith.constant 0 : index
    %c0_53 = arith.constant 0 : index
    %c0_54 = arith.constant 0 : index
    %113 = vector.load %arg13[%c0_52, %c0_53, %c0_54] : memref<4x8x32xf32, #tpu.memory_space<vmem>>, vector<4x8x32xf32>
    %c0_55 = arith.constant 0 : index
    %c0_56 = arith.constant 0 : index
    %114 = vector.load %arg14[%c0_55, %c0_56] : memref<1x32xf32, #tpu.memory_space<vmem>>, vector<1x32xf32>
    %115 = vector.shape_cast %110 : vector<8x32xf32> to vector<1x8x32xf32>
    %116 = vector.shape_cast %115 : vector<1x8x32xf32> to vector<1x8x32xf32>
    %117 = vector.broadcast %116 : vector<1x8x32xf32> to vector<4x8x32xf32>
    %118 = vector.shape_cast %3 : vector<8x32xf32> to vector<1x8x32xf32>
    %119 = vector.shape_cast %118 : vector<1x8x32xf32> to vector<1x8x32xf32>
    %120 = vector.broadcast %119 : vector<1x8x32xf32> to vector<4x8x32xf32>
    %121 = vector.extract_strided_slice %111 {offsets = [0, 0, 0, 0], sizes = [1, 4, 32, 8], strides = [1, 1, 1, 1]} : vector<3x4x32x8xf32> to vector<1x4x32x8xf32>
    %122 = vector.shape_cast %121 : vector<1x4x32x8xf32> to vector<4x32x8xf32>
    %cst_57 = arith.constant dense<0.000000e+00> : vector<4x8x8xf32>
    %123 = tpu.matmul %117, %122, %cst_57 {dimension_numbers = #tpu.dot_dimension_numbers<[2], [1], [1], [2], [0, 0, 0, 1, 1, 2], [0], [0]>} : vector<4x8x32xf32>, vector<4x32x8xf32>, vector<4x8x8xf32> -> vector<4x8x8xf32>
    %124 = vector.extract_strided_slice %112 {offsets = [0, 0, 0, 0], sizes = [1, 4, 1, 8], strides = [1, 1, 1, 1]} : vector<3x4x1x8xf32> to vector<1x4x1x8xf32>
    %125 = vector.shape_cast %124 : vector<1x4x1x8xf32> to vector<4x1x8xf32>
    %126 = vector.broadcast %125 : vector<4x1x8xf32> to vector<4x8x8xf32>
    %127 = arith.addf %123, %126 : vector<4x8x8xf32>
    %128 = vector.extract_strided_slice %111 {offsets = [1, 0, 0, 0], sizes = [1, 4, 32, 8], strides = [1, 1, 1, 1]} : vector<3x4x32x8xf32> to vector<1x4x32x8xf32>
    %129 = vector.shape_cast %128 : vector<1x4x32x8xf32> to vector<4x32x8xf32>
    %cst_58 = arith.constant dense<0.000000e+00> : vector<4x8x8xf32>
    %130 = tpu.matmul %120, %129, %cst_58 {dimension_numbers = #tpu.dot_dimension_numbers<[2], [1], [1], [2], [0, 0, 0, 1, 1, 2], [0], [0]>} : vector<4x8x32xf32>, vector<4x32x8xf32>, vector<4x8x8xf32> -> vector<4x8x8xf32>
    %131 = vector.extract_strided_slice %112 {offsets = [1, 0, 0, 0], sizes = [1, 4, 1, 8], strides = [1, 1, 1, 1]} : vector<3x4x1x8xf32> to vector<1x4x1x8xf32>
    %132 = vector.shape_cast %131 : vector<1x4x1x8xf32> to vector<4x1x8xf32>
    %133 = vector.broadcast %132 : vector<4x1x8xf32> to vector<4x8x8xf32>
    %134 = arith.addf %130, %133 : vector<4x8x8xf32>
    %135 = vector.extract_strided_slice %111 {offsets = [2, 0, 0, 0], sizes = [1, 4, 32, 8], strides = [1, 1, 1, 1]} : vector<3x4x32x8xf32> to vector<1x4x32x8xf32>
    %136 = vector.shape_cast %135 : vector<1x4x32x8xf32> to vector<4x32x8xf32>
    %cst_59 = arith.constant dense<0.000000e+00> : vector<4x8x8xf32>
    %137 = tpu.matmul %120, %136, %cst_59 {dimension_numbers = #tpu.dot_dimension_numbers<[2], [1], [1], [2], [0, 0, 0, 1, 1, 2], [0], [0]>} : vector<4x8x32xf32>, vector<4x32x8xf32>, vector<4x8x8xf32> -> vector<4x8x8xf32>
    %138 = vector.extract_strided_slice %112 {offsets = [2, 0, 0, 0], sizes = [1, 4, 1, 8], strides = [1, 1, 1, 1]} : vector<3x4x1x8xf32> to vector<1x4x1x8xf32>
    %139 = vector.shape_cast %138 : vector<1x4x1x8xf32> to vector<4x1x8xf32>
    %140 = vector.broadcast %139 : vector<4x1x8xf32> to vector<4x8x8xf32>
    %141 = arith.addf %137, %140 : vector<4x8x8xf32>
    %cst_60 = arith.constant dense<0.000000e+00> : vector<4x8x8xf32>
    %142 = tpu.matmul %127, %134, %cst_60 {dimension_numbers = #tpu.dot_dimension_numbers<[2], [2], [1], [1], [0, 0, 0, 1, 1, 1], [0], [0]>} : vector<4x8x8xf32>, vector<4x8x8xf32>, vector<4x8x8xf32> -> vector<4x8x8xf32>
    %cst_61 = arith.constant 0.353553385 : f32
    %143 = vector.broadcast %cst_61 : f32 to vector<4x8x8xf32>
    %144 = arith.mulf %142, %143 : vector<4x8x8xf32>
    %cst_62 = arith.constant dense<0xFF800000> : vector<4x8xf32>
    %145 = vector.multi_reduction <maximumf>, %144, %cst_62 [2] : vector<4x8x8xf32> to vector<4x8xf32>
    %146 = vector.shape_cast %145 : vector<4x8xf32> to vector<4x8x1xf32>
    %147 = vector.broadcast %146 : vector<4x8x1xf32> to vector<4x8x8xf32>
    %148 = arith.subf %144, %147 : vector<4x8x8xf32>
    %149 = math.exp %148 : vector<4x8x8xf32>
    %cst_63 = arith.constant dense<0.000000e+00> : vector<4x8xf32>
    %150 = vector.multi_reduction <add>, %149, %cst_63 [2] : vector<4x8x8xf32> to vector<4x8xf32>
    %151 = vector.shape_cast %150 : vector<4x8xf32> to vector<4x8x1xf32>
    %152 = vector.broadcast %151 : vector<4x8x1xf32> to vector<4x8x8xf32>
    %153 = arith.divf %149, %152 : vector<4x8x8xf32>
    %cst_64 = arith.constant dense<0.000000e+00> : vector<4x8x8xf32>
    %154 = tpu.matmul %153, %141, %cst_64 {dimension_numbers = #tpu.dot_dimension_numbers<[2], [1], [1], [2], [0, 0, 0, 1, 1, 2], [0], [0]>} : vector<4x8x8xf32>, vector<4x8x8xf32>, vector<4x8x8xf32> -> vector<4x8x8xf32>
    %cst_65 = arith.constant dense<0.000000e+00> : vector<4x8x32xf32>
    %155 = tpu.matmul %154, %113, %cst_65 {dimension_numbers = #tpu.dot_dimension_numbers<[2], [1], [1], [2], [0, 0, 0, 1, 1, 2], [0], [0]>} : vector<4x8x8xf32>, vector<4x8x32xf32>, vector<4x8x32xf32> -> vector<4x8x32xf32>
    %156 = vector.extract_strided_slice %155 {offsets = [0, 0, 0], sizes = [1, 8, 32], strides = [1, 1, 1]} : vector<4x8x32xf32> to vector<1x8x32xf32>
    %157 = vector.shape_cast %156 : vector<1x8x32xf32> to vector<8x32xf32>
    %158 = vector.extract_strided_slice %155 {offsets = [1, 0, 0], sizes = [1, 8, 32], strides = [1, 1, 1]} : vector<4x8x32xf32> to vector<1x8x32xf32>
    %159 = vector.shape_cast %158 : vector<1x8x32xf32> to vector<8x32xf32>
    %160 = arith.addf %157, %159 : vector<8x32xf32>
    %161 = vector.extract_strided_slice %155 {offsets = [2, 0, 0], sizes = [1, 8, 32], strides = [1, 1, 1]} : vector<4x8x32xf32> to vector<1x8x32xf32>
    %162 = vector.shape_cast %161 : vector<1x8x32xf32> to vector<8x32xf32>
    %163 = arith.addf %160, %162 : vector<8x32xf32>
    %164 = vector.extract_strided_slice %155 {offsets = [3, 0, 0], sizes = [1, 8, 32], strides = [1, 1, 1]} : vector<4x8x32xf32> to vector<1x8x32xf32>
    %165 = vector.shape_cast %164 : vector<1x8x32xf32> to vector<8x32xf32>
    %166 = arith.addf %163, %165 : vector<8x32xf32>
    %167 = vector.broadcast %114 : vector<1x32xf32> to vector<8x32xf32>
    %168 = arith.addf %166, %167 : vector<8x32xf32>
    %169 = arith.addf %86, %168 : vector<8x32xf32>
    %c0_66 = arith.constant 0 : index
    %c0_67 = arith.constant 0 : index
    %170 = vector.load %arg15[%c0_66, %c0_67] : memref<1x32xf32, #tpu.memory_space<vmem>>, vector<1x32xf32>
    %c0_68 = arith.constant 0 : index
    %c0_69 = arith.constant 0 : index
    %171 = vector.load %arg16[%c0_68, %c0_69] : memref<1x32xf32, #tpu.memory_space<vmem>>, vector<1x32xf32>
    %cst_70 = arith.constant dense<0.000000e+00> : vector<8xf32>
    %172 = vector.multi_reduction <add>, %169, %cst_70 [1] : vector<8x32xf32> to vector<8xf32>
    %173 = vector.shape_cast %172 : vector<8xf32> to vector<8x1xf32>
    %cst_71 = arith.constant 3.200000e+01 : f32
    %174 = vector.broadcast %cst_71 : f32 to vector<8x1xf32>
    %175 = arith.divf %173, %174 : vector<8x1xf32>
    %176 = vector.broadcast %175 : vector<8x1xf32> to vector<8x32xf32>
    %177 = arith.subf %169, %176 : vector<8x32xf32>
    %178 = arith.mulf %177, %177 : vector<8x32xf32>
    %cst_72 = arith.constant dense<0.000000e+00> : vector<8xf32>
    %179 = vector.multi_reduction <add>, %178, %cst_72 [1] : vector<8x32xf32> to vector<8xf32>
    %180 = vector.shape_cast %179 : vector<8xf32> to vector<8x1xf32>
    %cst_73 = arith.constant 3.200000e+01 : f32
    %181 = vector.broadcast %cst_73 : f32 to vector<8x1xf32>
    %182 = arith.divf %180, %181 : vector<8x1xf32>
    %183 = vector.broadcast %175 : vector<8x1xf32> to vector<8x32xf32>
    %184 = arith.subf %169, %183 : vector<8x32xf32>
    %cst_74 = arith.constant 9.99999974E-6 : f32
    %185 = vector.broadcast %cst_74 : f32 to vector<8x1xf32>
    %186 = arith.addf %182, %185 : vector<8x1xf32>
    %187 = math.rsqrt %186 : vector<8x1xf32>
    %188 = vector.broadcast %187 : vector<8x1xf32> to vector<8x32xf32>
    %189 = arith.mulf %184, %188 : vector<8x32xf32>
    %190 = vector.broadcast %170 : vector<1x32xf32> to vector<8x32xf32>
    %191 = arith.mulf %189, %190 : vector<8x32xf32>
    %192 = vector.broadcast %171 : vector<1x32xf32> to vector<8x32xf32>
    %193 = arith.addf %191, %192 : vector<8x32xf32>
    %c0_75 = arith.constant 0 : index
    %c0_76 = arith.constant 0 : index
    %194 = vector.load %arg17[%c0_75, %c0_76] : memref<32x64xf32, #tpu.memory_space<vmem>>, vector<32x64xf32>
    %cst_77 = arith.constant dense<0.000000e+00> : vector<8x64xf32>
    %195 = tpu.matmul %193, %194, %cst_77 {dimension_numbers = #tpu.dot_dimension_numbers<[1], [0], [0], [1], [0, 0, 1, 1], [], []>} : vector<8x32xf32>, vector<32x64xf32>, vector<8x64xf32> -> vector<8x64xf32>
    %c0_78 = arith.constant 0 : index
    %c0_79 = arith.constant 0 : index
    %196 = vector.load %arg18[%c0_78, %c0_79] : memref<1x64xf32, #tpu.memory_space<vmem>>, vector<1x64xf32>
    %197 = vector.broadcast %196 : vector<1x64xf32> to vector<8x64xf32>
    %198 = arith.addf %195, %197 : vector<8x64xf32>
    %cst_80 = arith.constant 5.000000e-01 : f32
    %199 = vector.broadcast %cst_80 : f32 to vector<8x64xf32>
    %200 = arith.mulf %199, %198 : vector<8x64xf32>
    %cst_81 = arith.constant 0.707106769 : f32
    %201 = vector.broadcast %cst_81 : f32 to vector<8x64xf32>
    %202 = arith.mulf %198, %201 : vector<8x64xf32>
    %cst_82 = arith.constant 0.000000e+00 : f32
    %203 = vector.broadcast %cst_82 : f32 to vector<8x64xf32>
    %204 = arith.cmpf oge, %202, %203 : vector<8x64xf32>
    %cst_83 = arith.constant 1.000000e+00 : f32
    %cst_84 = arith.constant -1.000000e+00 : f32
    %205 = vector.broadcast %cst_83 : f32 to vector<8x64xf32>
    %206 = vector.broadcast %cst_84 : f32 to vector<8x64xf32>
    %207 = arith.select %204, %205, %206 : vector<8x64xi1>, vector<8x64xf32>
    %208 = math.absf %202 : vector<8x64xf32>
    %cst_85 = arith.constant 0.327591091 : f32
    %209 = vector.broadcast %cst_85 : f32 to vector<8x64xf32>
    %210 = arith.mulf %209, %208 : vector<8x64xf32>
    %cst_86 = arith.constant 1.000000e+00 : f32
    %211 = vector.broadcast %cst_86 : f32 to vector<8x64xf32>
    %212 = arith.addf %211, %210 : vector<8x64xf32>
    %cst_87 = arith.constant 1.000000e+00 : f32
    %213 = vector.broadcast %cst_87 : f32 to vector<8x64xf32>
    %214 = arith.divf %213, %212 : vector<8x64xf32>
    %cst_88 = arith.constant 1.06140542 : f32
    %215 = vector.broadcast %cst_88 : f32 to vector<8x64xf32>
    %216 = arith.mulf %215, %214 : vector<8x64xf32>
    %cst_89 = arith.constant -1.45315206 : f32
    %217 = vector.broadcast %cst_89 : f32 to vector<8x64xf32>
    %218 = arith.addf %216, %217 : vector<8x64xf32>
    %219 = arith.mulf %218, %214 : vector<8x64xf32>
    %cst_90 = arith.constant 1.42141378 : f32
    %220 = vector.broadcast %cst_90 : f32 to vector<8x64xf32>
    %221 = arith.addf %219, %220 : vector<8x64xf32>
    %222 = arith.mulf %221, %214 : vector<8x64xf32>
    %cst_91 = arith.constant -0.284496725 : f32
    %223 = vector.broadcast %cst_91 : f32 to vector<8x64xf32>
    %224 = arith.addf %222, %223 : vector<8x64xf32>
    %225 = arith.mulf %224, %214 : vector<8x64xf32>
    %cst_92 = arith.constant 0.254829586 : f32
    %226 = vector.broadcast %cst_92 : f32 to vector<8x64xf32>
    %227 = arith.addf %225, %226 : vector<8x64xf32>
    %228 = arith.mulf %227, %214 : vector<8x64xf32>
    %cst_93 = arith.constant 0.000000e+00 : f32
    %229 = vector.broadcast %cst_93 : f32 to vector<8x64xf32>
    %230 = arith.subf %229, %208 : vector<8x64xf32>
    %231 = arith.mulf %230, %208 : vector<8x64xf32>
    %232 = math.exp %231 : vector<8x64xf32>
    %233 = arith.mulf %228, %232 : vector<8x64xf32>
    %cst_94 = arith.constant 1.000000e+00 : f32
    %234 = vector.broadcast %cst_94 : f32 to vector<8x64xf32>
    %235 = arith.subf %234, %233 : vector<8x64xf32>
    %236 = arith.mulf %207, %235 : vector<8x64xf32>
    %cst_95 = arith.constant 1.000000e+00 : f32
    %237 = vector.broadcast %cst_95 : f32 to vector<8x64xf32>
    %238 = arith.addf %237, %236 : vector<8x64xf32>
    %239 = arith.mulf %200, %238 : vector<8x64xf32>
    %c0_96 = arith.constant 0 : index
    %c0_97 = arith.constant 0 : index
    %240 = vector.load %arg19[%c0_96, %c0_97] : memref<64x32xf32, #tpu.memory_space<vmem>>, vector<64x32xf32>
    %cst_98 = arith.constant dense<0.000000e+00> : vector<8x32xf32>
    %241 = tpu.matmul %239, %240, %cst_98 {dimension_numbers = #tpu.dot_dimension_numbers<[1], [0], [0], [1], [0, 0, 1, 1], [], []>} : vector<8x64xf32>, vector<64x32xf32>, vector<8x32xf32> -> vector<8x32xf32>
    %c0_99 = arith.constant 0 : index
    %c0_100 = arith.constant 0 : index
    %242 = vector.load %arg20[%c0_99, %c0_100] : memref<1x32xf32, #tpu.memory_space<vmem>>, vector<1x32xf32>
    %243 = vector.broadcast %242 : vector<1x32xf32> to vector<8x32xf32>
    %244 = arith.addf %241, %243 : vector<8x32xf32>
    %245 = arith.addf %169, %244 : vector<8x32xf32>
    %c0_101 = arith.constant 0 : index
    %c0_102 = arith.constant 0 : index
    %c0_103 = arith.constant 0 : index
    %246 = vector.load %arg21[%c0_101, %c0_102, %c0_103] : memref<1x8x32xf32, #tpu.memory_space<vmem>>, vector<1x8x32xf32>
    %247 = vector.shape_cast %246 : vector<1x8x32xf32> to vector<8x32xf32>
    %248 = vector.shape_cast %245 : vector<8x32xf32> to vector<1x8x32xf32>
    tpu.vector_store %arg21[%c0_101, %c0_102, %c0_103], %248 {strides = array<i32>} : memref<1x8x32xf32, #tpu.memory_space<vmem>>, vector<1x8x32xf32>,
    return
  }
  func.func @transform_0(%arg0: i32) -> (i32, i32, i32) {
    %c0_i32 = arith.constant 0 : i32
    %c0_i32_0 = arith.constant 0 : i32
    %c0_i32_1 = arith.constant 0 : i32
    return %arg0, %c0_i32, %c0_i32_0 : i32, i32, i32
  }
  func.func @transform_1(%arg0: i32) -> (i32, i32, i32) {
    %c0_i32 = arith.constant 0 : i32
    %c0_i32_0 = arith.constant 0 : i32
    %c0_i32_1 = arith.constant 0 : i32
    return %arg0, %c0_i32, %c0_i32_0 : i32, i32, i32
  }
  func.func @transform_2(%arg0: i32) -> (i32, i32) {
    %c0_i32 = arith.constant 0 : i32
    %c0_i32_0 = arith.constant 0 : i32
    %c0_i32_1 = arith.constant 0 : i32
    return %c0_i32, %c0_i32_0 : i32, i32
  }
  func.func @transform_3(%arg0: i32) -> (i32, i32) {
    %c0_i32 = arith.constant 0 : i32
    %c0_i32_0 = arith.constant 0 : i32
    %c0_i32_1 = arith.constant 0 : i32
    return %c0_i32, %c0_i32_0 : i32, i32
  }
  func.func @transform_4(%arg0: i32) -> (i32, i32, i32, i32) {
    %c0_i32 = arith.constant 0 : i32
    %c0_i32_0 = arith.constant 0 : i32
    %c0_i32_1 = arith.constant 0 : i32
    %c0_i32_2 = arith.constant 0 : i32
    %c0_i32_3 = arith.constant 0 : i32
    return %c0_i32, %c0_i32_0, %c0_i32_1, %c0_i32_2 : i32, i32, i32, i32
  }
  func.func @transform_5(%arg0: i32) -> (i32, i32, i32, i32) {
    %c0_i32 = arith.constant 0 : i32
    %c0_i32_0 = arith.constant 0 : i32
    %c0_i32_1 = arith.constant 0 : i32
    %c0_i32_2 = arith.constant 0 : i32
    %c0_i32_3 = arith.constant 0 : i32
    return %c0_i32, %c0_i32_0, %c0_i32_1, %c0_i32_2 : i32, i32, i32, i32
  }
  func.func @transform_6(%arg0: i32) -> (i32, i32, i32) {
    %c0_i32 = arith.constant 0 : i32
    %c0_i32_0 = arith.constant 0 : i32
    %c0_i32_1 = arith.constant 0 : i32
    %c0_i32_2 = arith.constant 0 : i32
    return %c0_i32, %c0_i32_0, %c0_i32_1 : i32, i32, i32
  }
  func.func @transform_7(%arg0: i32) -> (i32, i32) {
    %c0_i32 = arith.constant 0 : i32
    %c0_i32_0 = arith.constant 0 : i32
    %c0_i32_1 = arith.constant 0 : i32
    return %c0_i32, %c0_i32_0 : i32, i32
  }
  func.func @transform_8(%arg0: i32) -> (i32, i32) {
    %c0_i32 = arith.constant 0 : i32
    %c0_i32_0 = arith.constant 0 : i32
    %c0_i32_1 = arith.constant 0 : i32
    return %c0_i32, %c0_i32_0 : i32, i32
  }
  func.func @transform_9(%arg0: i32) -> (i32, i32) {
    %c0_i32 = arith.constant 0 : i32
    %c0_i32_0 = arith.constant 0 : i32
    %c0_i32_1 = arith.constant 0 : i32
    return %c0_i32, %c0_i32_0 : i32, i32
  }
  func.func @transform_10(%arg0: i32) -> (i32, i32, i32, i32) {
    %c0_i32 = arith.constant 0 : i32
    %c0_i32_0 = arith.constant 0 : i32
    %c0_i32_1 = arith.constant 0 : i32
    %c0_i32_2 = arith.constant 0 : i32
    %c0_i32_3 = arith.constant 0 : i32
    return %c0_i32, %c0_i32_0, %c0_i32_1, %c0_i32_2 : i32, i32, i32, i32
  }
  func.func @transform_11(%arg0: i32) -> (i32, i32, i32, i32) {
    %c0_i32 = arith.constant 0 : i32
    %c0_i32_0 = arith.constant 0 : i32
    %c0_i32_1 = arith.constant 0 : i32
    %c0_i32_2 = arith.constant 0 : i32
    %c0_i32_3 = arith.constant 0 : i32
    return %c0_i32, %c0_i32_0, %c0_i32_1, %c0_i32_2 : i32, i32, i32, i32
  }
  func.func @transform_12(%arg0: i32) -> (i32, i32, i32) {
    %c0_i32 = arith.constant 0 : i32
    %c0_i32_0 = arith.constant 0 : i32
    %c0_i32_1 = arith.constant 0 : i32
    %c0_i32_2 = arith.constant 0 : i32
    return %c0_i32, %c0_i32_0, %c0_i32_1 : i32, i32, i32
  }
  func.func @transform_13(%arg0: i32) -> (i32, i32) {
    %c0_i32 = arith.constant 0 : i32
    %c0_i32_0 = arith.constant 0 : i32
    %c0_i32_1 = arith.constant 0 : i32
    return %c0_i32, %c0_i32_0 : i32, i32
  }
  func.func @transform_14(%arg0: i32) -> (i32, i32) {
    %c0_i32 = arith.constant 0 : i32
    %c0_i32_0 = arith.constant 0 : i32
    %c0_i32_1 = arith.constant 0 : i32
    return %c0_i32, %c0_i32_0 : i32, i32
  }
  func.func @transform_15(%arg0: i32) -> (i32, i32) {
    %c0_i32 = arith.constant 0 : i32
    %c0_i32_0 = arith.constant 0 : i32
    %c0_i32_1 = arith.constant 0 : i32
    return %c0_i32, %c0_i32_0 : i32, i32
  }
  func.func @transform_16(%arg0: i32) -> (i32, i32) {
    %c0_i32 = arith.constant 0 : i32
    %c0_i32_0 = arith.constant 0 : i32
    %c0_i32_1 = arith.constant 0 : i32
    return %c0_i32, %c0_i32_0 : i32, i32
  }
  func.func @transform_17(%arg0: i32) -> (i32, i32) {
    %c0_i32 = arith.constant 0 : i32
    %c0_i32_0 = arith.constant 0 : i32
    %c0_i32_1 = arith.constant 0 : i32
    return %c0_i32, %c0_i32_0 : i32, i32
  }
  func.func @transform_18(%arg0: i32) -> (i32, i32) {
    %c0_i32 = arith.constant 0 : i32
    %c0_i32_0 = arith.constant 0 : i32
    %c0_i32_1 = arith.constant 0 : i32
    return %c0_i32, %c0_i32_0 : i32, i32
  }
  func.func @transform_19(%arg0: i32) -> (i32, i32) {
    %c0_i32 = arith.constant 0 : i32
    %c0_i32_0 = arith.constant 0 : i32
    %c0_i32_1 = arith.constant 0 : i32
    return %c0_i32, %c0_i32_0 : i32, i32
  }
  func.func @transform_20(%arg0: i32) -> (i32, i32, i32) {
    %c0_i32 = arith.constant 0 : i32
    %c0_i32_0 = arith.constant 0 : i32
    %c0_i32_1 = arith.constant 0 : i32
    return %arg0, %c0_i32, %c0_i32_0 : i32, i32, i32
  }
}

</mosaic_0001>

<llo_original>
// kernel: transformer_forward.9
$region0: #{transformer_forward.9}
  #allocation0 [shape = 'u32[]', space=smem, size = 0x4, offset = 0x4, fixed_abs, tag = 'smem constant byte address 0x4 - core index']
  #allocation1 [shape = 'u32[72,128]{1,0:T(1,128)}', space=vmem, size = 0x9000, scoped, tag = 'internal scratch']
  %s0 = inlined_call_operand.vmem [shape: f32[2,32], index: 0, kind: input, shape index: {}]
  %s1 = inlined_call_operand.vmem [shape: f32[32,16], index: 1, kind: input, shape index: {}]
  %s2 = inlined_call_operand.vmem [shape: f32[1,16], index: 2, kind: input, shape index: {}]
  %s3 = inlined_call_operand.hbm [shape: f32[2,16], index: 3, kind: output, shape index: {}]
  %s4 = sld [smem:[#allocation0]]
  $region22: #{transformer_forward.9} parent=0
    _
  %s6 = ssub.s32 1, %s4
  %s7 = scalar_select 0, %s6, %s4
  $region1: #{transformer_forward.9} parent=0
    #allocation2 [shape = 'u8[1024]{0}', space=vmem, size = 0x400, scoped, tag = 'output window, operand 0, single buffered']
    #allocation3 [shape = 's32[1]{0}', space=sflag, size = 0x4, scoped, tag = 'scoped memory for transformer_forward.9']
    %8 = vsyncpa [#allocation3], 0
    // Predicated region
    $region2: #{transformer_forward.9} parent=1 // pred_check
      _
    $region3: #{transformer_forward.9} parent=1 // pred_check_branch
      %10 = sbr.rel (0) target = $region5
    $region4: #{transformer_forward.9} parent=1 // pred_region
      _
    $region5: #{transformer_forward.9} parent=1 // pred_fallthru
      _
    // Predicated region
    $region6: #{transformer_forward.9} parent=1 // pred_check
      _
    $region7: #{transformer_forward.9} parent=1 // pred_check_branch
      %12 = sbr.rel (0) target = $region9
    $region8: #{transformer_forward.9} parent=1 // pred_region
      _
    $region9: #{transformer_forward.9} parent=1 // pred_fallthru
      _
    // Predicated region
    $region10: #{transformer_forward.9} parent=1 // pred_check
      _
    $region11: #{transformer_forward.9} parent=1 // pred_check_branch
      %14 = sbr.rel (0) target = $region13
    $region12: #{transformer_forward.9} parent=1 // pred_region
      _
    $region13: #{transformer_forward.9} parent=1 // pred_fallthru
      _
    %v15 = vld [vmem:[%s0] sm:$0x3]
    %v16 = vld [vmem:[%s1] sm:$0xff]
    %v17 = vld [vmem:[%s1 + $0x8] sm:$0xff]
    %v18 = vld [vmem:[%s1 + $0x10] sm:$0xff]
    %v19 = vld [vmem:[%s1 + $0x18] sm:$0xff]
    %v20 = vld [vmem:[%s2] sm:$0x1]
    %v22 = vperm.slane %v20, 0
    %vm24 = vcmask 261120
    %v26 = vsel %vm24, %v15, 0
    %28 = vmatpush.msra.mxu0 0.0
    %29 = vmatpush.msra.mxu0 0.0
    %30 = vmatpush.msra.mxu0 0.0
    %31 = vmatpush.msra.mxu0 0.0
    %32 = vmatpush.msra.mxu0 0.0
    %33 = vmatpush.msra.mxu0 0.0
    %34 = vmatpush.msra.mxu0 0.0
    %35 = vmatpush.msra.mxu0 0.0
    %36 = vmatpush.msra.mxu0 0.0
    %37 = vmatpush.msra.mxu0 0.0
    %38 = vmatpush.msra.mxu0 0.0
    %39 = vmatpush.msra.mxu0 0.0
    %40 = vmatpush.msra.mxu0 %v19
    %41 = vmatpush.msra.mxu0 %v18
    %42 = vmatpush.msra.mxu0 %v17
    %43 = vmatpush.msra.mxu0 %v16
    %44 = vmatmul.f32.gmra.mxu0 %v26
    %v45 = vpop.f32.mrf.mxu0
    %v46 = vadd.f32 %v22, %v45
    %47 = vdwg.mxu0
    %vm48 = vcmask 123904
    %49 = vst.msk [vmem:[#allocation2] sm:$0x3] %vm48, %v46
    // Predicated region
    $region14: #{transformer_forward.9} parent=1 // pred_check
      _
    $region15: #{transformer_forward.9} parent=1 // pred_check_branch
      %51 = sbr.rel (0) target = $region17
    $region16: #{transformer_forward.9} parent=1 // pred_region
      %53 = vsyncadd [#allocation3], 0
      %s55 = sshll.u32 [#allocation2], 4
      %s56 = int_to_ptr.vmem [resolvable:$true] %s55
      %s57 = sshll.u32 %s3, 4
      %s58 = int_to_ptr.hbm [resolvable:$true] %s57
      %60 = dma.vmem_to_hbm [thread:$0]  %s56, 32, %s58, [#allocation3]
    $region17: #{transformer_forward.9} parent=1 // pred_fallthru
      _
    // Predicated region
    $region18: #{transformer_forward.9} parent=1 // pred_check
      _
    $region19: #{transformer_forward.9} parent=1 // pred_check_branch
      %62 = sbr.rel (0) target = $region21
    $region20: #{transformer_forward.9} parent=1 // pred_region
      %64 = dma.done [#allocation3], 32
    $region21: #{transformer_forward.9} parent=1 // pred_fallthru
      _
    %65 = vsyncpa [#allocation3], 1

// kernel: transformer_forward.5
$region0: #{transformer_forward.5}
  #allocation0 [shape = 'u32[]', space=smem, size = 0x4, offset = 0x4, fixed_abs, tag = 'smem constant byte address 0x4 - core index']
  #allocation1 [shape = 'u32[72,128]{1,0:T(1,128)}', space=vmem, size = 0x9000, scoped, tag = 'internal scratch']
  %s0 = inlined_call_operand.vmem [shape: f32[2,8,32], index: 0, kind: input, shape index: {}]
  %s1 = inlined_call_operand.vmem [shape: f32[1,32], index: 1, kind: input, shape index: {}]
  %s2 = inlined_call_operand.vmem [shape: f32[1,32], index: 2, kind: input, shape index: {}]
  %s3 = inlined_call_operand.vmem [shape: f32[3,4,32,8], index: 3, kind: input, shape index: {}]
  %s4 = inlined_call_operand.vmem [shape: f32[3,4,1,8], index: 4, kind: input, shape index: {}]
  %s5 = inlined_call_operand.vmem [shape: f32[4,8,32], index: 5, kind: input, shape index: {}]
  %s6 = inlined_call_operand.vmem [shape: f32[1,32], index: 6, kind: input, shape index: {}]
  %s7 = inlined_call_operand.vmem [shape: f32[1,32], index: 7, kind: input, shape index: {}]
  %s8 = inlined_call_operand.vmem [shape: f32[1,32], index: 8, kind: input, shape index: {}]
  %s9 = inlined_call_operand.vmem [shape: f32[32,64], index: 9, kind: input, shape index: {}]
  %s10 = inlined_call_operand.vmem [shape: f32[1,64], index: 10, kind: input, shape index: {}]
  %s11 = inlined_call_operand.vmem [shape: f32[64,32], index: 11, kind: input, shape index: {}]
  %s12 = inlined_call_operand.vmem [shape: f32[1,32], index: 12, kind: input, shape index: {}]
  %s13 = inlined_call_operand.vmem [shape: f32[2,8,32], index: 13, kind: output, shape index: {}]
  %s14 = sld [smem:[#allocation0]]
  $region85: #{transformer_forward.5} parent=0
    _
  %s16 = ssub.s32 1, %s14
  %s17 = scalar_select 0, %s16, %s14
  loop: start=0, step=1, limit=4
  $region2: #{transformer_forward.5} parent=0 // loop_pre_header
    _
  $region3: #{transformer_forward.5} parent=0 // loop_header
    %s19 = sphi 0, %s23
    %p20 = scmp.ge.s32.totalorder %s19, 4
    %s29 = sphi 0, %s31
    %s32 = sphi 0, %s29
    %s33 = sphi 0, %s32
    %s49 = sphi 0, %s33
    %s53 = sphi 0, %s53
    %s55 = sphi 0, %s53
    %s56 = sphi 0, %s55
    %s70 = sphi 0, %s56
    %s74 = sphi 0, %s74
    %s76 = sphi 0, %s74
    %s77 = sphi 0, %s76
    %s91 = sphi 0, %s77
    %s95 = sphi 0, %s95
    %s97 = sphi 0, %s95
    %s98 = sphi 0, %s97
    %s112 = sphi 0, %s98
    %s116 = sphi 0, %s116
    %s118 = sphi 0, %s116
    %s119 = sphi 0, %s118
    %s133 = sphi 0, %s119
    %s137 = sphi 0, %s137
    %s139 = sphi 0, %s137
    %s140 = sphi 0, %s139
    %s154 = sphi 0, %s140
    %s158 = sphi 0, %s158
    %s160 = sphi 0, %s158
    %s161 = sphi 0, %s160
    %s175 = sphi 0, %s161
    %s179 = sphi 0, %s179
    %s181 = sphi 0, %s179
    %s182 = sphi 0, %s181
    %s196 = sphi 0, %s182
    %s200 = sphi 0, %s200
    %s202 = sphi 0, %s200
    %s203 = sphi 0, %s202
    %s217 = sphi 0, %s203
    %s221 = sphi 0, %s221
    %s223 = sphi 0, %s221
    %s224 = sphi 0, %s223
    %s238 = sphi 0, %s224
    %s242 = sphi 0, %s242
    %s244 = sphi 0, %s242
    %s245 = sphi 0, %s244
    %s259 = sphi 0, %s245
    %s263 = sphi 0, %s263
    %s265 = sphi 0, %s263
    %s266 = sphi 0, %s265
    %s280 = sphi 0, %s266
    %s284 = sphi 0, %s284
    %s286 = sphi 0, %s284
    %s287 = sphi 0, %s286
    %s301 = sphi 0, %s287
    %s307 = sphi 0, %s309
    %s310 = sphi 0, %s307
    %s311 = sphi 0, %s310
    %s327 = sphi 0, %s311
  $region4: #{transformer_forward.5} parent=0 // loop_header_branch
    %22 = sbr.rel (%p20) target = $region8
  $region5: #{transformer_forward.5} parent=0 // loop_body
    %s24 = ssub.s32 %s19, 1
    %s25 = ssub.s32 %s19, 2
    %s26 = sadd.s32 %s19, 1
    %s27 = ssub.s32 %s19, %s26
    %p28 = scmp.eq.s32.totalorder %s27, 0
    %s30 = sadd.s32 %s29, 1
    %s31 = scalar_select %p28, %s29, %s30
    %p34 = pneg %p28
    %p35 = scmp.eq.s32.totalorder %s19, 1
    %p36 = por %p34, %p35
    %p37 = scmp.ne.s32.totalorder %s29, %s32
    %p38 = scmp.eq.s32.totalorder %s19, 0
    %p39 = por %p37, %p38
    %p40 = scmp.ne.s32.totalorder %s29, %s32
    %p41 = scmp.eq.s32.totalorder %s24, 1
    %p42 = por %p40, %p41
    %p43 = scmp.ne.s32.totalorder %s32, %s33
    %p44 = scmp.eq.s32.totalorder %s24, 0
    %p45 = por %p43, %p44
    %p46 = scmp.ne.s32.totalorder %s32, %s33
    %p47 = scmp.eq.s32.totalorder %s25, 1
    %p48 = por %p46, %p47
    %p50 = scmp.ne.s32.totalorder %s33, %s49
    %p51 = scmp.eq.s32.totalorder %s25, 0
    %p52 = por %p50, %p51
    %s54 = sadd.s32 %s53, 1
    %p57 = scmp.eq.s32.totalorder %s19, 1
    %p58 = scmp.ne.s32.totalorder %s53, %s55
    %p59 = scmp.eq.s32.totalorder %s19, 0
    %p60 = por %p58, %p59
    %p61 = scmp.ne.s32.totalorder %s53, %s55
    %p62 = scmp.eq.s32.totalorder %s24, 1
    %p63 = por %p61, %p62
    %p64 = scmp.ne.s32.totalorder %s55, %s56
    %p65 = scmp.eq.s32.totalorder %s24, 0
    %p66 = por %p64, %p65
    %p67 = scmp.ne.s32.totalorder %s55, %s56
    %p68 = scmp.eq.s32.totalorder %s25, 1
    %p69 = por %p67, %p68
    %p71 = scmp.ne.s32.totalorder %s56, %s70
    %p72 = scmp.eq.s32.totalorder %s25, 0
    %p73 = por %p71, %p72
    %s75 = sadd.s32 %s74, 1
    %p78 = scmp.eq.s32.totalorder %s19, 1
    %p79 = scmp.ne.s32.totalorder %s74, %s76
    %p80 = scmp.eq.s32.totalorder %s19, 0
    %p81 = por %p79, %p80
    %p82 = scmp.ne.s32.totalorder %s74, %s76
    %p83 = scmp.eq.s32.totalorder %s24, 1
    %p84 = por %p82, %p83
    %p85 = scmp.ne.s32.totalorder %s76, %s77
    %p86 = scmp.eq.s32.totalorder %s24, 0
    %p87 = por %p85, %p86
    %p88 = scmp.ne.s32.totalorder %s76, %s77
    %p89 = scmp.eq.s32.totalorder %s25, 1
    %p90 = por %p88, %p89
    %p92 = scmp.ne.s32.totalorder %s77, %s91
    %p93 = scmp.eq.s32.totalorder %s25, 0
    %p94 = por %p92, %p93
    %s96 = sadd.s32 %s95, 1
    %p99 = scmp.eq.s32.totalorder %s19, 1
    %p100 = scmp.ne.s32.totalorder %s95, %s97
    %p101 = scmp.eq.s32.totalorder %s19, 0
    %p102 = por %p100, %p101
    %p103 = scmp.ne.s32.totalorder %s95, %s97
    %p104 = scmp.eq.s32.totalorder %s24, 1
    %p105 = por %p103, %p104
    %p106 = scmp.ne.s32.totalorder %s97, %s98
    %p107 = scmp.eq.s32.totalorder %s24, 0
    %p108 = por %p106, %p107
    %p109 = scmp.ne.s32.totalorder %s97, %s98
    %p110 = scmp.eq.s32.totalorder %s25, 1
    %p111 = por %p109, %p110
    %p113 = scmp.ne.s32.totalorder %s98, %s112
    %p114 = scmp.eq.s32.totalorder %s25, 0
    %p115 = por %p113, %p114
    %s117 = sadd.s32 %s116, 1
    %p120 = scmp.eq.s32.totalorder %s19, 1
    %p121 = scmp.ne.s32.totalorder %s116, %s118
    %p122 = scmp.eq.s32.totalorder %s19, 0
    %p123 = por %p121, %p122
    %p124 = scmp.ne.s32.totalorder %s116, %s118
    %p125 = scmp.eq.s32.totalorder %s24, 1
    %p126 = por %p124, %p125
    %p127 = scmp.ne.s32.totalorder %s118, %s119
    %p128 = scmp.eq.s32.totalorder %s24, 0
    %p129 = por %p127, %p128
    %p130 = scmp.ne.s32.totalorder %s118, %s119
    %p131 = scmp.eq.s32.totalorder %s25, 1
    %p132 = por %p130, %p131
    %p134 = scmp.ne.s32.totalorder %s119, %s133
    %p135 = scmp.eq.s32.totalorder %s25, 0
    %p136 = por %p134, %p135
    %s138 = sadd.s32 %s137, 1
    %p141 = scmp.eq.s32.totalorder %s19, 1
    %p142 = scmp.ne.s32.totalorder %s137, %s139
    %p143 = scmp.eq.s32.totalorder %s19, 0
    %p144 = por %p142, %p143
    %p145 = scmp.ne.s32.totalorder %s137, %s139
    %p146 = scmp.eq.s32.totalorder %s24, 1
    %p147 = por %p145, %p146
    %p148 = scmp.ne.s32.totalorder %s139, %s140
    %p149 = scmp.eq.s32.totalorder %s24, 0
    %p150 = por %p148, %p149
    %p151 = scmp.ne.s32.totalorder %s139, %s140
    %p152 = scmp.eq.s32.totalorder %s25, 1
    %p153 = por %p151, %p152
    %p155 = scmp.ne.s32.totalorder %s140, %s154
    %p156 = scmp.eq.s32.totalorder %s25, 0
    %p157 = por %p155, %p156
    %s159 = sadd.s32 %s158, 1
    %p162 = scmp.eq.s32.totalorder %s19, 1
    %p163 = scmp.ne.s32.totalorder %s158, %s160
    %p164 = scmp.eq.s32.totalorder %s19, 0
    %p165 = por %p163, %p164
    %p166 = scmp.ne.s32.totalorder %s158, %s160
    %p167 = scmp.eq.s32.totalorder %s24, 1
    %p168 = por %p166, %p167
    %p169 = scmp.ne.s32.totalorder %s160, %s161
    %p170 = scmp.eq.s32.totalorder %s24, 0
    %p171 = por %p169, %p170
    %p172 = scmp.ne.s32.totalorder %s160, %s161
    %p173 = scmp.eq.s32.totalorder %s25, 1
    %p174 = por %p172, %p173
    %p176 = scmp.ne.s32.totalorder %s161, %s175
    %p177 = scmp.eq.s32.totalorder %s25, 0
    %p178 = por %p176, %p177
    %s180 = sadd.s32 %s179, 1
    %p183 = scmp.eq.s32.totalorder %s19, 1
    %p184 = scmp.ne.s32.totalorder %s179, %s181
    %p185 = scmp.eq.s32.totalorder %s19, 0
    %p186 = por %p184, %p185
    %p187 = scmp.ne.s32.totalorder %s179, %s181
    %p188 = scmp.eq.s32.totalorder %s24, 1
    %p189 = por %p187, %p188
    %p190 = scmp.ne.s32.totalorder %s181, %s182
    %p191 = scmp.eq.s32.totalorder %s24, 0
    %p192 = por %p190, %p191
    %p193 = scmp.ne.s32.totalorder %s181, %s182
    %p194 = scmp.eq.s32.totalorder %s25, 1
    %p195 = por %p193, %p194
    %p197 = scmp.ne.s32.totalorder %s182, %s196
    %p198 = scmp.eq.s32.totalorder %s25, 0
    %p199 = por %p197, %p198
    %s201 = sadd.s32 %s200, 1
    %p204 = scmp.eq.s32.totalorder %s19, 1
    %p205 = scmp.ne.s32.totalorder %s200, %s202
    %p206 = scmp.eq.s32.totalorder %s19, 0
    %p207 = por %p205, %p206
    %p208 = scmp.ne.s32.totalorder %s200, %s202
    %p209 = scmp.eq.s32.totalorder %s24, 1
    %p210 = por %p208, %p209
    %p211 = scmp.ne.s32.totalorder %s202, %s203
    %p212 = scmp.eq.s32.totalorder %s24, 0
    %p213 = por %p211, %p212
    %p214 = scmp.ne.s32.totalorder %s202, %s203
    %p215 = scmp.eq.s32.totalorder %s25, 1
    %p216 = por %p214, %p215
    %p218 = scmp.ne.s32.totalorder %s203, %s217
    %p219 = scmp.eq.s32.totalorder %s25, 0
    %p220 = por %p218, %p219
    %s222 = sadd.s32 %s221, 1
    %p225 = scmp.eq.s32.totalorder %s19, 1
    %p226 = scmp.ne.s32.totalorder %s221, %s223
    %p227 = scmp.eq.s32.totalorder %s19, 0
    %p228 = por %p226, %p227
    %p229 = scmp.ne.s32.totalorder %s221, %s223
    %p230 = scmp.eq.s32.totalorder %s24, 1
    %p231 = por %p229, %p230
    %p232 = scmp.ne.s32.totalorder %s223, %s224
    %p233 = scmp.eq.s32.totalorder %s24, 0
    %p234 = por %p232, %p233
    %p235 = scmp.ne.s32.totalorder %s223, %s224
    %p236 = scmp.eq.s32.totalorder %s25, 1
    %p237 = por %p235, %p236
    %p239 = scmp.ne.s32.totalorder %s224, %s238
    %p240 = scmp.eq.s32.totalorder %s25, 0
    %p241 = por %p239, %p240
    %s243 = sadd.s32 %s242, 1
    %p246 = scmp.eq.s32.totalorder %s19, 1
    %p247 = scmp.ne.s32.totalorder %s242, %s244
    %p248 = scmp.eq.s32.totalorder %s19, 0
    %p249 = por %p247, %p248
    %p250 = scmp.ne.s32.totalorder %s242, %s244
    %p251 = scmp.eq.s32.totalorder %s24, 1
    %p252 = por %p250, %p251
    %p253 = scmp.ne.s32.totalorder %s244, %s245
    %p254 = scmp.eq.s32.totalorder %s24, 0
    %p255 = por %p253, %p254
    %p256 = scmp.ne.s32.totalorder %s244, %s245
    %p257 = scmp.eq.s32.totalorder %s25, 1
    %p258 = por %p256, %p257
    %p260 = scmp.ne.s32.totalorder %s245, %s259
    %p261 = scmp.eq.s32.totalorder %s25, 0
    %p262 = por %p260, %p261
    %s264 = sadd.s32 %s263, 1
    %p267 = scmp.eq.s32.totalorder %s19, 1
    %p268 = scmp.ne.s32.totalorder %s263, %s265
    %p269 = scmp.eq.s32.totalorder %s19, 0
    %p270 = por %p268, %p269
    %p271 = scmp.ne.s32.totalorder %s263, %s265
    %p272 = scmp.eq.s32.totalorder %s24, 1
    %p273 = por %p271, %p272
    %p274 = scmp.ne.s32.totalorder %s265, %s266
    %p275 = scmp.eq.s32.totalorder %s24, 0
    %p276 = por %p274, %p275
    %p277 = scmp.ne.s32.totalorder %s265, %s266
    %p278 = scmp.eq.s32.totalorder %s25, 1
    %p279 = por %p277, %p278
    %p281 = scmp.ne.s32.totalorder %s266, %s280
    %p282 = scmp.eq.s32.totalorder %s25, 0
    %p283 = por %p281, %p282
    %s285 = sadd.s32 %s284, 1
    %p288 = scmp.eq.s32.totalorder %s19, 1
    %p289 = scmp.ne.s32.totalorder %s284, %s286
    %p290 = scmp.eq.s32.totalorder %s19, 0
    %p291 = por %p289, %p290
    %p292 = scmp.ne.s32.totalorder %s284, %s286
    %p293 = scmp.eq.s32.totalorder %s24, 1
    %p294 = por %p292, %p293
    %p295 = scmp.ne.s32.totalorder %s286, %s287
    %p296 = scmp.eq.s32.totalorder %s24, 0
    %p297 = por %p295, %p296
    %p298 = scmp.ne.s32.totalorder %s286, %s287
    %p299 = scmp.eq.s32.totalorder %s25, 1
    %p300 = por %p298, %p299
    %p302 = scmp.ne.s32.totalorder %s287, %s301
    %p303 = scmp.eq.s32.totalorder %s25, 0
    %p304 = por %p302, %p303
    %s305 = ssub.s32 %s19, %s26
    %p306 = scmp.eq.s32.totalorder %s305, 0
    %s308 = sadd.s32 %s307, 1
    %s309 = scalar_select %p306, %s307, %s308
    %p312 = pneg %p306
    %p313 = scmp.eq.s32.totalorder %s19, 1
    %p314 = por %p312, %p313
    %p315 = scmp.ne.s32.totalorder %s307, %s310
    %p316 = scmp.eq.s32.totalorder %s19, 0
    %p317 = por %p315, %p316
    %p318 = scmp.ne.s32.totalorder %s307, %s310
    %p319 = scmp.eq.s32.totalorder %s24, 1
    %p320 = por %p318, %p319
    %p321 = scmp.ne.s32.totalorder %s310, %s311
    %p322 = scmp.eq.s32.totalorder %s24, 0
    %p323 = por %p321, %p322
    %p324 = scmp.ne.s32.totalorder %s310, %s311
    %p325 = scmp.eq.s32.totalorder %s25, 1
    %p326 = por %p324, %p325
    %p328 = scmp.ne.s32.totalorder %s311, %s327
    %p329 = scmp.eq.s32.totalorder %s25, 0
    %p330 = por %p328, %p329
    %p331 = scmp.le.s32.totalorder 1, %s19
    %p332 = scmp.lt.s32.totalorder %s19, 3
    %p333 = pnand %p331, %p332
    %p334 = pneg %p333
    // Predicated region
    $region9: #{transformer_forward.5} parent=5 // pred_check
      _
    $region10: #{transformer_forward.5} parent=5 // pred_check_branch
      %336 = sbr.rel (%p333) target = $region12
    $region11: #{transformer_forward.5} parent=5 // pred_region
      %s337 = ssub.s32 %s19, 1
      // Predicated region
      $region13: #{transformer_forward.5} parent=11 // pred_check
        %p338 = pneg %p66
      $region14: #{transformer_forward.5} parent=11 // pred_check_branch
        %340 = sbr.rel (%p338) target = $region16
      $region15: #{transformer_forward.5} parent=11 // pred_region
        _
      $region16: #{transformer_forward.5} parent=11 // pred_fallthru
        _
      // Predicated region
      $region17: #{transformer_forward.5} parent=11 // pred_check
        %p341 = pneg %p87
      $region18: #{transformer_forward.5} parent=11 // pred_check_branch
        %343 = sbr.rel (%p341) target = $region20
      $region19: #{transformer_forward.5} parent=11 // pred_region
        _
      $region20: #{transformer_forward.5} parent=11 // pred_fallthru
        _
      // Predicated region
      $region21: #{transformer_forward.5} parent=11 // pred_check
        %p344 = pneg %p108
      $region22: #{transformer_forward.5} parent=11 // pred_check_branch
        %346 = sbr.rel (%p344) target = $region24
      $region23: #{transformer_forward.5} parent=11 // pred_region
        _
      $region24: #{transformer_forward.5} parent=11 // pred_fallthru
        _
      // Predicated region
      $region25: #{transformer_forward.5} parent=11 // pred_check
        %p347 = pneg %p129
      $region26: #{transformer_forward.5} parent=11 // pred_check_branch
        %349 = sbr.rel (%p347) target = $region28
      $region27: #{transformer_forward.5} parent=11 // pred_region
        _
      $region28: #{transformer_forward.5} parent=11 // pred_fallthru
        _
      // Predicated region
      $region29: #{transformer_forward.5} parent=11 // pred_check
        %p350 = pneg %p150
      $region30: #{transformer_forward.5} parent=11 // pred_check_branch
        %352 = sbr.rel (%p350) target = $region32
      $region31: #{transformer_forward.5} parent=11 // pred_region
        _
      $region32: #{transformer_forward.5} parent=11 // pred_fallthru
        _
      // Predicated region
      $region33: #{transformer_forward.5} parent=11 // pred_check
        %p353 = pneg %p171
      $region34: #{transformer_forward.5} parent=11 // pred_check_branch
        %355 = sbr.rel (%p353) target = $region36
      $region35: #{transformer_forward.5} parent=11 // pred_region
        _
      $region36: #{transformer_forward.5} parent=11 // pred_fallthru
        _
      // Predicated region
      $region37: #{transformer_forward.5} parent=11 // pred_check
        %p356 = pneg %p192
      $region38: #{transformer_forward.5} parent=11 // pred_check_branch
        %358 = sbr.rel (%p356) target = $region40
      $region39: #{transformer_forward.5} parent=11 // pred_region
        _
      $region40: #{transformer_forward.5} parent=11 // pred_fallthru
        _
      // Predicated region
      $region41: #{transformer_forward.5} parent=11 // pred_check
        %p359 = pneg %p213
      $region42: #{transformer_forward.5} parent=11 // pred_check_branch
        %361 = sbr.rel (%p359) target = $region44
      $region43: #{transformer_forward.5} parent=11 // pred_region
        _
      $region44: #{transformer_forward.5} parent=11 // pred_fallthru
        _
      // Predicated region
      $region45: #{transformer_forward.5} parent=11 // pred_check
        %p362 = pneg %p234
      $region46: #{transformer_forward.5} parent=11 // pred_check_branch
        %364 = sbr.rel (%p362) target = $region48
      $region47: #{transformer_forward.5} parent=11 // pred_region
        _
      $region48: #{transformer_forward.5} parent=11 // pred_fallthru
        _
      // Predicated region
      $region49: #{transformer_forward.5} parent=11 // pred_check
        %p365 = pneg %p255
      $region50: #{transformer_forward.5} parent=11 // pred_check_branch
        %367 = sbr.rel (%p365) target = $region52
      $region51: #{transformer_forward.5} parent=11 // pred_region
        _
      $region52: #{transformer_forward.5} parent=11 // pred_fallthru
        _
      // Predicated region
      $region53: #{transformer_forward.5} parent=11 // pred_check
        %p368 = pneg %p276
      $region54: #{transformer_forward.5} parent=11 // pred_check_branch
        %370 = sbr.rel (%p368) target = $region56
      $region55: #{transformer_forward.5} parent=11 // pred_region
        _
      $region56: #{transformer_forward.5} parent=11 // pred_fallthru
        _
      // Predicated region
      $region57: #{transformer_forward.5} parent=11 // pred_check
        %p371 = pneg %p297
      $region58: #{transformer_forward.5} parent=11 // pred_check_branch
        %373 = sbr.rel (%p371) target = $region60
      $region59: #{transformer_forward.5} parent=11 // pred_region
        _
      $region60: #{transformer_forward.5} parent=11 // pred_fallthru
        _
    $region12: #{transformer_forward.5} parent=5 // pred_fallthru
      _
    %p374 = scmp.lt.s32.totalorder %s19, 2
    // Predicated region
    $region61: #{transformer_forward.5} parent=5 // pred_check
      %p375 = pneg %p374
    $region62: #{transformer_forward.5} parent=5 // pred_check_branch
      %377 = sbr.rel (%p375) target = $region64
    $region63: #{transformer_forward.5} parent=5 // pred_region
      // Predicated region
      $region65: #{transformer_forward.5} parent=63 // pred_check
        %p378 = pneg %p39
      $region66: #{transformer_forward.5} parent=63 // pred_check_branch
        %380 = sbr.rel (%p378) target = $region68
      $region67: #{transformer_forward.5} parent=63 // pred_region
        %p381 = scmp.lt.s32.totalorder %s19, 1
        %s382 = scalar_select %p381, %s19, 1
        %s383 = smul.addr %s382, 8
        %s384 = scalar_lea.vmem %s0, %s383
      $region68: #{transformer_forward.5} parent=63 // pred_fallthru
        _
    $region64: #{transformer_forward.5} parent=5 // pred_fallthru
      _
    %p385 = scmp.le.s32.totalorder 1, %s19
    %p386 = scmp.lt.s32.totalorder %s19, 3
    %p387 = pnand %p385, %p386
    %p388 = pneg %p387
    // Predicated region
    $region69: #{transformer_forward.5} parent=5 // pred_check
      _
    $region70: #{transformer_forward.5} parent=5 // pred_check_branch
      %390 = sbr.rel (%p387) target = $region72
    $region71: #{transformer_forward.5} parent=5 // pred_region
      %s391 = ssub.s32 %s19, 1
      %p392 = scmp.lt.s32.totalorder %s24, 1
      %s393 = scalar_select %p392, %s24, 1
      %s394 = smul.addr %s393, 8
      %s395 = scalar_lea.vmem %s0, %s394
      %p396 = pneg %p45
      %p397 = pneg %p42
      %p398 = pneg %p66
      %p399 = pneg %p63
      %p400 = pneg %p87
      %p401 = pneg %p84
      %p402 = pneg %p108
      %p403 = pneg %p105
      %p404 = pneg %p129
      %p405 = pneg %p126
      %p406 = pneg %p150
      %p407 = pneg %p147
      %p408 = pneg %p171
      %p409 = pneg %p168
      %p410 = pneg %p192
      %p411 = pneg %p189
      %p412 = pneg %p213
      %p413 = pneg %p210
      %p414 = pneg %p234
      %p415 = pneg %p231
      %p416 = pneg %p255
      %p417 = pneg %p252
      %p418 = pneg %p276
      %p419 = pneg %p273
      %p420 = pneg %p297
      %p421 = pneg %p294
      %p422 = pneg %p323
      %p423 = pneg %p320
      %p424 = scmp.lt.s32.totalorder %s24, 1
      %s425 = scalar_select %p424, %s24, 1
      %s426 = smul.addr %s425, 8
      %s427 = scalar_lea.vmem %s13, %s426
      %p428 = scmp.lt.s32.totalorder %s24, 1
      %s429 = scalar_select %p428, %s24, 1
      %s430 = smul.addr %s429, 8
      %s431 = scalar_lea.vmem %s0, %s430
      %p432 = scmp.lt.s32.totalorder %s24, 1
      %s433 = scalar_select %p432, %s24, 1
      %s434 = smul.addr %s433, 8
      %s435 = scalar_lea.vmem %s13, %s434
      %v436 = vld [vmem:[%s431] sm:$0xff]
      %v437 = vld [vmem:[%s1] sm:$0x1]
      %v438 = vld [vmem:[%s2] sm:$0x1]
      %vm439 = vcmask 261120
      %v440 = vsel %vm439, %v436, 0.0
      %441 = vadd.xlane.f32.xlu0 %v440
      %v442 = vpop.xlane.xlu0 %441
      %v443 = vrcp.pop 32.0
      %v444 = vmul.f32 32.0, %v443
      %v445 = vsub.f32 1.0, %v444
      %v446 = vmul.f32 %v443, %v445
      %v447 = vadd.f32 %v443, %v446
      %vm448 = vweird.f32 %v443
      %v449 = vsel %vm448, %v443, %v447
      %v450 = vmul.f32 %v442, %v449
      %v451 = vsub.f32 %v436, %v450
      %v452 = vmul.f32 %v451, %v451
      %v453 = vsel %vm439, %v452, 0.0
      %454 = vadd.xlane.f32.xlu0 %v453
      %v455 = vpop.xlane.xlu0 %454
      %v456 = vmul.f32 %v455, %v449
      %v457 = vadd.f32 %v456, 1e-05
      %v458 = vrsqrt.pop %v457
      %v459 = vmul.f32 %v458, %v457
      %v460 = vmul.f32 %v459, %v458
      %v461 = vmul.f32 0.5, %v460
      %v462 = vsub.f32 1.5, %v461
      %v463 = vmul.f32 %v458, %v462
      %vm464 = vweird.f32 %v457
      %vm465 = vweird.f32 %v458
      %vm466 = vmor %vm464, %vm465
      %v467 = vsel %vm466, %v458, %v463
      %v468 = vmul.f32 %v451, %v467
      %v470 = vperm.slane %v437, 0
      %v472 = vmul.f32 %v468, %v470
      %v474 = vperm.slane %v438, 0
      %v476 = vadd.f32 %v472, %v474
      %v477 = vld [vmem:[%s3] sm:$0xff]
      %v478 = vld [vmem:[%s3 + $0x8] sm:$0xff]
      %v479 = vld [vmem:[%s3 + $0x10] sm:$0xff]
      %v480 = vld [vmem:[%s3 + $0x18] sm:$0xff]
      %v481 = vld [vmem:[%s3 + $0x20] sm:$0xff]
      %v482 = vld [vmem:[%s3 + $0x28] sm:$0xff]
      %v483 = vld [vmem:[%s3 + $0x30] sm:$0xff]
      %v484 = vld [vmem:[%s3 + $0x38] sm:$0xff]
      %v485 = vld [vmem:[%s3 + $0x40] sm:$0xff]
      %v486 = vld [vmem:[%s3 + $0x48] sm:$0xff]
      %v487 = vld [vmem:[%s3 + $0x50] sm:$0xff]
      %v488 = vld [vmem:[%s3 + $0x58] sm:$0xff]
      %v489 = vld [vmem:[%s3 + $0x60] sm:$0xff]
      %v490 = vld [vmem:[%s3 + $0x68] sm:$0xff]
      %v491 = vld [vmem:[%s3 + $0x70] sm:$0xff]
      %v492 = vld [vmem:[%s3 + $0x78] sm:$0xff]
      %v493 = vld [vmem:[%s3 + $0x80] sm:$0xff]
      %v494 = vld [vmem:[%s3 + $0x88] sm:$0xff]
      %v495 = vld [vmem:[%s3 + $0x90] sm:$0xff]
      %v496 = vld [vmem:[%s3 + $0x98] sm:$0xff]
      %v497 = vld [vmem:[%s3 + $0xa0] sm:$0xff]
      %v498 = vld [vmem:[%s3 + $0xa8] sm:$0xff]
      %v499 = vld [vmem:[%s3 + $0xb0] sm:$0xff]
      %v500 = vld [vmem:[%s3 + $0xb8] sm:$0xff]
      %v501 = vld [vmem:[%s3 + $0xc0] sm:$0xff]
      %v502 = vld [vmem:[%s3 + $0xc8] sm:$0xff]
      %v503 = vld [vmem:[%s3 + $0xd0] sm:$0xff]
      %v504 = vld [vmem:[%s3 + $0xd8] sm:$0xff]
      %v505 = vld [vmem:[%s3 + $0xe0] sm:$0xff]
      %v506 = vld [vmem:[%s3 + $0xe8] sm:$0xff]
      %v507 = vld [vmem:[%s3 + $0xf0] sm:$0xff]
      %v508 = vld [vmem:[%s3 + $0xf8] sm:$0xff]
      %v509 = vld [vmem:[%s3 + $0x100] sm:$0xff]
      %v510 = vld [vmem:[%s3 + $0x108] sm:$0xff]
      %v511 = vld [vmem:[%s3 + $0x110] sm:$0xff]
      %v512 = vld [vmem:[%s3 + $0x118] sm:$0xff]
      %v513 = vld [vmem:[%s3 + $0x120] sm:$0xff]
      %v514 = vld [vmem:[%s3 + $0x128] sm:$0xff]
      %v515 = vld [vmem:[%s3 + $0x130] sm:$0xff]
      %v516 = vld [vmem:[%s3 + $0x138] sm:$0xff]
      %v517 = vld [vmem:[%s3 + $0x140] sm:$0xff]
      %v518 = vld [vmem:[%s3 + $0x148] sm:$0xff]
      %v519 = vld [vmem:[%s3 + $0x150] sm:$0xff]
      %v520 = vld [vmem:[%s3 + $0x158] sm:$0xff]
      %v521 = vld [vmem:[%s3 + $0x160] sm:$0xff]
      %v522 = vld [vmem:[%s3 + $0x168] sm:$0xff]
      %v523 = vld [vmem:[%s3 + $0x170] sm:$0xff]
      %v524 = vld [vmem:[%s3 + $0x178] sm:$0xff]
      %v525 = vld [vmem:[%s4] sm:$0x1]
      %v526 = vld [vmem:[%s4 + $0x1] sm:$0x1]
      %v527 = vld [vmem:[%s4 + $0x2] sm:$0x1]
      %v528 = vld [vmem:[%s4 + $0x3] sm:$0x1]
      %v529 = vld [vmem:[%s4 + $0x4] sm:$0x1]
      %v530 = vld [vmem:[%s4 + $0x5] sm:$0x1]
      %v531 = vld [vmem:[%s4 + $0x6] sm:$0x1]
      %v532 = vld [vmem:[%s4 + $0x7] sm:$0x1]
      %v533 = vld [vmem:[%s4 + $0x8] sm:$0x1]
      %v534 = vld [vmem:[%s4 + $0x9] sm:$0x1]
      %v535 = vld [vmem:[%s4 + $0xa] sm:$0x1]
      %v536 = vld [vmem:[%s4 + $0xb] sm:$0x1]
      %v537 = vld [vmem:[%s5] sm:$0xff]
      %v538 = vld [vmem:[%s5 + $0x8] sm:$0xff]
      %v539 = vld [vmem:[%s5 + $0x10] sm:$0xff]
      %v540 = vld [vmem:[%s5 + $0x18] sm:$0xff]
      %v541 = vld [vmem:[%s6] sm:$0x1]
      %v546 = vperm.slane %v525, 0
      %v547 = vperm.slane %v526, 0
      %v548 = vperm.slane %v527, 0
      %v549 = vperm.slane %v528, 0
      %v555 = vsel %vm439, %v476, 0
      %557 = vmatpush.msra.mxu0 0.0
      %558 = vmatpush.msra.mxu0 0.0
      %559 = vmatpush.msra.mxu0 0.0
      %560 = vmatpush.msra.mxu0 0.0
      %561 = vmatpush.msra.mxu0 0.0
      %562 = vmatpush.msra.mxu0 0.0
      %563 = vmatpush.msra.mxu0 0.0
      %564 = vmatpush.msra.mxu0 0.0
      %565 = vmatpush.msra.mxu0 0.0
      %566 = vmatpush.msra.mxu0 0.0
      %567 = vmatpush.msra.mxu0 0.0
      %568 = vmatpush.msra.mxu0 0.0
      %569 = vmatpush.msra.mxu0 %v480
      %570 = vmatpush.msra.mxu0 %v479
      %571 = vmatpush.msra.mxu0 %v478
      %572 = vmatpush.msra.mxu0 %v477
      %573 = vmatmul.f32.gmra.mxu0 %v555
      %v574 = vpop.f32.mrf.mxu0
      %v575 = vadd.f32 %v546, %v574
      %576 = vdwg.mxu0
      %577 = vmatpush.msra.mxu0 0.0
      %578 = vmatpush.msra.mxu0 0.0
      %579 = vmatpush.msra.mxu0 0.0
      %580 = vmatpush.msra.mxu0 0.0
      %581 = vmatpush.msra.mxu0 0.0
      %582 = vmatpush.msra.mxu0 0.0
      %583 = vmatpush.msra.mxu0 0.0
      %584 = vmatpush.msra.mxu0 0.0
      %585 = vmatpush.msra.mxu0 0.0
      %586 = vmatpush.msra.mxu0 0.0
      %587 = vmatpush.msra.mxu0 0.0
      %588 = vmatpush.msra.mxu0 0.0
      %589 = vmatpush.msra.mxu0 %v484
      %590 = vmatpush.msra.mxu0 %v483
      %591 = vmatpush.msra.mxu0 %v482
      %592 = vmatpush.msra.mxu0 %v481
      %593 = vmatmul.f32.gmra.mxu0 %v555
      %v594 = vpop.f32.mrf.mxu0
      %v595 = vadd.f32 %v547, %v594
      %596 = vdwg.mxu0
      %597 = vmatpush.msra.mxu0 0.0
      %598 = vmatpush.msra.mxu0 0.0
      %599 = vmatpush.msra.mxu0 0.0
      %600 = vmatpush.msra.mxu0 0.0
      %601 = vmatpush.msra.mxu0 0.0
      %602 = vmatpush.msra.mxu0 0.0
      %603 = vmatpush.msra.mxu0 0.0
      %604 = vmatpush.msra.mxu0 0.0
      %605 = vmatpush.msra.mxu0 0.0
      %606 = vmatpush.msra.mxu0 0.0
      %607 = vmatpush.msra.mxu0 0.0
      %608 = vmatpush.msra.mxu0 0.0
      %609 = vmatpush.msra.mxu0 %v488
      %610 = vmatpush.msra.mxu0 %v487
      %611 = vmatpush.msra.mxu0 %v486
      %612 = vmatpush.msra.mxu0 %v485
      %613 = vmatmul.f32.gmra.mxu0 %v555
      %v614 = vpop.f32.mrf.mxu0
      %v615 = vadd.f32 %v548, %v614
      %616 = vdwg.mxu0
      %617 = vmatpush.msra.mxu0 0.0
      %618 = vmatpush.msra.mxu0 0.0
      %619 = vmatpush.msra.mxu0 0.0
      %620 = vmatpush.msra.mxu0 0.0
      %621 = vmatpush.msra.mxu0 0.0
      %622 = vmatpush.msra.mxu0 0.0
      %623 = vmatpush.msra.mxu0 0.0
      %624 = vmatpush.msra.mxu0 0.0
      %625 = vmatpush.msra.mxu0 0.0
      %626 = vmatpush.msra.mxu0 0.0
      %627 = vmatpush.msra.mxu0 0.0
      %628 = vmatpush.msra.mxu0 0.0
      %629 = vmatpush.msra.mxu0 %v492
      %630 = vmatpush.msra.mxu0 %v491
      %631 = vmatpush.msra.mxu0 %v490
      %632 = vmatpush.msra.mxu0 %v489
      %633 = vmatmul.f32.gmra.mxu0 %v555
      %v634 = vpop.f32.mrf.mxu0
      %v635 = vadd.f32 %v549, %v634
      %636 = vdwg.mxu0
      %v641 = vperm.slane %v529, 0
      %v642 = vperm.slane %v530, 0
      %v643 = vperm.slane %v531, 0
      %v644 = vperm.slane %v532, 0
      %649 = vmatpush.msra.mxu0 0.0
      %650 = vmatpush.msra.mxu0 0.0
      %651 = vmatpush.msra.mxu0 0.0
      %652 = vmatpush.msra.mxu0 0.0
      %653 = vmatpush.msra.mxu0 0.0
      %654 = vmatpush.msra.mxu0 0.0
      %655 = vmatpush.msra.mxu0 0.0
      %656 = vmatpush.msra.mxu0 0.0
      %657 = vmatpush.msra.mxu0 0.0
      %658 = vmatpush.msra.mxu0 0.0
      %659 = vmatpush.msra.mxu0 0.0
      %660 = vmatpush.msra.mxu0 0.0
      %661 = vmatpush.msra.mxu0 %v496
      %662 = vmatpush.msra.mxu0 %v495
      %663 = vmatpush.msra.mxu0 %v494
      %664 = vmatpush.msra.mxu0 %v493
      %665 = vmatmul.f32.gmra.mxu0 %v555
      %v666 = vpop.f32.mrf.mxu0
      %v667 = vadd.f32 %v641, %v666
      %668 = vdwg.mxu0
      %669 = vmatpush.msra.mxu0 0.0
      %670 = vmatpush.msra.mxu0 0.0
      %671 = vmatpush.msra.mxu0 0.0
      %672 = vmatpush.msra.mxu0 0.0
      %673 = vmatpush.msra.mxu0 0.0
      %674 = vmatpush.msra.mxu0 0.0
      %675 = vmatpush.msra.mxu0 0.0
      %676 = vmatpush.msra.mxu0 0.0
      %677 = vmatpush.msra.mxu0 0.0
      %678 = vmatpush.msra.mxu0 0.0
      %679 = vmatpush.msra.mxu0 0.0
      %680 = vmatpush.msra.mxu0 0.0
      %681 = vmatpush.msra.mxu0 %v500
      %682 = vmatpush.msra.mxu0 %v499
      %683 = vmatpush.msra.mxu0 %v498
      %684 = vmatpush.msra.mxu0 %v497
      %685 = vmatmul.f32.gmra.mxu0 %v555
      %v686 = vpop.f32.mrf.mxu0
      %v687 = vadd.f32 %v642, %v686
      %688 = vdwg.mxu0
      %689 = vmatpush.msra.mxu0 0.0
      %690 = vmatpush.msra.mxu0 0.0
      %691 = vmatpush.msra.mxu0 0.0
      %692 = vmatpush.msra.mxu0 0.0
      %693 = vmatpush.msra.mxu0 0.0
      %694 = vmatpush.msra.mxu0 0.0
      %695 = vmatpush.msra.mxu0 0.0
      %696 = vmatpush.msra.mxu0 0.0
      %697 = vmatpush.msra.mxu0 0.0
      %698 = vmatpush.msra.mxu0 0.0
      %699 = vmatpush.msra.mxu0 0.0
      %700 = vmatpush.msra.mxu0 0.0
      %701 = vmatpush.msra.mxu0 %v504
      %702 = vmatpush.msra.mxu0 %v503
      %703 = vmatpush.msra.mxu0 %v502
      %704 = vmatpush.msra.mxu0 %v501
      %705 = vmatmul.f32.gmra.mxu0 %v555
      %v706 = vpop.f32.mrf.mxu0
      %v707 = vadd.f32 %v643, %v706
      %708 = vdwg.mxu0
      %709 = vmatpush.msra.mxu0 0.0
      %710 = vmatpush.msra.mxu0 0.0
      %711 = vmatpush.msra.mxu0 0.0
      %712 = vmatpush.msra.mxu0 0.0
      %713 = vmatpush.msra.mxu0 0.0
      %714 = vmatpush.msra.mxu0 0.0
      %715 = vmatpush.msra.mxu0 0.0
      %716 = vmatpush.msra.mxu0 0.0
      %717 = vmatpush.msra.mxu0 0.0
      %718 = vmatpush.msra.mxu0 0.0
      %719 = vmatpush.msra.mxu0 0.0
      %720 = vmatpush.msra.mxu0 0.0
      %721 = vmatpush.msra.mxu0 %v508
      %722 = vmatpush.msra.mxu0 %v507
      %723 = vmatpush.msra.mxu0 %v506
      %724 = vmatpush.msra.mxu0 %v505
      %725 = vmatmul.f32.gmra.mxu0 %v555
      %v726 = vpop.f32.mrf.mxu0
      %v727 = vadd.f32 %v644, %v726
      %728 = vdwg.mxu0
      %v733 = vperm.slane %v533, 0
      %v734 = vperm.slane %v534, 0
      %v735 = vperm.slane %v535, 0
      %v736 = vperm.slane %v536, 0
      %741 = vmatpush.msra.mxu0 0.0
      %742 = vmatpush.msra.mxu0 0.0
      %743 = vmatpush.msra.mxu0 0.0
      %744 = vmatpush.msra.mxu0 0.0
      %745 = vmatpush.msra.mxu0 0.0
      %746 = vmatpush.msra.mxu0 0.0
      %747 = vmatpush.msra.mxu0 0.0
      %748 = vmatpush.msra.mxu0 0.0
      %749 = vmatpush.msra.mxu0 0.0
      %750 = vmatpush.msra.mxu0 0.0
      %751 = vmatpush.msra.mxu0 0.0
      %752 = vmatpush.msra.mxu0 0.0
      %753 = vmatpush.msra.mxu0 %v512
      %754 = vmatpush.msra.mxu0 %v511
      %755 = vmatpush.msra.mxu0 %v510
      %756 = vmatpush.msra.mxu0 %v509
      %757 = vmatmul.f32.gmra.mxu0 %v555
      %v758 = vpop.f32.mrf.mxu0
      %v759 = vadd.f32 %v733, %v758
      %760 = vdwg.mxu0
      %761 = vmatpush.msra.mxu0 0.0
      %762 = vmatpush.msra.mxu0 0.0
      %763 = vmatpush.msra.mxu0 0.0
      %764 = vmatpush.msra.mxu0 0.0
      %765 = vmatpush.msra.mxu0 0.0
      %766 = vmatpush.msra.mxu0 0.0
      %767 = vmatpush.msra.mxu0 0.0
      %768 = vmatpush.msra.mxu0 0.0
      %769 = vmatpush.msra.mxu0 0.0
      %770 = vmatpush.msra.mxu0 0.0
      %771 = vmatpush.msra.mxu0 0.0
      %772 = vmatpush.msra.mxu0 0.0
      %773 = vmatpush.msra.mxu0 %v516
      %774 = vmatpush.msra.mxu0 %v515
      %775 = vmatpush.msra.mxu0 %v514
      %776 = vmatpush.msra.mxu0 %v513
      %777 = vmatmul.f32.gmra.mxu0 %v555
      %v778 = vpop.f32.mrf.mxu0
      %v779 = vadd.f32 %v734, %v778
      %780 = vdwg.mxu0
      %781 = vmatpush.msra.mxu0 0.0
      %782 = vmatpush.msra.mxu0 0.0
      %783 = vmatpush.msra.mxu0 0.0
      %784 = vmatpush.msra.mxu0 0.0
      %785 = vmatpush.msra.mxu0 0.0
      %786 = vmatpush.msra.mxu0 0.0
      %787 = vmatpush.msra.mxu0 0.0
      %788 = vmatpush.msra.mxu0 0.0
      %789 = vmatpush.msra.mxu0 0.0
      %790 = vmatpush.msra.mxu0 0.0
      %791 = vmatpush.msra.mxu0 0.0
      %792 = vmatpush.msra.mxu0 0.0
      %793 = vmatpush.msra.mxu0 %v520
      %794 = vmatpush.msra.mxu0 %v519
      %795 = vmatpush.msra.mxu0 %v518
      %796 = vmatpush.msra.mxu0 %v517
      %797 = vmatmul.f32.gmra.mxu0 %v555
      %v798 = vpop.f32.mrf.mxu0
      %v799 = vadd.f32 %v735, %v798
      %800 = vdwg.mxu0
      %801 = vmatpush.msra.mxu0 0.0
      %802 = vmatpush.msra.mxu0 0.0
      %803 = vmatpush.msra.mxu0 0.0
      %804 = vmatpush.msra.mxu0 0.0
      %805 = vmatpush.msra.mxu0 0.0
      %806 = vmatpush.msra.mxu0 0.0
      %807 = vmatpush.msra.mxu0 0.0
      %808 = vmatpush.msra.mxu0 0.0
      %809 = vmatpush.msra.mxu0 0.0
      %810 = vmatpush.msra.mxu0 0.0
      %811 = vmatpush.msra.mxu0 0.0
      %812 = vmatpush.msra.mxu0 0.0
      %813 = vmatpush.msra.mxu0 %v524
      %814 = vmatpush.msra.mxu0 %v523
      %815 = vmatpush.msra.mxu0 %v522
      %816 = vmatpush.msra.mxu0 %v521
      %817 = vmatmul.f32.gmra.mxu0 %v555
      %v818 = vpop.f32.mrf.mxu0
      %v819 = vadd.f32 %v736, %v818
      %820 = vdwg.mxu0
      %vm821 = vcmask 64512
      %v823 = vsel %vm821, %v575, 0
      %v826 = vsel %vm821, %v667, 0
      %828 = vmatpush.xpose.msra.mxu0 0.0
      %829 = vmatpush.xpose.msra.mxu0 0.0
      %830 = vmatpush.xpose.msra.mxu0 0.0
      %831 = vmatpush.xpose.msra.mxu0 0.0
      %832 = vmatpush.xpose.msra.mxu0 0.0
      %833 = vmatpush.xpose.msra.mxu0 0.0
      %834 = vmatpush.xpose.msra.mxu0 0.0
      %835 = vmatpush.xpose.msra.mxu0 0.0
      %836 = vmatpush.xpose.msra.mxu0 0.0
      %837 = vmatpush.xpose.msra.mxu0 0.0
      %838 = vmatpush.xpose.msra.mxu0 0.0
      %839 = vmatpush.xpose.msra.mxu0 0.0
      %840 = vmatpush.xpose.msra.mxu0 0.0
      %841 = vmatpush.xpose.msra.mxu0 0.0
      %842 = vmatpush.xpose.msra.mxu0 0.0
      %843 = vmatpush.xpose.msra.mxu0 %v826
      %844 = vmatmul.f32.gmra.mxu0 %v823
      %v845 = vpop.f32.mrf.mxu0
      %v846 = vadd.f32 0.0, %v845
      %847 = vdwg.mxu0
      %v849 = vsel %vm821, %v595, 0
      %v852 = vsel %vm821, %v687, 0
      %854 = vmatpush.xpose.msra.mxu0 0.0
      %855 = vmatpush.xpose.msra.mxu0 0.0
      %856 = vmatpush.xpose.msra.mxu0 0.0
      %857 = vmatpush.xpose.msra.mxu0 0.0
      %858 = vmatpush.xpose.msra.mxu0 0.0
      %859 = vmatpush.xpose.msra.mxu0 0.0
      %860 = vmatpush.xpose.msra.mxu0 0.0
      %861 = vmatpush.xpose.msra.mxu0 0.0
      %862 = vmatpush.xpose.msra.mxu0 0.0
      %863 = vmatpush.xpose.msra.mxu0 0.0
      %864 = vmatpush.xpose.msra.mxu0 0.0
      %865 = vmatpush.xpose.msra.mxu0 0.0
      %866 = vmatpush.xpose.msra.mxu0 0.0
      %867 = vmatpush.xpose.msra.mxu0 0.0
      %868 = vmatpush.xpose.msra.mxu0 0.0
      %869 = vmatpush.xpose.msra.mxu0 %v852
      %870 = vmatmul.f32.gmra.mxu0 %v849
      %v871 = vpop.f32.mrf.mxu0
      %v872 = vadd.f32 0.0, %v871
      %873 = vdwg.mxu0
      %v875 = vsel %vm821, %v615, 0
      %v878 = vsel %vm821, %v707, 0
      %880 = vmatpush.xpose.msra.mxu0 0.0
      %881 = vmatpush.xpose.msra.mxu0 0.0
      %882 = vmatpush.xpose.msra.mxu0 0.0
      %883 = vmatpush.xpose.msra.mxu0 0.0
      %884 = vmatpush.xpose.msra.mxu0 0.0
      %885 = vmatpush.xpose.msra.mxu0 0.0
      %886 = vmatpush.xpose.msra.mxu0 0.0
      %887 = vmatpush.xpose.msra.mxu0 0.0
      %888 = vmatpush.xpose.msra.mxu0 0.0
      %889 = vmatpush.xpose.msra.mxu0 0.0
      %890 = vmatpush.xpose.msra.mxu0 0.0
      %891 = vmatpush.xpose.msra.mxu0 0.0
      %892 = vmatpush.xpose.msra.mxu0 0.0
      %893 = vmatpush.xpose.msra.mxu0 0.0
      %894 = vmatpush.xpose.msra.mxu0 0.0
      %895 = vmatpush.xpose.msra.mxu0 %v878
      %896 = vmatmul.f32.gmra.mxu0 %v875
      %v897 = vpop.f32.mrf.mxu0
      %v898 = vadd.f32 0.0, %v897
      %899 = vdwg.mxu0
      %v901 = vsel %vm821, %v635, 0
      %v904 = vsel %vm821, %v727, 0
      %906 = vmatpush.xpose.msra.mxu0 0.0
      %907 = vmatpush.xpose.msra.mxu0 0.0
      %908 = vmatpush.xpose.msra.mxu0 0.0
      %909 = vmatpush.xpose.msra.mxu0 0.0
      %910 = vmatpush.xpose.msra.mxu0 0.0
      %911 = vmatpush.xpose.msra.mxu0 0.0
      %912 = vmatpush.xpose.msra.mxu0 0.0
      %913 = vmatpush.xpose.msra.mxu0 0.0
      %914 = vmatpush.xpose.msra.mxu0 0.0
      %915 = vmatpush.xpose.msra.mxu0 0.0
      %916 = vmatpush.xpose.msra.mxu0 0.0
      %917 = vmatpush.xpose.msra.mxu0 0.0
      %918 = vmatpush.xpose.msra.mxu0 0.0
      %919 = vmatpush.xpose.msra.mxu0 0.0
      %920 = vmatpush.xpose.msra.mxu0 0.0
      %921 = vmatpush.xpose.msra.mxu0 %v904
      %922 = vmatmul.f32.gmra.mxu0 %v901
      %v923 = vpop.f32.mrf.mxu0
      %v924 = vadd.f32 0.0, %v923
      %925 = vdwg.mxu0
      %v926 = vmul.f32 %v846, 0.35355338
      %v927 = vmul.f32 %v872, 0.35355338
      %v928 = vmul.f32 %v898, 0.35355338
      %v929 = vmul.f32 %v924, 0.35355338
      %v930 = vsel %vm821, %v926, -inf
      %931 = vmax.xlane.f32.xlu0 %v930
      %v932 = vpop.xlane.xlu0 %931
      %v933 = vsel %vm821, %v927, -inf
      %934 = vmax.xlane.f32.xlu0 %v933
      %v935 = vpop.xlane.xlu0 %934
      %v936 = vsel %vm821, %v928, -inf
      %937 = vmax.xlane.f32.xlu0 %v936
      %v938 = vpop.xlane.xlu0 %937
      %v939 = vsel %vm821, %v929, -inf
      %940 = vmax.xlane.f32.xlu0 %v939
      %v941 = vpop.xlane.xlu0 %940
      %v942 = vsub.f32 %v926, %v932
      %v943 = vsub.f32 %v927, %v935
      %v944 = vsub.f32 %v928, %v938
      %v945 = vsub.f32 %v929, %v941
      %v946 = vmul.f32 %v942, 1.442695
      %v947 = vpow.pop %v946
      %v948 = vmul.f32 %v943, 1.442695
      %v949 = vpow.pop %v948
      %v950 = vmul.f32 %v944, 1.442695
      %v951 = vpow.pop %v950
      %v952 = vmul.f32 %v945, 1.442695
      %v953 = vpow.pop %v952
      %v954 = vsel %vm821, %v947, 0.0
      %955 = vadd.xlane.f32.xlu0 %v954
      %v956 = vpop.xlane.xlu0 %955
      %v957 = vsel %vm821, %v949, 0.0
      %958 = vadd.xlane.f32.xlu0 %v957
      %v959 = vpop.xlane.xlu0 %958
      %v960 = vsel %vm821, %v951, 0.0
      %961 = vadd.xlane.f32.xlu0 %v960
      %v962 = vpop.xlane.xlu0 %961
      %v963 = vsel %vm821, %v953, 0.0
      %964 = vadd.xlane.f32.xlu0 %v963
      %v965 = vpop.xlane.xlu0 %964
      %v966 = vrcp.pop %v956
      %v967 = vmul.f32 %v956, %v966
      %v968 = vsub.f32 1.0, %v967
      %v969 = vmul.f32 %v966, %v968
      %v970 = vadd.f32 %v966, %v969
      %vm971 = vweird.f32 %v956
      %vm972 = vweird.f32 %v966
      %vm973 = vmor %vm971, %vm972
      %v974 = vsel %vm973, %v966, %v970
      %v975 = vand.u32 2147483647, %v956
      %vm976 = vcmp.eq.f32.partialorder %v975, 8.507059e+37
      %v977 = vand.u32 %v956, 2147483648
      %v978 = vor.u32 1.1754944e-38, %v977
      %v979 = vsel %vm976, %v978, %v974
      %v980 = vmul.f32 %v947, %v979
      %v981 = vrcp.pop %v959
      %v982 = vmul.f32 %v959, %v981
      %v983 = vsub.f32 1.0, %v982
      %v984 = vmul.f32 %v981, %v983
      %v985 = vadd.f32 %v981, %v984
      %vm986 = vweird.f32 %v959
      %vm987 = vweird.f32 %v981
      %vm988 = vmor %vm986, %vm987
      %v989 = vsel %vm988, %v981, %v985
      %v990 = vand.u32 2147483647, %v959
      %vm991 = vcmp.eq.f32.partialorder %v990, 8.507059e+37
      %v992 = vand.u32 %v959, 2147483648
      %v993 = vor.u32 1.1754944e-38, %v992
      %v994 = vsel %vm991, %v993, %v989
      %v995 = vmul.f32 %v949, %v994
      %v996 = vrcp.pop %v962
      %v997 = vmul.f32 %v962, %v996
      %v998 = vsub.f32 1.0, %v997
      %v999 = vmul.f32 %v996, %v998
      %v1000 = vadd.f32 %v996, %v999
      %vm1001 = vweird.f32 %v962
      %vm1002 = vweird.f32 %v996
      %vm1003 = vmor %vm1001, %vm1002
      %v1004 = vsel %vm1003, %v996, %v1000
      %v1005 = vand.u32 2147483647, %v962
      %vm1006 = vcmp.eq.f32.partialorder %v1005, 8.507059e+37
      %v1007 = vand.u32 %v962, 2147483648
      %v1008 = vor.u32 1.1754944e-38, %v1007
      %v1009 = vsel %vm1006, %v1008, %v1004
      %v1010 = vmul.f32 %v951, %v1009
      %v1011 = vrcp.pop %v965
      %v1012 = vmul.f32 %v965, %v1011
      %v1013 = vsub.f32 1.0, %v1012
      %v1014 = vmul.f32 %v1011, %v1013
      %v1015 = vadd.f32 %v1011, %v1014
      %vm1016 = vweird.f32 %v965
      %vm1017 = vweird.f32 %v1011
      %vm1018 = vmor %vm1016, %vm1017
      %v1019 = vsel %vm1018, %v1011, %v1015
      %v1020 = vand.u32 2147483647, %v965
      %vm1021 = vcmp.eq.f32.partialorder %v1020, 8.507059e+37
      %v1022 = vand.u32 %v965, 2147483648
      %v1023 = vor.u32 1.1754944e-38, %v1022
      %v1024 = vsel %vm1021, %v1023, %v1019
      %v1025 = vmul.f32 %v953, %v1024
      %v1027 = vsel %vm821, %v980, 0
      %1029 = vmatpush.msra.mxu0 0.0
      %1030 = vmatpush.msra.mxu0 0.0
      %1031 = vmatpush.msra.mxu0 0.0
      %1032 = vmatpush.msra.mxu0 0.0
      %1033 = vmatpush.msra.mxu0 0.0
      %1034 = vmatpush.msra.mxu0 0.0
      %1035 = vmatpush.msra.mxu0 0.0
      %1036 = vmatpush.msra.mxu0 0.0
      %1037 = vmatpush.msra.mxu0 0.0
      %1038 = vmatpush.msra.mxu0 0.0
      %1039 = vmatpush.msra.mxu0 0.0
      %1040 = vmatpush.msra.mxu0 0.0
      %1041 = vmatpush.msra.mxu0 0.0
      %1042 = vmatpush.msra.mxu0 0.0
      %1043 = vmatpush.msra.mxu0 0.0
      %1044 = vmatpush.msra.mxu0 %v759
      %1045 = vmatmul.f32.gmra.mxu0 %v1027
      %v1046 = vpop.f32.mrf.mxu0
      %v1047 = vadd.f32 0.0, %v1046
      %1048 = vdwg.mxu0
      %v1050 = vsel %vm821, %v995, 0
      %1052 = vmatpush.msra.mxu0 0.0
      %1053 = vmatpush.msra.mxu0 0.0
      %1054 = vmatpush.msra.mxu0 0.0
      %1055 = vmatpush.msra.mxu0 0.0
      %1056 = vmatpush.msra.mxu0 0.0
      %1057 = vmatpush.msra.mxu0 0.0
      %1058 = vmatpush.msra.mxu0 0.0
      %1059 = vmatpush.msra.mxu0 0.0
      %1060 = vmatpush.msra.mxu0 0.0
      %1061 = vmatpush.msra.mxu0 0.0
      %1062 = vmatpush.msra.mxu0 0.0
      %1063 = vmatpush.msra.mxu0 0.0
      %1064 = vmatpush.msra.mxu0 0.0
      %1065 = vmatpush.msra.mxu0 0.0
      %1066 = vmatpush.msra.mxu0 0.0
      %1067 = vmatpush.msra.mxu0 %v779
      %1068 = vmatmul.f32.gmra.mxu0 %v1050
      %v1069 = vpop.f32.mrf.mxu0
      %v1070 = vadd.f32 0.0, %v1069
      %1071 = vdwg.mxu0
      %v1073 = vsel %vm821, %v1010, 0
      %1075 = vmatpush.msra.mxu0 0.0
      %1076 = vmatpush.msra.mxu0 0.0
      %1077 = vmatpush.msra.mxu0 0.0
      %1078 = vmatpush.msra.mxu0 0.0
      %1079 = vmatpush.msra.mxu0 0.0
      %1080 = vmatpush.msra.mxu0 0.0
      %1081 = vmatpush.msra.mxu0 0.0
      %1082 = vmatpush.msra.mxu0 0.0
      %1083 = vmatpush.msra.mxu0 0.0
      %1084 = vmatpush.msra.mxu0 0.0
      %1085 = vmatpush.msra.mxu0 0.0
      %1086 = vmatpush.msra.mxu0 0.0
      %1087 = vmatpush.msra.mxu0 0.0
      %1088 = vmatpush.msra.mxu0 0.0
      %1089 = vmatpush.msra.mxu0 0.0
      %1090 = vmatpush.msra.mxu0 %v799
      %1091 = vmatmul.f32.gmra.mxu0 %v1073
      %v1092 = vpop.f32.mrf.mxu0
      %v1093 = vadd.f32 0.0, %v1092
      %1094 = vdwg.mxu0
      %v1096 = vsel %vm821, %v1025, 0
      %1098 = vmatpush.msra.mxu0 0.0
      %1099 = vmatpush.msra.mxu0 0.0
      %1100 = vmatpush.msra.mxu0 0.0
      %1101 = vmatpush.msra.mxu0 0.0
      %1102 = vmatpush.msra.mxu0 0.0
      %1103 = vmatpush.msra.mxu0 0.0
      %1104 = vmatpush.msra.mxu0 0.0
      %1105 = vmatpush.msra.mxu0 0.0
      %1106 = vmatpush.msra.mxu0 0.0
      %1107 = vmatpush.msra.mxu0 0.0
      %1108 = vmatpush.msra.mxu0 0.0
      %1109 = vmatpush.msra.mxu0 0.0
      %1110 = vmatpush.msra.mxu0 0.0
      %1111 = vmatpush.msra.mxu0 0.0
      %1112 = vmatpush.msra.mxu0 0.0
      %1113 = vmatpush.msra.mxu0 %v819
      %1114 = vmatmul.f32.gmra.mxu0 %v1096
      %v1115 = vpop.f32.mrf.mxu0
      %v1116 = vadd.f32 0.0, %v1115
      %1117 = vdwg.mxu0
      %v1119 = vsel %vm821, %v1047, 0
      %1121 = vmatpush.msra.mxu0 0.0
      %1122 = vmatpush.msra.mxu0 0.0
      %1123 = vmatpush.msra.mxu0 0.0
      %1124 = vmatpush.msra.mxu0 0.0
      %1125 = vmatpush.msra.mxu0 0.0
      %1126 = vmatpush.msra.mxu0 0.0
      %1127 = vmatpush.msra.mxu0 0.0
      %1128 = vmatpush.msra.mxu0 0.0
      %1129 = vmatpush.msra.mxu0 0.0
      %1130 = vmatpush.msra.mxu0 0.0
      %1131 = vmatpush.msra.mxu0 0.0
      %1132 = vmatpush.msra.mxu0 0.0
      %1133 = vmatpush.msra.mxu0 0.0
      %1134 = vmatpush.msra.mxu0 0.0
      %1135 = vmatpush.msra.mxu0 0.0
      %1136 = vmatpush.msra.mxu0 %v537
      %1137 = vmatmul.f32.gmra.mxu0 %v1119
      %v1138 = vpop.f32.mrf.mxu0
      %v1139 = vadd.f32 0.0, %v1138
      %1140 = vdwg.mxu0
      %v1142 = vsel %vm821, %v1070, 0
      %1144 = vmatpush.msra.mxu0 0.0
      %1145 = vmatpush.msra.mxu0 0.0
      %1146 = vmatpush.msra.mxu0 0.0
      %1147 = vmatpush.msra.mxu0 0.0
      %1148 = vmatpush.msra.mxu0 0.0
      %1149 = vmatpush.msra.mxu0 0.0
      %1150 = vmatpush.msra.mxu0 0.0
      %1151 = vmatpush.msra.mxu0 0.0
      %1152 = vmatpush.msra.mxu0 0.0
      %1153 = vmatpush.msra.mxu0 0.0
      %1154 = vmatpush.msra.mxu0 0.0
      %1155 = vmatpush.msra.mxu0 0.0
      %1156 = vmatpush.msra.mxu0 0.0
      %1157 = vmatpush.msra.mxu0 0.0
      %1158 = vmatpush.msra.mxu0 0.0
      %1159 = vmatpush.msra.mxu0 %v538
      %1160 = vmatmul.f32.gmra.mxu0 %v1142
      %v1161 = vpop.f32.mrf.mxu0
      %v1162 = vadd.f32 0.0, %v1161
      %1163 = vdwg.mxu0
      %v1165 = vsel %vm821, %v1093, 0
      %1167 = vmatpush.msra.mxu0 0.0
      %1168 = vmatpush.msra.mxu0 0.0
      %1169 = vmatpush.msra.mxu0 0.0
      %1170 = vmatpush.msra.mxu0 0.0
      %1171 = vmatpush.msra.mxu0 0.0
      %1172 = vmatpush.msra.mxu0 0.0
      %1173 = vmatpush.msra.mxu0 0.0
      %1174 = vmatpush.msra.mxu0 0.0
      %1175 = vmatpush.msra.mxu0 0.0
      %1176 = vmatpush.msra.mxu0 0.0
      %1177 = vmatpush.msra.mxu0 0.0
      %1178 = vmatpush.msra.mxu0 0.0
      %1179 = vmatpush.msra.mxu0 0.0
      %1180 = vmatpush.msra.mxu0 0.0
      %1181 = vmatpush.msra.mxu0 0.0
      %1182 = vmatpush.msra.mxu0 %v539
      %1183 = vmatmul.f32.gmra.mxu0 %v1165
      %v1184 = vpop.f32.mrf.mxu0
      %v1185 = vadd.f32 0.0, %v1184
      %1186 = vdwg.mxu0
      %v1188 = vsel %vm821, %v1116, 0
      %1190 = vmatpush.msra.mxu0 0.0
      %1191 = vmatpush.msra.mxu0 0.0
      %1192 = vmatpush.msra.mxu0 0.0
      %1193 = vmatpush.msra.mxu0 0.0
      %1194 = vmatpush.msra.mxu0 0.0
      %1195 = vmatpush.msra.mxu0 0.0
      %1196 = vmatpush.msra.mxu0 0.0
      %1197 = vmatpush.msra.mxu0 0.0
      %1198 = vmatpush.msra.mxu0 0.0
      %1199 = vmatpush.msra.mxu0 0.0
      %1200 = vmatpush.msra.mxu0 0.0
      %1201 = vmatpush.msra.mxu0 0.0
      %1202 = vmatpush.msra.mxu0 0.0
      %1203 = vmatpush.msra.mxu0 0.0
      %1204 = vmatpush.msra.mxu0 0.0
      %1205 = vmatpush.msra.mxu0 %v540
      %1206 = vmatmul.f32.gmra.mxu0 %v1188
      %v1207 = vpop.f32.mrf.mxu0
      %v1208 = vadd.f32 0.0, %v1207
      %1209 = vdwg.mxu0
      %v1210 = vadd.f32 %v1139, %v1162
      %v1211 = vadd.f32 %v1210, %v1185
      %v1212 = vadd.f32 %v1211, %v1208
      %v1214 = vperm.slane %v541, 0
      %v1216 = vadd.f32 %v1212, %v1214
      %v1217 = vadd.f32 %v436, %v1216
      %v1218 = vld [vmem:[%s7] sm:$0x1]
      %v1219 = vld [vmem:[%s8] sm:$0x1]
      %v1220 = vsel %vm439, %v1217, 0.0
      %1221 = vadd.xlane.f32.xlu0 %v1220
      %v1222 = vpop.xlane.xlu0 %1221
      %v1223 = vmul.f32 %v1222, %v449
      %v1224 = vsub.f32 %v1217, %v1223
      %v1225 = vmul.f32 %v1224, %v1224
      %v1226 = vsel %vm439, %v1225, 0.0
      %1227 = vadd.xlane.f32.xlu0 %v1226
      %v1228 = vpop.xlane.xlu0 %1227
      %v1229 = vmul.f32 %v1228, %v449
      %v1230 = vadd.f32 %v1229, 1e-05
      %v1231 = vrsqrt.pop %v1230
      %v1232 = vmul.f32 %v1231, %v1230
      %v1233 = vmul.f32 %v1232, %v1231
      %v1234 = vmul.f32 0.5, %v1233
      %v1235 = vsub.f32 1.5, %v1234
      %v1236 = vmul.f32 %v1231, %v1235
      %vm1237 = vweird.f32 %v1230
      %vm1238 = vweird.f32 %v1231
      %vm1239 = vmor %vm1237, %vm1238
      %v1240 = vsel %vm1239, %v1231, %v1236
      %v1241 = vmul.f32 %v1224, %v1240
      %v1243 = vperm.slane %v1218, 0
      %v1245 = vmul.f32 %v1241, %v1243
      %v1247 = vperm.slane %v1219, 0
      %v1249 = vadd.f32 %v1245, %v1247
      %v1250 = vld [vmem:[%s9] sm:$0xff]
      %v1251 = vld [vmem:[%s9 + $0x8] sm:$0xff]
      %v1252 = vld [vmem:[%s9 + $0x10] sm:$0xff]
      %v1253 = vld [vmem:[%s9 + $0x18] sm:$0xff]
      %v1254 = vld [vmem:[%s10] sm:$0x1]
      %v1256 = vperm.slane %v1254, 0
      %v1259 = vsel %vm439, %v1249, 0
      %1261 = vmatpush.msra.mxu0 0.0
      %1262 = vmatpush.msra.mxu0 0.0
      %1263 = vmatpush.msra.mxu0 0.0
      %1264 = vmatpush.msra.mxu0 0.0
      %1265 = vmatpush.msra.mxu0 0.0
      %1266 = vmatpush.msra.mxu0 0.0
      %1267 = vmatpush.msra.mxu0 0.0
      %1268 = vmatpush.msra.mxu0 0.0
      %1269 = vmatpush.msra.mxu0 0.0
      %1270 = vmatpush.msra.mxu0 0.0
      %1271 = vmatpush.msra.mxu0 0.0
      %1272 = vmatpush.msra.mxu0 0.0
      %1273 = vmatpush.msra.mxu0 %v1253
      %1274 = vmatpush.msra.mxu0 %v1252
      %1275 = vmatpush.msra.mxu0 %v1251
      %1276 = vmatpush.msra.mxu0 %v1250
      %1277 = vmatmul.f32.gmra.mxu0 %v1259
      %v1278 = vpop.f32.mrf.mxu0
      %v1279 = vadd.f32 %v1256, %v1278
      %1280 = vdwg.mxu0
      %v1281 = vmul.f32 %v1279, 0.5
      %v1282 = vmul.f32 %v1279, 0.70710677
      %vm1283 = vcmp.ge.f32.partialorder %v1282, 0.0
      %v1284 = vsel %vm1283, 1.0, -1.0
      %v1285 = vand.u32 2147483647, %v1282
      %v1286 = vmul.f32 %v1285, 0.3275911
      %v1287 = vadd.f32 %v1286, 1.0
      %v1288 = vrcp.pop %v1287
      %v1289 = vmul.f32 %v1287, %v1288
      %v1290 = vsub.f32 1.0, %v1289
      %v1291 = vmul.f32 %v1288, %v1290
      %v1292 = vadd.f32 %v1288, %v1291
      %vm1293 = vweird.f32 %v1287
      %vm1294 = vweird.f32 %v1288
      %vm1295 = vmor %vm1293, %vm1294
      %v1296 = vsel %vm1295, %v1288, %v1292
      %v1297 = vand.u32 2147483647, %v1287
      %vm1298 = vcmp.eq.f32.partialorder %v1297, 8.507059e+37
      %v1299 = vand.u32 %v1287, 2147483648
      %v1300 = vor.u32 1.1754944e-38, %v1299
      %v1301 = vsel %vm1298, %v1300, %v1296
      %v1302 = vmul.f32 1.0, %v1301
      %v1303 = vmul.f32 %v1302, 1.0614054
      %v1304 = vadd.f32 %v1303, -1.4531521
      %v1305 = vmul.f32 %v1304, %v1302
      %v1306 = vadd.f32 %v1305, 1.4214138
      %v1307 = vmul.f32 %v1306, %v1302
      %v1308 = vadd.f32 %v1307, -0.28449672
      %v1309 = vmul.f32 %v1308, %v1302
      %v1310 = vadd.f32 %v1309, 0.2548296
      %v1311 = vmul.f32 %v1310, %v1302
      %v1312 = vsub.f32 0.0, %v1285
      %v1313 = vmul.f32 %v1312, %v1285
      %v1314 = vmul.f32 %v1313, 1.442695
      %v1315 = vpow.pop %v1314
      %v1316 = vmul.f32 %v1311, %v1315
      %v1317 = vsub.f32 1.0, %v1316
      %v1318 = vmul.f32 %v1284, %v1317
      %v1319 = vadd.f32 %v1318, 1.0
      %v1320 = vmul.f32 %v1281, %v1319
      %v1321 = vld [vmem:[%s11] sm:$0xff]
      %v1322 = vld [vmem:[%s11 + $0x8] sm:$0xff]
      %v1323 = vld [vmem:[%s11 + $0x10] sm:$0xff]
      %v1324 = vld [vmem:[%s11 + $0x18] sm:$0xff]
      %v1325 = vld [vmem:[%s11 + $0x20] sm:$0xff]
      %v1326 = vld [vmem:[%s11 + $0x28] sm:$0xff]
      %v1327 = vld [vmem:[%s11 + $0x30] sm:$0xff]
      %v1328 = vld [vmem:[%s11 + $0x38] sm:$0xff]
      %v1329 = vld [vmem:[%s12] sm:$0x1]
      %v1331 = vperm.slane %v1329, 0
      %vm1333 = vcmask 523264
      %v1335 = vsel %vm1333, %v1320, 0
      %1337 = vmatpush.msra.mxu0 0.0
      %1338 = vmatpush.msra.mxu0 0.0
      %1339 = vmatpush.msra.mxu0 0.0
      %1340 = vmatpush.msra.mxu0 0.0
      %1341 = vmatpush.msra.mxu0 0.0
      %1342 = vmatpush.msra.mxu0 0.0
      %1343 = vmatpush.msra.mxu0 0.0
      %1344 = vmatpush.msra.mxu0 0.0
      %1345 = vmatpush.msra.mxu0 %v1328
      %1346 = vmatpush.msra.mxu0 %v1327
      %1347 = vmatpush.msra.mxu0 %v1326
      %1348 = vmatpush.msra.mxu0 %v1325
      %1349 = vmatpush.msra.mxu0 %v1324
      %1350 = vmatpush.msra.mxu0 %v1323
      %1351 = vmatpush.msra.mxu0 %v1322
      %1352 = vmatpush.msra.mxu0 %v1321
      %1353 = vmatmul.f32.gmra.mxu0 %v1335
      %v1354 = vpop.f32.mrf.mxu0
      %v1355 = vadd.f32 %v1331, %v1354
      %1356 = vdwg.mxu0
      %v1357 = vadd.f32 %v1217, %v1355
      %1358 = vst.msk [vmem:[%s435] sm:$0xff] %vm439, %v1357
      %p1359 = scmp.lt.s32.totalorder %s24, 1
      %s1360 = scalar_select %p1359, %s24, 1
      %s1361 = smul.addr %s1360, 8
      %s1362 = scalar_lea.vmem %s13, %s1361
      // Predicated region
      $region73: #{transformer_forward.5} parent=71 // pred_check
        %p1363 = pneg %p320
      $region74: #{transformer_forward.5} parent=71 // pred_check_branch
        %1365 = sbr.rel (%p1363) target = $region76
      $region75: #{transformer_forward.5} parent=71 // pred_region
        _
      $region76: #{transformer_forward.5} parent=71 // pred_fallthru
        _
    $region72: #{transformer_forward.5} parent=5 // pred_fallthru
      _
    %p1366 = scmp.le.s32.totalorder 2, %s19
    // Predicated region
    $region77: #{transformer_forward.5} parent=5 // pred_check
      %p1367 = pneg %p1366
    $region78: #{transformer_forward.5} parent=5 // pred_check_branch
      %1369 = sbr.rel (%p1367) target = $region80
    $region79: #{transformer_forward.5} parent=5 // pred_region
      %s1370 = ssub.s32 %s19, 2
      // Predicated region
      $region81: #{transformer_forward.5} parent=79 // pred_check
        %p1371 = pneg %p326
      $region82: #{transformer_forward.5} parent=79 // pred_check_branch
        %1373 = sbr.rel (%p1371) target = $region84
      $region83: #{transformer_forward.5} parent=79 // pred_region
        %p1374 = scmp.lt.s32.totalorder %s25, 1
        %s1375 = scalar_select %p1374, %s25, 1
        %s1376 = smul.addr %s1375, 8
        %s1377 = scalar_lea.vmem %s13, %s1376
      $region84: #{transformer_forward.5} parent=79 // pred_fallthru
        _
    $region80: #{transformer_forward.5} parent=5 // pred_fallthru
      _
  $region6: #{transformer_forward.5} parent=0 // loop_footer
    %s23 = sadd.s32 1, %s19
  $region7: #{transformer_forward.5} parent=0 // loop_footer_branch
    %18 = sbr.rel target = $region3
  $region8: #{transformer_forward.5} parent=0 // loop_exit
    _

// kernel: transformer_forward.7
$region0: #{transformer_forward.7}
  #allocation0 [shape = 'u32[]', space=smem, size = 0x4, offset = 0x4, fixed_abs, tag = 'smem constant byte address 0x4 - core index']
  #allocation1 [shape = 'u32[72,128]{1,0:T(1,128)}', space=vmem, size = 0x9000, scoped, tag = 'internal scratch']
  %s0 = inlined_call_operand.vmem [shape: f32[2,8,32], index: 0, kind: input, shape index: {}]
  %s1 = inlined_call_operand.vmem [shape: f32[2,8,32], index: 1, kind: input, shape index: {}]
  %s2 = inlined_call_operand.vmem [shape: f32[1,32], index: 2, kind: input, shape index: {}]
  %s3 = inlined_call_operand.vmem [shape: f32[1,32], index: 3, kind: input, shape index: {}]
  %s4 = inlined_call_operand.vmem [shape: f32[3,4,32,8], index: 4, kind: input, shape index: {}]
  %s5 = inlined_call_operand.vmem [shape: f32[3,4,1,8], index: 5, kind: input, shape index: {}]
  %s6 = inlined_call_operand.vmem [shape: f32[4,8,32], index: 6, kind: input, shape index: {}]
  %s7 = inlined_call_operand.vmem [shape: f32[1,32], index: 7, kind: input, shape index: {}]
  %s8 = inlined_call_operand.vmem [shape: f32[1,32], index: 8, kind: input, shape index: {}]
  %s9 = inlined_call_operand.vmem [shape: f32[1,32], index: 9, kind: input, shape index: {}]
  %s10 = inlined_call_operand.vmem [shape: f32[3,4,32,8], index: 10, kind: input, shape index: {}]
  %s11 = inlined_call_operand.vmem [shape: f32[3,4,1,8], index: 11, kind: input, shape index: {}]
  %s12 = inlined_call_operand.vmem [shape: f32[4,8,32], index: 12, kind: input, shape index: {}]
  %s13 = inlined_call_operand.vmem [shape: f32[1,32], index: 13, kind: input, shape index: {}]
  %s14 = inlined_call_operand.vmem [shape: f32[1,32], index: 14, kind: input, shape index: {}]
  %s15 = inlined_call_operand.vmem [shape: f32[1,32], index: 15, kind: input, shape index: {}]
  %s16 = inlined_call_operand.vmem [shape: f32[32,64], index: 16, kind: input, shape index: {}]
  %s17 = inlined_call_operand.vmem [shape: f32[1,64], index: 17, kind: input, shape index: {}]
  %s18 = inlined_call_operand.vmem [shape: f32[64,32], index: 18, kind: input, shape index: {}]
  %s19 = inlined_call_operand.vmem [shape: f32[1,32], index: 19, kind: input, shape index: {}]
  %s20 = inlined_call_operand.vmem [shape: f32[2,8,32], index: 20, kind: output, shape index: {}]
  %s21 = sld [smem:[#allocation0]]
  $region113: #{transformer_forward.7} parent=0
    _
  %s23 = ssub.s32 1, %s21
  %s24 = scalar_select 0, %s23, %s21
  loop: start=0, step=1, limit=4
  $region2: #{transformer_forward.7} parent=0 // loop_pre_header
    _
  $region3: #{transformer_forward.7} parent=0 // loop_header
    %s26 = sphi 0, %s30
    %p27 = scmp.ge.s32.totalorder %s26, 4
    %s36 = sphi 0, %s38
    %s39 = sphi 0, %s36
    %s40 = sphi 0, %s39
    %s56 = sphi 0, %s40
    %s62 = sphi 0, %s64
    %s65 = sphi 0, %s62
    %s66 = sphi 0, %s65
    %s82 = sphi 0, %s66
    %s86 = sphi 0, %s86
    %s88 = sphi 0, %s86
    %s89 = sphi 0, %s88
    %s103 = sphi 0, %s89
    %s107 = sphi 0, %s107
    %s109 = sphi 0, %s107
    %s110 = sphi 0, %s109
    %s124 = sphi 0, %s110
    %s128 = sphi 0, %s128
    %s130 = sphi 0, %s128
    %s131 = sphi 0, %s130
    %s145 = sphi 0, %s131
    %s149 = sphi 0, %s149
    %s151 = sphi 0, %s149
    %s152 = sphi 0, %s151
    %s166 = sphi 0, %s152
    %s170 = sphi 0, %s170
    %s172 = sphi 0, %s170
    %s173 = sphi 0, %s172
    %s187 = sphi 0, %s173
    %s191 = sphi 0, %s191
    %s193 = sphi 0, %s191
    %s194 = sphi 0, %s193
    %s208 = sphi 0, %s194
    %s212 = sphi 0, %s212
    %s214 = sphi 0, %s212
    %s215 = sphi 0, %s214
    %s229 = sphi 0, %s215
    %s233 = sphi 0, %s233
    %s235 = sphi 0, %s233
    %s236 = sphi 0, %s235
    %s250 = sphi 0, %s236
    %s254 = sphi 0, %s254
    %s256 = sphi 0, %s254
    %s257 = sphi 0, %s256
    %s271 = sphi 0, %s257
    %s275 = sphi 0, %s275
    %s277 = sphi 0, %s275
    %s278 = sphi 0, %s277
    %s292 = sphi 0, %s278
    %s296 = sphi 0, %s296
    %s298 = sphi 0, %s296
    %s299 = sphi 0, %s298
    %s313 = sphi 0, %s299
    %s317 = sphi 0, %s317
    %s319 = sphi 0, %s317
    %s320 = sphi 0, %s319
    %s334 = sphi 0, %s320
    %s338 = sphi 0, %s338
    %s340 = sphi 0, %s338
    %s341 = sphi 0, %s340
    %s355 = sphi 0, %s341
    %s359 = sphi 0, %s359
    %s361 = sphi 0, %s359
    %s362 = sphi 0, %s361
    %s376 = sphi 0, %s362
    %s380 = sphi 0, %s380
    %s382 = sphi 0, %s380
    %s383 = sphi 0, %s382
    %s397 = sphi 0, %s383
    %s401 = sphi 0, %s401
    %s403 = sphi 0, %s401
    %s404 = sphi 0, %s403
    %s418 = sphi 0, %s404
    %s422 = sphi 0, %s422
    %s424 = sphi 0, %s422
    %s425 = sphi 0, %s424
    %s439 = sphi 0, %s425
    %s443 = sphi 0, %s443
    %s445 = sphi 0, %s443
    %s446 = sphi 0, %s445
    %s460 = sphi 0, %s446
    %s466 = sphi 0, %s468
    %s469 = sphi 0, %s466
    %s470 = sphi 0, %s469
    %s486 = sphi 0, %s470
  $region4: #{transformer_forward.7} parent=0 // loop_header_branch
    %29 = sbr.rel (%p27) target = $region8
  $region5: #{transformer_forward.7} parent=0 // loop_body
    %s31 = ssub.s32 %s26, 1
    %s32 = ssub.s32 %s26, 2
    %s33 = sadd.s32 %s26, 1
    %s34 = ssub.s32 %s26, %s33
    %p35 = scmp.eq.s32.totalorder %s34, 0
    %s37 = sadd.s32 %s36, 1
    %s38 = scalar_select %p35, %s36, %s37
    %p41 = pneg %p35
    %p42 = scmp.eq.s32.totalorder %s26, 1
    %p43 = por %p41, %p42
    %p44 = scmp.ne.s32.totalorder %s36, %s39
    %p45 = scmp.eq.s32.totalorder %s26, 0
    %p46 = por %p44, %p45
    %p47 = scmp.ne.s32.totalorder %s36, %s39
    %p48 = scmp.eq.s32.totalorder %s31, 1
    %p49 = por %p47, %p48
    %p50 = scmp.ne.s32.totalorder %s39, %s40
    %p51 = scmp.eq.s32.totalorder %s31, 0
    %p52 = por %p50, %p51
    %p53 = scmp.ne.s32.totalorder %s39, %s40
    %p54 = scmp.eq.s32.totalorder %s32, 1
    %p55 = por %p53, %p54
    %p57 = scmp.ne.s32.totalorder %s40, %s56
    %p58 = scmp.eq.s32.totalorder %s32, 0
    %p59 = por %p57, %p58
    %s60 = ssub.s32 %s26, %s33
    %p61 = scmp.eq.s32.totalorder %s60, 0
    %s63 = sadd.s32 %s62, 1
    %s64 = scalar_select %p61, %s62, %s63
    %p67 = pneg %p61
    %p68 = scmp.eq.s32.totalorder %s26, 1
    %p69 = por %p67, %p68
    %p70 = scmp.ne.s32.totalorder %s62, %s65
    %p71 = scmp.eq.s32.totalorder %s26, 0
    %p72 = por %p70, %p71
    %p73 = scmp.ne.s32.totalorder %s62, %s65
    %p74 = scmp.eq.s32.totalorder %s31, 1
    %p75 = por %p73, %p74
    %p76 = scmp.ne.s32.totalorder %s65, %s66
    %p77 = scmp.eq.s32.totalorder %s31, 0
    %p78 = por %p76, %p77
    %p79 = scmp.ne.s32.totalorder %s65, %s66
    %p80 = scmp.eq.s32.totalorder %s32, 1
    %p81 = por %p79, %p80
    %p83 = scmp.ne.s32.totalorder %s66, %s82
    %p84 = scmp.eq.s32.totalorder %s32, 0
    %p85 = por %p83, %p84
    %s87 = sadd.s32 %s86, 1
    %p90 = scmp.eq.s32.totalorder %s26, 1
    %p91 = scmp.ne.s32.totalorder %s86, %s88
    %p92 = scmp.eq.s32.totalorder %s26, 0
    %p93 = por %p91, %p92
    %p94 = scmp.ne.s32.totalorder %s86, %s88
    %p95 = scmp.eq.s32.totalorder %s31, 1
    %p96 = por %p94, %p95
    %p97 = scmp.ne.s32.totalorder %s88, %s89
    %p98 = scmp.eq.s32.totalorder %s31, 0
    %p99 = por %p97, %p98
    %p100 = scmp.ne.s32.totalorder %s88, %s89
    %p101 = scmp.eq.s32.totalorder %s32, 1
    %p102 = por %p100, %p101
    %p104 = scmp.ne.s32.totalorder %s89, %s103
    %p105 = scmp.eq.s32.totalorder %s32, 0
    %p106 = por %p104, %p105
    %s108 = sadd.s32 %s107, 1
    %p111 = scmp.eq.s32.totalorder %s26, 1
    %p112 = scmp.ne.s32.totalorder %s107, %s109
    %p113 = scmp.eq.s32.totalorder %s26, 0
    %p114 = por %p112, %p113
    %p115 = scmp.ne.s32.totalorder %s107, %s109
    %p116 = scmp.eq.s32.totalorder %s31, 1
    %p117 = por %p115, %p116
    %p118 = scmp.ne.s32.totalorder %s109, %s110
    %p119 = scmp.eq.s32.totalorder %s31, 0
    %p120 = por %p118, %p119
    %p121 = scmp.ne.s32.totalorder %s109, %s110
    %p122 = scmp.eq.s32.totalorder %s32, 1
    %p123 = por %p121, %p122
    %p125 = scmp.ne.s32.totalorder %s110, %s124
    %p126 = scmp.eq.s32.totalorder %s32, 0
    %p127 = por %p125, %p126
    %s129 = sadd.s32 %s128, 1
    %p132 = scmp.eq.s32.totalorder %s26, 1
    %p133 = scmp.ne.s32.totalorder %s128, %s130
    %p134 = scmp.eq.s32.totalorder %s26, 0
    %p135 = por %p133, %p134
    %p136 = scmp.ne.s32.totalorder %s128, %s130
    %p137 = scmp.eq.s32.totalorder %s31, 1
    %p138 = por %p136, %p137
    %p139 = scmp.ne.s32.totalorder %s130, %s131
    %p140 = scmp.eq.s32.totalorder %s31, 0
    %p141 = por %p139, %p140
    %p142 = scmp.ne.s32.totalorder %s130, %s131
    %p143 = scmp.eq.s32.totalorder %s32, 1
    %p144 = por %p142, %p143
    %p146 = scmp.ne.s32.totalorder %s131, %s145
    %p147 = scmp.eq.s32.totalorder %s32, 0
    %p148 = por %p146, %p147
    %s150 = sadd.s32 %s149, 1
    %p153 = scmp.eq.s32.totalorder %s26, 1
    %p154 = scmp.ne.s32.totalorder %s149, %s151
    %p155 = scmp.eq.s32.totalorder %s26, 0
    %p156 = por %p154, %p155
    %p157 = scmp.ne.s32.totalorder %s149, %s151
    %p158 = scmp.eq.s32.totalorder %s31, 1
    %p159 = por %p157, %p158
    %p160 = scmp.ne.s32.totalorder %s151, %s152
    %p161 = scmp.eq.s32.totalorder %s31, 0
    %p162 = por %p160, %p161
    %p163 = scmp.ne.s32.totalorder %s151, %s152
    %p164 = scmp.eq.s32.totalorder %s32, 1
    %p165 = por %p163, %p164
    %p167 = scmp.ne.s32.totalorder %s152, %s166
    %p168 = scmp.eq.s32.totalorder %s32, 0
    %p169 = por %p167, %p168
    %s171 = sadd.s32 %s170, 1
    %p174 = scmp.eq.s32.totalorder %s26, 1
    %p175 = scmp.ne.s32.totalorder %s170, %s172
    %p176 = scmp.eq.s32.totalorder %s26, 0
    %p177 = por %p175, %p176
    %p178 = scmp.ne.s32.totalorder %s170, %s172
    %p179 = scmp.eq.s32.totalorder %s31, 1
    %p180 = por %p178, %p179
    %p181 = scmp.ne.s32.totalorder %s172, %s173
    %p182 = scmp.eq.s32.totalorder %s31, 0
    %p183 = por %p181, %p182
    %p184 = scmp.ne.s32.totalorder %s172, %s173
    %p185 = scmp.eq.s32.totalorder %s32, 1
    %p186 = por %p184, %p185
    %p188 = scmp.ne.s32.totalorder %s173, %s187
    %p189 = scmp.eq.s32.totalorder %s32, 0
    %p190 = por %p188, %p189
    %s192 = sadd.s32 %s191, 1
    %p195 = scmp.eq.s32.totalorder %s26, 1
    %p196 = scmp.ne.s32.totalorder %s191, %s193
    %p197 = scmp.eq.s32.totalorder %s26, 0
    %p198 = por %p196, %p197
    %p199 = scmp.ne.s32.totalorder %s191, %s193
    %p200 = scmp.eq.s32.totalorder %s31, 1
    %p201 = por %p199, %p200
    %p202 = scmp.ne.s32.totalorder %s193, %s194
    %p203 = scmp.eq.s32.totalorder %s31, 0
    %p204 = por %p202, %p203
    %p205 = scmp.ne.s32.totalorder %s193, %s194
    %p206 = scmp.eq.s32.totalorder %s32, 1
    %p207 = por %p205, %p206
    %p209 = scmp.ne.s32.totalorder %s194, %s208
    %p210 = scmp.eq.s32.totalorder %s32, 0
    %p211 = por %p209, %p210
    %s213 = sadd.s32 %s212, 1
    %p216 = scmp.eq.s32.totalorder %s26, 1
    %p217 = scmp.ne.s32.totalorder %s212, %s214
    %p218 = scmp.eq.s32.totalorder %s26, 0
    %p219 = por %p217, %p218
    %p220 = scmp.ne.s32.totalorder %s212, %s214
    %p221 = scmp.eq.s32.totalorder %s31, 1
    %p222 = por %p220, %p221
    %p223 = scmp.ne.s32.totalorder %s214, %s215
    %p224 = scmp.eq.s32.totalorder %s31, 0
    %p225 = por %p223, %p224
    %p226 = scmp.ne.s32.totalorder %s214, %s215
    %p227 = scmp.eq.s32.totalorder %s32, 1
    %p228 = por %p226, %p227
    %p230 = scmp.ne.s32.totalorder %s215, %s229
    %p231 = scmp.eq.s32.totalorder %s32, 0
    %p232 = por %p230, %p231
    %s234 = sadd.s32 %s233, 1
    %p237 = scmp.eq.s32.totalorder %s26, 1
    %p238 = scmp.ne.s32.totalorder %s233, %s235
    %p239 = scmp.eq.s32.totalorder %s26, 0
    %p240 = por %p238, %p239
    %p241 = scmp.ne.s32.totalorder %s233, %s235
    %p242 = scmp.eq.s32.totalorder %s31, 1
    %p243 = por %p241, %p242
    %p244 = scmp.ne.s32.totalorder %s235, %s236
    %p245 = scmp.eq.s32.totalorder %s31, 0
    %p246 = por %p244, %p245
    %p247 = scmp.ne.s32.totalorder %s235, %s236
    %p248 = scmp.eq.s32.totalorder %s32, 1
    %p249 = por %p247, %p248
    %p251 = scmp.ne.s32.totalorder %s236, %s250
    %p252 = scmp.eq.s32.totalorder %s32, 0
    %p253 = por %p251, %p252
    %s255 = sadd.s32 %s254, 1
    %p258 = scmp.eq.s32.totalorder %s26, 1
    %p259 = scmp.ne.s32.totalorder %s254, %s256
    %p260 = scmp.eq.s32.totalorder %s26, 0
    %p261 = por %p259, %p260
    %p262 = scmp.ne.s32.totalorder %s254, %s256
    %p263 = scmp.eq.s32.totalorder %s31, 1
    %p264 = por %p262, %p263
    %p265 = scmp.ne.s32.totalorder %s256, %s257
    %p266 = scmp.eq.s32.totalorder %s31, 0
    %p267 = por %p265, %p266
    %p268 = scmp.ne.s32.totalorder %s256, %s257
    %p269 = scmp.eq.s32.totalorder %s32, 1
    %p270 = por %p268, %p269
    %p272 = scmp.ne.s32.totalorder %s257, %s271
    %p273 = scmp.eq.s32.totalorder %s32, 0
    %p274 = por %p272, %p273
    %s276 = sadd.s32 %s275, 1
    %p279 = scmp.eq.s32.totalorder %s26, 1
    %p280 = scmp.ne.s32.totalorder %s275, %s277
    %p281 = scmp.eq.s32.totalorder %s26, 0
    %p282 = por %p280, %p281
    %p283 = scmp.ne.s32.totalorder %s275, %s277
    %p284 = scmp.eq.s32.totalorder %s31, 1
    %p285 = por %p283, %p284
    %p286 = scmp.ne.s32.totalorder %s277, %s278
    %p287 = scmp.eq.s32.totalorder %s31, 0
    %p288 = por %p286, %p287
    %p289 = scmp.ne.s32.totalorder %s277, %s278
    %p290 = scmp.eq.s32.totalorder %s32, 1
    %p291 = por %p289, %p290
    %p293 = scmp.ne.s32.totalorder %s278, %s292
    %p294 = scmp.eq.s32.totalorder %s32, 0
    %p295 = por %p293, %p294
    %s297 = sadd.s32 %s296, 1
    %p300 = scmp.eq.s32.totalorder %s26, 1
    %p301 = scmp.ne.s32.totalorder %s296, %s298
    %p302 = scmp.eq.s32.totalorder %s26, 0
    %p303 = por %p301, %p302
    %p304 = scmp.ne.s32.totalorder %s296, %s298
    %p305 = scmp.eq.s32.totalorder %s31, 1
    %p306 = por %p304, %p305
    %p307 = scmp.ne.s32.totalorder %s298, %s299
    %p308 = scmp.eq.s32.totalorder %s31, 0
    %p309 = por %p307, %p308
    %p310 = scmp.ne.s32.totalorder %s298, %s299
    %p311 = scmp.eq.s32.totalorder %s32, 1
    %p312 = por %p310, %p311
    %p314 = scmp.ne.s32.totalorder %s299, %s313
    %p315 = scmp.eq.s32.totalorder %s32, 0
    %p316 = por %p314, %p315
    %s318 = sadd.s32 %s317, 1
    %p321 = scmp.eq.s32.totalorder %s26, 1
    %p322 = scmp.ne.s32.totalorder %s317, %s319
    %p323 = scmp.eq.s32.totalorder %s26, 0
    %p324 = por %p322, %p323
    %p325 = scmp.ne.s32.totalorder %s317, %s319
    %p326 = scmp.eq.s32.totalorder %s31, 1
    %p327 = por %p325, %p326
    %p328 = scmp.ne.s32.totalorder %s319, %s320
    %p329 = scmp.eq.s32.totalorder %s31, 0
    %p330 = por %p328, %p329
    %p331 = scmp.ne.s32.totalorder %s319, %s320
    %p332 = scmp.eq.s32.totalorder %s32, 1
    %p333 = por %p331, %p332
    %p335 = scmp.ne.s32.totalorder %s320, %s334
    %p336 = scmp.eq.s32.totalorder %s32, 0
    %p337 = por %p335, %p336
    %s339 = sadd.s32 %s338, 1
    %p342 = scmp.eq.s32.totalorder %s26, 1
    %p343 = scmp.ne.s32.totalorder %s338, %s340
    %p344 = scmp.eq.s32.totalorder %s26, 0
    %p345 = por %p343, %p344
    %p346 = scmp.ne.s32.totalorder %s338, %s340
    %p347 = scmp.eq.s32.totalorder %s31, 1
    %p348 = por %p346, %p347
    %p349 = scmp.ne.s32.totalorder %s340, %s341
    %p350 = scmp.eq.s32.totalorder %s31, 0
    %p351 = por %p349, %p350
    %p352 = scmp.ne.s32.totalorder %s340, %s341
    %p353 = scmp.eq.s32.totalorder %s32, 1
    %p354 = por %p352, %p353
    %p356 = scmp.ne.s32.totalorder %s341, %s355
    %p357 = scmp.eq.s32.totalorder %s32, 0
    %p358 = por %p356, %p357
    %s360 = sadd.s32 %s359, 1
    %p363 = scmp.eq.s32.totalorder %s26, 1
    %p364 = scmp.ne.s32.totalorder %s359, %s361
    %p365 = scmp.eq.s32.totalorder %s26, 0
    %p366 = por %p364, %p365
    %p367 = scmp.ne.s32.totalorder %s359, %s361
    %p368 = scmp.eq.s32.totalorder %s31, 1
    %p369 = por %p367, %p368
    %p370 = scmp.ne.s32.totalorder %s361, %s362
    %p371 = scmp.eq.s32.totalorder %s31, 0
    %p372 = por %p370, %p371
    %p373 = scmp.ne.s32.totalorder %s361, %s362
    %p374 = scmp.eq.s32.totalorder %s32, 1
    %p375 = por %p373, %p374
    %p377 = scmp.ne.s32.totalorder %s362, %s376
    %p378 = scmp.eq.s32.totalorder %s32, 0
    %p379 = por %p377, %p378
    %s381 = sadd.s32 %s380, 1
    %p384 = scmp.eq.s32.totalorder %s26, 1
    %p385 = scmp.ne.s32.totalorder %s380, %s382
    %p386 = scmp.eq.s32.totalorder %s26, 0
    %p387 = por %p385, %p386
    %p388 = scmp.ne.s32.totalorder %s380, %s382
    %p389 = scmp.eq.s32.totalorder %s31, 1
    %p390 = por %p388, %p389
    %p391 = scmp.ne.s32.totalorder %s382, %s383
    %p392 = scmp.eq.s32.totalorder %s31, 0
    %p393 = por %p391, %p392
    %p394 = scmp.ne.s32.totalorder %s382, %s383
    %p395 = scmp.eq.s32.totalorder %s32, 1
    %p396 = por %p394, %p395
    %p398 = scmp.ne.s32.totalorder %s383, %s397
    %p399 = scmp.eq.s32.totalorder %s32, 0
    %p400 = por %p398, %p399
    %s402 = sadd.s32 %s401, 1
    %p405 = scmp.eq.s32.totalorder %s26, 1
    %p406 = scmp.ne.s32.totalorder %s401, %s403
    %p407 = scmp.eq.s32.totalorder %s26, 0
    %p408 = por %p406, %p407
    %p409 = scmp.ne.s32.totalorder %s401, %s403
    %p410 = scmp.eq.s32.totalorder %s31, 1
    %p411 = por %p409, %p410
    %p412 = scmp.ne.s32.totalorder %s403, %s404
    %p413 = scmp.eq.s32.totalorder %s31, 0
    %p414 = por %p412, %p413
    %p415 = scmp.ne.s32.totalorder %s403, %s404
    %p416 = scmp.eq.s32.totalorder %s32, 1
    %p417 = por %p415, %p416
    %p419 = scmp.ne.s32.totalorder %s404, %s418
    %p420 = scmp.eq.s32.totalorder %s32, 0
    %p421 = por %p419, %p420
    %s423 = sadd.s32 %s422, 1
    %p426 = scmp.eq.s32.totalorder %s26, 1
    %p427 = scmp.ne.s32.totalorder %s422, %s424
    %p428 = scmp.eq.s32.totalorder %s26, 0
    %p429 = por %p427, %p428
    %p430 = scmp.ne.s32.totalorder %s422, %s424
    %p431 = scmp.eq.s32.totalorder %s31, 1
    %p432 = por %p430, %p431
    %p433 = scmp.ne.s32.totalorder %s424, %s425
    %p434 = scmp.eq.s32.totalorder %s31, 0
    %p435 = por %p433, %p434
    %p436 = scmp.ne.s32.totalorder %s424, %s425
    %p437 = scmp.eq.s32.totalorder %s32, 1
    %p438 = por %p436, %p437
    %p440 = scmp.ne.s32.totalorder %s425, %s439
    %p441 = scmp.eq.s32.totalorder %s32, 0
    %p442 = por %p440, %p441
    %s444 = sadd.s32 %s443, 1
    %p447 = scmp.eq.s32.totalorder %s26, 1
    %p448 = scmp.ne.s32.totalorder %s443, %s445
    %p449 = scmp.eq.s32.totalorder %s26, 0
    %p450 = por %p448, %p449
    %p451 = scmp.ne.s32.totalorder %s443, %s445
    %p452 = scmp.eq.s32.totalorder %s31, 1
    %p453 = por %p451, %p452
    %p454 = scmp.ne.s32.totalorder %s445, %s446
    %p455 = scmp.eq.s32.totalorder %s31, 0
    %p456 = por %p454, %p455
    %p457 = scmp.ne.s32.totalorder %s445, %s446
    %p458 = scmp.eq.s32.totalorder %s32, 1
    %p459 = por %p457, %p458
    %p461 = scmp.ne.s32.totalorder %s446, %s460
    %p462 = scmp.eq.s32.totalorder %s32, 0
    %p463 = por %p461, %p462
    %s464 = ssub.s32 %s26, %s33
    %p465 = scmp.eq.s32.totalorder %s464, 0
    %s467 = sadd.s32 %s466, 1
    %s468 = scalar_select %p465, %s466, %s467
    %p471 = pneg %p465
    %p472 = scmp.eq.s32.totalorder %s26, 1
    %p473 = por %p471, %p472
    %p474 = scmp.ne.s32.totalorder %s466, %s469
    %p475 = scmp.eq.s32.totalorder %s26, 0
    %p476 = por %p474, %p475
    %p477 = scmp.ne.s32.totalorder %s466, %s469
    %p478 = scmp.eq.s32.totalorder %s31, 1
    %p479 = por %p477, %p478
    %p480 = scmp.ne.s32.totalorder %s469, %s470
    %p481 = scmp.eq.s32.totalorder %s31, 0
    %p482 = por %p480, %p481
    %p483 = scmp.ne.s32.totalorder %s469, %s470
    %p484 = scmp.eq.s32.totalorder %s32, 1
    %p485 = por %p483, %p484
    %p487 = scmp.ne.s32.totalorder %s470, %s486
    %p488 = scmp.eq.s32.totalorder %s32, 0
    %p489 = por %p487, %p488
    %p490 = scmp.le.s32.totalorder 1, %s26
    %p491 = scmp.lt.s32.totalorder %s26, 3
    %p492 = pnand %p490, %p491
    %p493 = pneg %p492
    // Predicated region
    $region9: #{transformer_forward.7} parent=5 // pred_check
      _
    $region10: #{transformer_forward.7} parent=5 // pred_check_branch
      %495 = sbr.rel (%p492) target = $region12
    $region11: #{transformer_forward.7} parent=5 // pred_region
      %s496 = ssub.s32 %s26, 1
      // Predicated region
      $region13: #{transformer_forward.7} parent=11 // pred_check
        %p497 = pneg %p99
      $region14: #{transformer_forward.7} parent=11 // pred_check_branch
        %499 = sbr.rel (%p497) target = $region16
      $region15: #{transformer_forward.7} parent=11 // pred_region
        _
      $region16: #{transformer_forward.7} parent=11 // pred_fallthru
        _
      // Predicated region
      $region17: #{transformer_forward.7} parent=11 // pred_check
        %p500 = pneg %p120
      $region18: #{transformer_forward.7} parent=11 // pred_check_branch
        %502 = sbr.rel (%p500) target = $region20
      $region19: #{transformer_forward.7} parent=11 // pred_region
        _
      $region20: #{transformer_forward.7} parent=11 // pred_fallthru
        _
      // Predicated region
      $region21: #{transformer_forward.7} parent=11 // pred_check
        %p503 = pneg %p141
      $region22: #{transformer_forward.7} parent=11 // pred_check_branch
        %505 = sbr.rel (%p503) target = $region24
      $region23: #{transformer_forward.7} parent=11 // pred_region
        _
      $region24: #{transformer_forward.7} parent=11 // pred_fallthru
        _
      // Predicated region
      $region25: #{transformer_forward.7} parent=11 // pred_check
        %p506 = pneg %p162
      $region26: #{transformer_forward.7} parent=11 // pred_check_branch
        %508 = sbr.rel (%p506) target = $region28
      $region27: #{transformer_forward.7} parent=11 // pred_region
        _
      $region28: #{transformer_forward.7} parent=11 // pred_fallthru
        _
      // Predicated region
      $region29: #{transformer_forward.7} parent=11 // pred_check
        %p509 = pneg %p183
      $region30: #{transformer_forward.7} parent=11 // pred_check_branch
        %511 = sbr.rel (%p509) target = $region32
      $region31: #{transformer_forward.7} parent=11 // pred_region
        _
      $region32: #{transformer_forward.7} parent=11 // pred_fallthru
        _
      // Predicated region
      $region33: #{transformer_forward.7} parent=11 // pred_check
        %p512 = pneg %p204
      $region34: #{transformer_forward.7} parent=11 // pred_check_branch
        %514 = sbr.rel (%p512) target = $region36
      $region35: #{transformer_forward.7} parent=11 // pred_region
        _
      $region36: #{transformer_forward.7} parent=11 // pred_fallthru
        _
      // Predicated region
      $region37: #{transformer_forward.7} parent=11 // pred_check
        %p515 = pneg %p225
      $region38: #{transformer_forward.7} parent=11 // pred_check_branch
        %517 = sbr.rel (%p515) target = $region40
      $region39: #{transformer_forward.7} parent=11 // pred_region
        _
      $region40: #{transformer_forward.7} parent=11 // pred_fallthru
        _
      // Predicated region
      $region41: #{transformer_forward.7} parent=11 // pred_check
        %p518 = pneg %p246
      $region42: #{transformer_forward.7} parent=11 // pred_check_branch
        %520 = sbr.rel (%p518) target = $region44
      $region43: #{transformer_forward.7} parent=11 // pred_region
        _
      $region44: #{transformer_forward.7} parent=11 // pred_fallthru
        _
      // Predicated region
      $region45: #{transformer_forward.7} parent=11 // pred_check
        %p521 = pneg %p267
      $region46: #{transformer_forward.7} parent=11 // pred_check_branch
        %523 = sbr.rel (%p521) target = $region48
      $region47: #{transformer_forward.7} parent=11 // pred_region
        _
      $region48: #{transformer_forward.7} parent=11 // pred_fallthru
        _
      // Predicated region
      $region49: #{transformer_forward.7} parent=11 // pred_check
        %p524 = pneg %p288
      $region50: #{transformer_forward.7} parent=11 // pred_check_branch
        %526 = sbr.rel (%p524) target = $region52
      $region51: #{transformer_forward.7} parent=11 // pred_region
        _
      $region52: #{transformer_forward.7} parent=11 // pred_fallthru
        _
      // Predicated region
      $region53: #{transformer_forward.7} parent=11 // pred_check
        %p527 = pneg %p309
      $region54: #{transformer_forward.7} parent=11 // pred_check_branch
        %529 = sbr.rel (%p527) target = $region56
      $region55: #{transformer_forward.7} parent=11 // pred_region
        _
      $region56: #{transformer_forward.7} parent=11 // pred_fallthru
        _
      // Predicated region
      $region57: #{transformer_forward.7} parent=11 // pred_check
        %p530 = pneg %p330
      $region58: #{transformer_forward.7} parent=11 // pred_check_branch
        %532 = sbr.rel (%p530) target = $region60
      $region59: #{transformer_forward.7} parent=11 // pred_region
        _
      $region60: #{transformer_forward.7} parent=11 // pred_fallthru
        _
      // Predicated region
      $region61: #{transformer_forward.7} parent=11 // pred_check
        %p533 = pneg %p351
      $region62: #{transformer_forward.7} parent=11 // pred_check_branch
        %535 = sbr.rel (%p533) target = $region64
      $region63: #{transformer_forward.7} parent=11 // pred_region
        _
      $region64: #{transformer_forward.7} parent=11 // pred_fallthru
        _
      // Predicated region
      $region65: #{transformer_forward.7} parent=11 // pred_check
        %p536 = pneg %p372
      $region66: #{transformer_forward.7} parent=11 // pred_check_branch
        %538 = sbr.rel (%p536) target = $region68
      $region67: #{transformer_forward.7} parent=11 // pred_region
        _
      $region68: #{transformer_forward.7} parent=11 // pred_fallthru
        _
      // Predicated region
      $region69: #{transformer_forward.7} parent=11 // pred_check
        %p539 = pneg %p393
      $region70: #{transformer_forward.7} parent=11 // pred_check_branch
        %541 = sbr.rel (%p539) target = $region72
      $region71: #{transformer_forward.7} parent=11 // pred_region
        _
      $region72: #{transformer_forward.7} parent=11 // pred_fallthru
        _
      // Predicated region
      $region73: #{transformer_forward.7} parent=11 // pred_check
        %p542 = pneg %p414
      $region74: #{transformer_forward.7} parent=11 // pred_check_branch
        %544 = sbr.rel (%p542) target = $region76
      $region75: #{transformer_forward.7} parent=11 // pred_region
        _
      $region76: #{transformer_forward.7} parent=11 // pred_fallthru
        _
      // Predicated region
      $region77: #{transformer_forward.7} parent=11 // pred_check
        %p545 = pneg %p435
      $region78: #{transformer_forward.7} parent=11 // pred_check_branch
        %547 = sbr.rel (%p545) target = $region80
      $region79: #{transformer_forward.7} parent=11 // pred_region
        _
      $region80: #{transformer_forward.7} parent=11 // pred_fallthru
        _
      // Predicated region
      $region81: #{transformer_forward.7} parent=11 // pred_check
        %p548 = pneg %p456
      $region82: #{transformer_forward.7} parent=11 // pred_check_branch
        %550 = sbr.rel (%p548) target = $region84
      $region83: #{transformer_forward.7} parent=11 // pred_region
        _
      $region84: #{transformer_forward.7} parent=11 // pred_fallthru
        _
    $region12: #{transformer_forward.7} parent=5 // pred_fallthru
      _
    %p551 = scmp.lt.s32.totalorder %s26, 2
    // Predicated region
    $region85: #{transformer_forward.7} parent=5 // pred_check
      %p552 = pneg %p551
    $region86: #{transformer_forward.7} parent=5 // pred_check_branch
      %554 = sbr.rel (%p552) target = $region88
    $region87: #{transformer_forward.7} parent=5 // pred_region
      // Predicated region
      $region89: #{transformer_forward.7} parent=87 // pred_check
        %p555 = pneg %p46
      $region90: #{transformer_forward.7} parent=87 // pred_check_branch
        %557 = sbr.rel (%p555) target = $region92
      $region91: #{transformer_forward.7} parent=87 // pred_region
        %p558 = scmp.lt.s32.totalorder %s26, 1
        %s559 = scalar_select %p558, %s26, 1
        %s560 = smul.addr %s559, 8
        %s561 = scalar_lea.vmem %s0, %s560
      $region92: #{transformer_forward.7} parent=87 // pred_fallthru
        _
      // Predicated region
      $region93: #{transformer_forward.7} parent=87 // pred_check
        %p562 = pneg %p72
      $region94: #{transformer_forward.7} parent=87 // pred_check_branch
        %564 = sbr.rel (%p562) target = $region96
      $region95: #{transformer_forward.7} parent=87 // pred_region
        %p565 = scmp.lt.s32.totalorder %s26, 1
        %s566 = scalar_select %p565, %s26, 1
        %s567 = smul.addr %s566, 8
        %s568 = scalar_lea.vmem %s1, %s567
      $region96: #{transformer_forward.7} parent=87 // pred_fallthru
        _
    $region88: #{transformer_forward.7} parent=5 // pred_fallthru
      _
    %p569 = scmp.le.s32.totalorder 1, %s26
    %p570 = scmp.lt.s32.totalorder %s26, 3
    %p571 = pnand %p569, %p570
    %p572 = pneg %p571
    // Predicated region
    $region97: #{transformer_forward.7} parent=5 // pred_check
      _
    $region98: #{transformer_forward.7} parent=5 // pred_check_branch
      %574 = sbr.rel (%p571) target = $region100
    $region99: #{transformer_forward.7} parent=5 // pred_region
      %s575 = ssub.s32 %s26, 1
      %p576 = scmp.lt.s32.totalorder %s31, 1
      %s577 = scalar_select %p576, %s31, 1
      %s578 = smul.addr %s577, 8
      %s579 = scalar_lea.vmem %s0, %s578
      %p580 = pneg %p52
      %p581 = pneg %p49
      %p582 = scmp.lt.s32.totalorder %s31, 1
      %s583 = scalar_select %p582, %s31, 1
      %s584 = smul.addr %s583, 8
      %s585 = scalar_lea.vmem %s1, %s584
      %p586 = pneg %p78
      %p587 = pneg %p75
      %p588 = pneg %p99
      %p589 = pneg %p96
      %p590 = pneg %p120
      %p591 = pneg %p117
      %p592 = pneg %p141
      %p593 = pneg %p138
      %p594 = pneg %p162
      %p595 = pneg %p159
      %p596 = pneg %p183
      %p597 = pneg %p180
      %p598 = pneg %p204
      %p599 = pneg %p201
      %p600 = pneg %p225
      %p601 = pneg %p222
      %p602 = pneg %p246
      %p603 = pneg %p243
      %p604 = pneg %p267
      %p605 = pneg %p264
      %p606 = pneg %p288
      %p607 = pneg %p285
      %p608 = pneg %p309
      %p609 = pneg %p306
      %p610 = pneg %p330
      %p611 = pneg %p327
      %p612 = pneg %p351
      %p613 = pneg %p348
      %p614 = pneg %p372
      %p615 = pneg %p369
      %p616 = pneg %p393
      %p617 = pneg %p390
      %p618 = pneg %p414
      %p619 = pneg %p411
      %p620 = pneg %p435
      %p621 = pneg %p432
      %p622 = pneg %p456
      %p623 = pneg %p453
      %p624 = pneg %p482
      %p625 = pneg %p479
      %p626 = scmp.lt.s32.totalorder %s31, 1
      %s627 = scalar_select %p626, %s31, 1
      %s628 = smul.addr %s627, 8
      %s629 = scalar_lea.vmem %s20, %s628
      %p630 = scmp.lt.s32.totalorder %s31, 1
      %s631 = scalar_select %p630, %s31, 1
      %s632 = smul.addr %s631, 8
      %s633 = scalar_lea.vmem %s0, %s632
      %p634 = scmp.lt.s32.totalorder %s31, 1
      %s635 = scalar_select %p634, %s31, 1
      %s636 = smul.addr %s635, 8
      %s637 = scalar_lea.vmem %s1, %s636
      %p638 = scmp.lt.s32.totalorder %s31, 1
      %s639 = scalar_select %p638, %s31, 1
      %s640 = smul.addr %s639, 8
      %s641 = scalar_lea.vmem %s20, %s640
      %v642 = vld [vmem:[%s633] sm:$0xff]
      %v643 = vld [vmem:[%s637] sm:$0xff]
      %v644 = vld [vmem:[%s2] sm:$0x1]
      %v645 = vld [vmem:[%s3] sm:$0x1]
      %vm646 = vcmask 261120
      %v647 = vsel %vm646, %v642, 0.0
      %648 = vadd.xlane.f32.xlu0 %v647
      %v649 = vpop.xlane.xlu0 %648
      %v650 = vrcp.pop 32.0
      %v651 = vmul.f32 32.0, %v650
      %v652 = vsub.f32 1.0, %v651
      %v653 = vmul.f32 %v650, %v652
      %v654 = vadd.f32 %v650, %v653
      %vm655 = vweird.f32 %v650
      %v656 = vsel %vm655, %v650, %v654
      %v657 = vmul.f32 %v649, %v656
      %v658 = vsub.f32 %v642, %v657
      %v659 = vmul.f32 %v658, %v658
      %v660 = vsel %vm646, %v659, 0.0
      %661 = vadd.xlane.f32.xlu0 %v660
      %v662 = vpop.xlane.xlu0 %661
      %v663 = vmul.f32 %v662, %v656
      %v664 = vadd.f32 %v663, 1e-05
      %v665 = vrsqrt.pop %v664
      %v666 = vmul.f32 %v665, %v664
      %v667 = vmul.f32 %v666, %v665
      %v668 = vmul.f32 0.5, %v667
      %v669 = vsub.f32 1.5, %v668
      %v670 = vmul.f32 %v665, %v669
      %vm671 = vweird.f32 %v664
      %vm672 = vweird.f32 %v665
      %vm673 = vmor %vm671, %vm672
      %v674 = vsel %vm673, %v665, %v670
      %v675 = vmul.f32 %v658, %v674
      %v677 = vperm.slane %v644, 0
      %v679 = vmul.f32 %v675, %v677
      %v681 = vperm.slane %v645, 0
      %v683 = vadd.f32 %v679, %v681
      %v684 = vld [vmem:[%s4] sm:$0xff]
      %v685 = vld [vmem:[%s4 + $0x8] sm:$0xff]
      %v686 = vld [vmem:[%s4 + $0x10] sm:$0xff]
      %v687 = vld [vmem:[%s4 + $0x18] sm:$0xff]
      %v688 = vld [vmem:[%s4 + $0x20] sm:$0xff]
      %v689 = vld [vmem:[%s4 + $0x28] sm:$0xff]
      %v690 = vld [vmem:[%s4 + $0x30] sm:$0xff]
      %v691 = vld [vmem:[%s4 + $0x38] sm:$0xff]
      %v692 = vld [vmem:[%s4 + $0x40] sm:$0xff]
      %v693 = vld [vmem:[%s4 + $0x48] sm:$0xff]
      %v694 = vld [vmem:[%s4 + $0x50] sm:$0xff]
      %v695 = vld [vmem:[%s4 + $0x58] sm:$0xff]
      %v696 = vld [vmem:[%s4 + $0x60] sm:$0xff]
      %v697 = vld [vmem:[%s4 + $0x68] sm:$0xff]
      %v698 = vld [vmem:[%s4 + $0x70] sm:$0xff]
      %v699 = vld [vmem:[%s4 + $0x78] sm:$0xff]
      %v700 = vld [vmem:[%s4 + $0x80] sm:$0xff]
      %v701 = vld [vmem:[%s4 + $0x88] sm:$0xff]
      %v702 = vld [vmem:[%s4 + $0x90] sm:$0xff]
      %v703 = vld [vmem:[%s4 + $0x98] sm:$0xff]
      %v704 = vld [vmem:[%s4 + $0xa0] sm:$0xff]
      %v705 = vld [vmem:[%s4 + $0xa8] sm:$0xff]
      %v706 = vld [vmem:[%s4 + $0xb0] sm:$0xff]
      %v707 = vld [vmem:[%s4 + $0xb8] sm:$0xff]
      %v708 = vld [vmem:[%s4 + $0xc0] sm:$0xff]
      %v709 = vld [vmem:[%s4 + $0xc8] sm:$0xff]
      %v710 = vld [vmem:[%s4 + $0xd0] sm:$0xff]
      %v711 = vld [vmem:[%s4 + $0xd8] sm:$0xff]
      %v712 = vld [vmem:[%s4 + $0xe0] sm:$0xff]
      %v713 = vld [vmem:[%s4 + $0xe8] sm:$0xff]
      %v714 = vld [vmem:[%s4 + $0xf0] sm:$0xff]
      %v715 = vld [vmem:[%s4 + $0xf8] sm:$0xff]
      %v716 = vld [vmem:[%s4 + $0x100] sm:$0xff]
      %v717 = vld [vmem:[%s4 + $0x108] sm:$0xff]
      %v718 = vld [vmem:[%s4 + $0x110] sm:$0xff]
      %v719 = vld [vmem:[%s4 + $0x118] sm:$0xff]
      %v720 = vld [vmem:[%s4 + $0x120] sm:$0xff]
      %v721 = vld [vmem:[%s4 + $0x128] sm:$0xff]
      %v722 = vld [vmem:[%s4 + $0x130] sm:$0xff]
      %v723 = vld [vmem:[%s4 + $0x138] sm:$0xff]
      %v724 = vld [vmem:[%s4 + $0x140] sm:$0xff]
      %v725 = vld [vmem:[%s4 + $0x148] sm:$0xff]
      %v726 = vld [vmem:[%s4 + $0x150] sm:$0xff]
      %v727 = vld [vmem:[%s4 + $0x158] sm:$0xff]
      %v728 = vld [vmem:[%s4 + $0x160] sm:$0xff]
      %v729 = vld [vmem:[%s4 + $0x168] sm:$0xff]
      %v730 = vld [vmem:[%s4 + $0x170] sm:$0xff]
      %v731 = vld [vmem:[%s4 + $0x178] sm:$0xff]
      %v732 = vld [vmem:[%s5] sm:$0x1]
      %v733 = vld [vmem:[%s5 + $0x1] sm:$0x1]
      %v734 = vld [vmem:[%s5 + $0x2] sm:$0x1]
      %v735 = vld [vmem:[%s5 + $0x3] sm:$0x1]
      %v736 = vld [vmem:[%s5 + $0x4] sm:$0x1]
      %v737 = vld [vmem:[%s5 + $0x5] sm:$0x1]
      %v738 = vld [vmem:[%s5 + $0x6] sm:$0x1]
      %v739 = vld [vmem:[%s5 + $0x7] sm:$0x1]
      %v740 = vld [vmem:[%s5 + $0x8] sm:$0x1]
      %v741 = vld [vmem:[%s5 + $0x9] sm:$0x1]
      %v742 = vld [vmem:[%s5 + $0xa] sm:$0x1]
      %v743 = vld [vmem:[%s5 + $0xb] sm:$0x1]
      %v744 = vld [vmem:[%s6] sm:$0xff]
      %v745 = vld [vmem:[%s6 + $0x8] sm:$0xff]
      %v746 = vld [vmem:[%s6 + $0x10] sm:$0xff]
      %v747 = vld [vmem:[%s6 + $0x18] sm:$0xff]
      %v748 = vld [vmem:[%s7] sm:$0x1]
      %v753 = vperm.slane %v732, 0
      %v754 = vperm.slane %v733, 0
      %v755 = vperm.slane %v734, 0
      %v756 = vperm.slane %v735, 0
      %v762 = vsel %vm646, %v683, 0
      %764 = vmatpush.msra.mxu0 0.0
      %765 = vmatpush.msra.mxu0 0.0
      %766 = vmatpush.msra.mxu0 0.0
      %767 = vmatpush.msra.mxu0 0.0
      %768 = vmatpush.msra.mxu0 0.0
      %769 = vmatpush.msra.mxu0 0.0
      %770 = vmatpush.msra.mxu0 0.0
      %771 = vmatpush.msra.mxu0 0.0
      %772 = vmatpush.msra.mxu0 0.0
      %773 = vmatpush.msra.mxu0 0.0
      %774 = vmatpush.msra.mxu0 0.0
      %775 = vmatpush.msra.mxu0 0.0
      %776 = vmatpush.msra.mxu0 %v687
      %777 = vmatpush.msra.mxu0 %v686
      %778 = vmatpush.msra.mxu0 %v685
      %779 = vmatpush.msra.mxu0 %v684
      %780 = vmatmul.f32.gmra.mxu0 %v762
      %v781 = vpop.f32.mrf.mxu0
      %v782 = vadd.f32 %v753, %v781
      %783 = vdwg.mxu0
      %784 = vmatpush.msra.mxu0 0.0
      %785 = vmatpush.msra.mxu0 0.0
      %786 = vmatpush.msra.mxu0 0.0
      %787 = vmatpush.msra.mxu0 0.0
      %788 = vmatpush.msra.mxu0 0.0
      %789 = vmatpush.msra.mxu0 0.0
      %790 = vmatpush.msra.mxu0 0.0
      %791 = vmatpush.msra.mxu0 0.0
      %792 = vmatpush.msra.mxu0 0.0
      %793 = vmatpush.msra.mxu0 0.0
      %794 = vmatpush.msra.mxu0 0.0
      %795 = vmatpush.msra.mxu0 0.0
      %796 = vmatpush.msra.mxu0 %v691
      %797 = vmatpush.msra.mxu0 %v690
      %798 = vmatpush.msra.mxu0 %v689
      %799 = vmatpush.msra.mxu0 %v688
      %800 = vmatmul.f32.gmra.mxu0 %v762
      %v801 = vpop.f32.mrf.mxu0
      %v802 = vadd.f32 %v754, %v801
      %803 = vdwg.mxu0
      %804 = vmatpush.msra.mxu0 0.0
      %805 = vmatpush.msra.mxu0 0.0
      %806 = vmatpush.msra.mxu0 0.0
      %807 = vmatpush.msra.mxu0 0.0
      %808 = vmatpush.msra.mxu0 0.0
      %809 = vmatpush.msra.mxu0 0.0
      %810 = vmatpush.msra.mxu0 0.0
      %811 = vmatpush.msra.mxu0 0.0
      %812 = vmatpush.msra.mxu0 0.0
      %813 = vmatpush.msra.mxu0 0.0
      %814 = vmatpush.msra.mxu0 0.0
      %815 = vmatpush.msra.mxu0 0.0
      %816 = vmatpush.msra.mxu0 %v695
      %817 = vmatpush.msra.mxu0 %v694
      %818 = vmatpush.msra.mxu0 %v693
      %819 = vmatpush.msra.mxu0 %v692
      %820 = vmatmul.f32.gmra.mxu0 %v762
      %v821 = vpop.f32.mrf.mxu0
      %v822 = vadd.f32 %v755, %v821
      %823 = vdwg.mxu0
      %824 = vmatpush.msra.mxu0 0.0
      %825 = vmatpush.msra.mxu0 0.0
      %826 = vmatpush.msra.mxu0 0.0
      %827 = vmatpush.msra.mxu0 0.0
      %828 = vmatpush.msra.mxu0 0.0
      %829 = vmatpush.msra.mxu0 0.0
      %830 = vmatpush.msra.mxu0 0.0
      %831 = vmatpush.msra.mxu0 0.0
      %832 = vmatpush.msra.mxu0 0.0
      %833 = vmatpush.msra.mxu0 0.0
      %834 = vmatpush.msra.mxu0 0.0
      %835 = vmatpush.msra.mxu0 0.0
      %836 = vmatpush.msra.mxu0 %v699
      %837 = vmatpush.msra.mxu0 %v698
      %838 = vmatpush.msra.mxu0 %v697
      %839 = vmatpush.msra.mxu0 %v696
      %840 = vmatmul.f32.gmra.mxu0 %v762
      %v841 = vpop.f32.mrf.mxu0
      %v842 = vadd.f32 %v756, %v841
      %843 = vdwg.mxu0
      %v848 = vperm.slane %v736, 0
      %v849 = vperm.slane %v737, 0
      %v850 = vperm.slane %v738, 0
      %v851 = vperm.slane %v739, 0
      %856 = vmatpush.msra.mxu0 0.0
      %857 = vmatpush.msra.mxu0 0.0
      %858 = vmatpush.msra.mxu0 0.0
      %859 = vmatpush.msra.mxu0 0.0
      %860 = vmatpush.msra.mxu0 0.0
      %861 = vmatpush.msra.mxu0 0.0
      %862 = vmatpush.msra.mxu0 0.0
      %863 = vmatpush.msra.mxu0 0.0
      %864 = vmatpush.msra.mxu0 0.0
      %865 = vmatpush.msra.mxu0 0.0
      %866 = vmatpush.msra.mxu0 0.0
      %867 = vmatpush.msra.mxu0 0.0
      %868 = vmatpush.msra.mxu0 %v703
      %869 = vmatpush.msra.mxu0 %v702
      %870 = vmatpush.msra.mxu0 %v701
      %871 = vmatpush.msra.mxu0 %v700
      %872 = vmatmul.f32.gmra.mxu0 %v762
      %v873 = vpop.f32.mrf.mxu0
      %v874 = vadd.f32 %v848, %v873
      %875 = vdwg.mxu0
      %876 = vmatpush.msra.mxu0 0.0
      %877 = vmatpush.msra.mxu0 0.0
      %878 = vmatpush.msra.mxu0 0.0
      %879 = vmatpush.msra.mxu0 0.0
      %880 = vmatpush.msra.mxu0 0.0
      %881 = vmatpush.msra.mxu0 0.0
      %882 = vmatpush.msra.mxu0 0.0
      %883 = vmatpush.msra.mxu0 0.0
      %884 = vmatpush.msra.mxu0 0.0
      %885 = vmatpush.msra.mxu0 0.0
      %886 = vmatpush.msra.mxu0 0.0
      %887 = vmatpush.msra.mxu0 0.0
      %888 = vmatpush.msra.mxu0 %v707
      %889 = vmatpush.msra.mxu0 %v706
      %890 = vmatpush.msra.mxu0 %v705
      %891 = vmatpush.msra.mxu0 %v704
      %892 = vmatmul.f32.gmra.mxu0 %v762
      %v893 = vpop.f32.mrf.mxu0
      %v894 = vadd.f32 %v849, %v893
      %895 = vdwg.mxu0
      %896 = vmatpush.msra.mxu0 0.0
      %897 = vmatpush.msra.mxu0 0.0
      %898 = vmatpush.msra.mxu0 0.0
      %899 = vmatpush.msra.mxu0 0.0
      %900 = vmatpush.msra.mxu0 0.0
      %901 = vmatpush.msra.mxu0 0.0
      %902 = vmatpush.msra.mxu0 0.0
      %903 = vmatpush.msra.mxu0 0.0
      %904 = vmatpush.msra.mxu0 0.0
      %905 = vmatpush.msra.mxu0 0.0
      %906 = vmatpush.msra.mxu0 0.0
      %907 = vmatpush.msra.mxu0 0.0
      %908 = vmatpush.msra.mxu0 %v711
      %909 = vmatpush.msra.mxu0 %v710
      %910 = vmatpush.msra.mxu0 %v709
      %911 = vmatpush.msra.mxu0 %v708
      %912 = vmatmul.f32.gmra.mxu0 %v762
      %v913 = vpop.f32.mrf.mxu0
      %v914 = vadd.f32 %v850, %v913
      %915 = vdwg.mxu0
      %916 = vmatpush.msra.mxu0 0.0
      %917 = vmatpush.msra.mxu0 0.0
      %918 = vmatpush.msra.mxu0 0.0
      %919 = vmatpush.msra.mxu0 0.0
      %920 = vmatpush.msra.mxu0 0.0
      %921 = vmatpush.msra.mxu0 0.0
      %922 = vmatpush.msra.mxu0 0.0
      %923 = vmatpush.msra.mxu0 0.0
      %924 = vmatpush.msra.mxu0 0.0
      %925 = vmatpush.msra.mxu0 0.0
      %926 = vmatpush.msra.mxu0 0.0
      %927 = vmatpush.msra.mxu0 0.0
      %928 = vmatpush.msra.mxu0 %v715
      %929 = vmatpush.msra.mxu0 %v714
      %930 = vmatpush.msra.mxu0 %v713
      %931 = vmatpush.msra.mxu0 %v712
      %932 = vmatmul.f32.gmra.mxu0 %v762
      %v933 = vpop.f32.mrf.mxu0
      %v934 = vadd.f32 %v851, %v933
      %935 = vdwg.mxu0
      %v940 = vperm.slane %v740, 0
      %v941 = vperm.slane %v741, 0
      %v942 = vperm.slane %v742, 0
      %v943 = vperm.slane %v743, 0
      %948 = vmatpush.msra.mxu0 0.0
      %949 = vmatpush.msra.mxu0 0.0
      %950 = vmatpush.msra.mxu0 0.0
      %951 = vmatpush.msra.mxu0 0.0
      %952 = vmatpush.msra.mxu0 0.0
      %953 = vmatpush.msra.mxu0 0.0
      %954 = vmatpush.msra.mxu0 0.0
      %955 = vmatpush.msra.mxu0 0.0
      %956 = vmatpush.msra.mxu0 0.0
      %957 = vmatpush.msra.mxu0 0.0
      %958 = vmatpush.msra.mxu0 0.0
      %959 = vmatpush.msra.mxu0 0.0
      %960 = vmatpush.msra.mxu0 %v719
      %961 = vmatpush.msra.mxu0 %v718
      %962 = vmatpush.msra.mxu0 %v717
      %963 = vmatpush.msra.mxu0 %v716
      %964 = vmatmul.f32.gmra.mxu0 %v762
      %v965 = vpop.f32.mrf.mxu0
      %v966 = vadd.f32 %v940, %v965
      %967 = vdwg.mxu0
      %968 = vmatpush.msra.mxu0 0.0
      %969 = vmatpush.msra.mxu0 0.0
      %970 = vmatpush.msra.mxu0 0.0
      %971 = vmatpush.msra.mxu0 0.0
      %972 = vmatpush.msra.mxu0 0.0
      %973 = vmatpush.msra.mxu0 0.0
      %974 = vmatpush.msra.mxu0 0.0
      %975 = vmatpush.msra.mxu0 0.0
      %976 = vmatpush.msra.mxu0 0.0
      %977 = vmatpush.msra.mxu0 0.0
      %978 = vmatpush.msra.mxu0 0.0
      %979 = vmatpush.msra.mxu0 0.0
      %980 = vmatpush.msra.mxu0 %v723
      %981 = vmatpush.msra.mxu0 %v722
      %982 = vmatpush.msra.mxu0 %v721
      %983 = vmatpush.msra.mxu0 %v720
      %984 = vmatmul.f32.gmra.mxu0 %v762
      %v985 = vpop.f32.mrf.mxu0
      %v986 = vadd.f32 %v941, %v985
      %987 = vdwg.mxu0
      %988 = vmatpush.msra.mxu0 0.0
      %989 = vmatpush.msra.mxu0 0.0
      %990 = vmatpush.msra.mxu0 0.0
      %991 = vmatpush.msra.mxu0 0.0
      %992 = vmatpush.msra.mxu0 0.0
      %993 = vmatpush.msra.mxu0 0.0
      %994 = vmatpush.msra.mxu0 0.0
      %995 = vmatpush.msra.mxu0 0.0
      %996 = vmatpush.msra.mxu0 0.0
      %997 = vmatpush.msra.mxu0 0.0
      %998 = vmatpush.msra.mxu0 0.0
      %999 = vmatpush.msra.mxu0 0.0
      %1000 = vmatpush.msra.mxu0 %v727
      %1001 = vmatpush.msra.mxu0 %v726
      %1002 = vmatpush.msra.mxu0 %v725
      %1003 = vmatpush.msra.mxu0 %v724
      %1004 = vmatmul.f32.gmra.mxu0 %v762
      %v1005 = vpop.f32.mrf.mxu0
      %v1006 = vadd.f32 %v942, %v1005
      %1007 = vdwg.mxu0
      %1008 = vmatpush.msra.mxu0 0.0
      %1009 = vmatpush.msra.mxu0 0.0
      %1010 = vmatpush.msra.mxu0 0.0
      %1011 = vmatpush.msra.mxu0 0.0
      %1012 = vmatpush.msra.mxu0 0.0
      %1013 = vmatpush.msra.mxu0 0.0
      %1014 = vmatpush.msra.mxu0 0.0
      %1015 = vmatpush.msra.mxu0 0.0
      %1016 = vmatpush.msra.mxu0 0.0
      %1017 = vmatpush.msra.mxu0 0.0
      %1018 = vmatpush.msra.mxu0 0.0
      %1019 = vmatpush.msra.mxu0 0.0
      %1020 = vmatpush.msra.mxu0 %v731
      %1021 = vmatpush.msra.mxu0 %v730
      %1022 = vmatpush.msra.mxu0 %v729
      %1023 = vmatpush.msra.mxu0 %v728
      %1024 = vmatmul.f32.gmra.mxu0 %v762
      %v1025 = vpop.f32.mrf.mxu0
      %v1026 = vadd.f32 %v943, %v1025
      %1027 = vdwg.mxu0
      %vm1028 = vcmask 64512
      %v1030 = vsel %vm1028, %v782, 0
      %v1033 = vsel %vm1028, %v874, 0
      %1035 = vmatpush.xpose.msra.mxu0 0.0
      %1036 = vmatpush.xpose.msra.mxu0 0.0
      %1037 = vmatpush.xpose.msra.mxu0 0.0
      %1038 = vmatpush.xpose.msra.mxu0 0.0
      %1039 = vmatpush.xpose.msra.mxu0 0.0
      %1040 = vmatpush.xpose.msra.mxu0 0.0
      %1041 = vmatpush.xpose.msra.mxu0 0.0
      %1042 = vmatpush.xpose.msra.mxu0 0.0
      %1043 = vmatpush.xpose.msra.mxu0 0.0
      %1044 = vmatpush.xpose.msra.mxu0 0.0
      %1045 = vmatpush.xpose.msra.mxu0 0.0
      %1046 = vmatpush.xpose.msra.mxu0 0.0
      %1047 = vmatpush.xpose.msra.mxu0 0.0
      %1048 = vmatpush.xpose.msra.mxu0 0.0
      %1049 = vmatpush.xpose.msra.mxu0 0.0
      %1050 = vmatpush.xpose.msra.mxu0 %v1033
      %1051 = vmatmul.f32.gmra.mxu0 %v1030
      %v1052 = vpop.f32.mrf.mxu0
      %v1053 = vadd.f32 0.0, %v1052
      %1054 = vdwg.mxu0
      %v1056 = vsel %vm1028, %v802, 0
      %v1059 = vsel %vm1028, %v894, 0
      %1061 = vmatpush.xpose.msra.mxu0 0.0
      %1062 = vmatpush.xpose.msra.mxu0 0.0
      %1063 = vmatpush.xpose.msra.mxu0 0.0
      %1064 = vmatpush.xpose.msra.mxu0 0.0
      %1065 = vmatpush.xpose.msra.mxu0 0.0
      %1066 = vmatpush.xpose.msra.mxu0 0.0
      %1067 = vmatpush.xpose.msra.mxu0 0.0
      %1068 = vmatpush.xpose.msra.mxu0 0.0
      %1069 = vmatpush.xpose.msra.mxu0 0.0
      %1070 = vmatpush.xpose.msra.mxu0 0.0
      %1071 = vmatpush.xpose.msra.mxu0 0.0
      %1072 = vmatpush.xpose.msra.mxu0 0.0
      %1073 = vmatpush.xpose.msra.mxu0 0.0
      %1074 = vmatpush.xpose.msra.mxu0 0.0
      %1075 = vmatpush.xpose.msra.mxu0 0.0
      %1076 = vmatpush.xpose.msra.mxu0 %v1059
      %1077 = vmatmul.f32.gmra.mxu0 %v1056
      %v1078 = vpop.f32.mrf.mxu0
      %v1079 = vadd.f32 0.0, %v1078
      %1080 = vdwg.mxu0
      %v1082 = vsel %vm1028, %v822, 0
      %v1085 = vsel %vm1028, %v914, 0
      %1087 = vmatpush.xpose.msra.mxu0 0.0
      %1088 = vmatpush.xpose.msra.mxu0 0.0
      %1089 = vmatpush.xpose.msra.mxu0 0.0
      %1090 = vmatpush.xpose.msra.mxu0 0.0
      %1091 = vmatpush.xpose.msra.mxu0 0.0
      %1092 = vmatpush.xpose.msra.mxu0 0.0
      %1093 = vmatpush.xpose.msra.mxu0 0.0
      %1094 = vmatpush.xpose.msra.mxu0 0.0
      %1095 = vmatpush.xpose.msra.mxu0 0.0
      %1096 = vmatpush.xpose.msra.mxu0 0.0
      %1097 = vmatpush.xpose.msra.mxu0 0.0
      %1098 = vmatpush.xpose.msra.mxu0 0.0
      %1099 = vmatpush.xpose.msra.mxu0 0.0
      %1100 = vmatpush.xpose.msra.mxu0 0.0
      %1101 = vmatpush.xpose.msra.mxu0 0.0
      %1102 = vmatpush.xpose.msra.mxu0 %v1085
      %1103 = vmatmul.f32.gmra.mxu0 %v1082
      %v1104 = vpop.f32.mrf.mxu0
      %v1105 = vadd.f32 0.0, %v1104
      %1106 = vdwg.mxu0
      %v1108 = vsel %vm1028, %v842, 0
      %v1111 = vsel %vm1028, %v934, 0
      %1113 = vmatpush.xpose.msra.mxu0 0.0
      %1114 = vmatpush.xpose.msra.mxu0 0.0
      %1115 = vmatpush.xpose.msra.mxu0 0.0
      %1116 = vmatpush.xpose.msra.mxu0 0.0
      %1117 = vmatpush.xpose.msra.mxu0 0.0
      %1118 = vmatpush.xpose.msra.mxu0 0.0
      %1119 = vmatpush.xpose.msra.mxu0 0.0
      %1120 = vmatpush.xpose.msra.mxu0 0.0
      %1121 = vmatpush.xpose.msra.mxu0 0.0
      %1122 = vmatpush.xpose.msra.mxu0 0.0
      %1123 = vmatpush.xpose.msra.mxu0 0.0
      %1124 = vmatpush.xpose.msra.mxu0 0.0
      %1125 = vmatpush.xpose.msra.mxu0 0.0
      %1126 = vmatpush.xpose.msra.mxu0 0.0
      %1127 = vmatpush.xpose.msra.mxu0 0.0
      %1128 = vmatpush.xpose.msra.mxu0 %v1111
      %1129 = vmatmul.f32.gmra.mxu0 %v1108
      %v1130 = vpop.f32.mrf.mxu0
      %v1131 = vadd.f32 0.0, %v1130
      %1132 = vdwg.mxu0
      %v1133 = vmul.f32 %v1053, 0.35355338
      %v1134 = vmul.f32 %v1079, 0.35355338
      %v1135 = vmul.f32 %v1105, 0.35355338
      %v1136 = vmul.f32 %v1131, 0.35355338
      %v1137 = vsel %vm1028, %v1133, -inf
      %1138 = vmax.xlane.f32.xlu0 %v1137
      %v1139 = vpop.xlane.xlu0 %1138
      %v1140 = vsel %vm1028, %v1134, -inf
      %1141 = vmax.xlane.f32.xlu0 %v1140
      %v1142 = vpop.xlane.xlu0 %1141
      %v1143 = vsel %vm1028, %v1135, -inf
      %1144 = vmax.xlane.f32.xlu0 %v1143
      %v1145 = vpop.xlane.xlu0 %1144
      %v1146 = vsel %vm1028, %v1136, -inf
      %1147 = vmax.xlane.f32.xlu0 %v1146
      %v1148 = vpop.xlane.xlu0 %1147
      %v1149 = vsub.f32 %v1133, %v1139
      %v1150 = vsub.f32 %v1134, %v1142
      %v1151 = vsub.f32 %v1135, %v1145
      %v1152 = vsub.f32 %v1136, %v1148
      %v1153 = vmul.f32 %v1149, 1.442695
      %v1154 = vpow.pop %v1153
      %v1155 = vmul.f32 %v1150, 1.442695
      %v1156 = vpow.pop %v1155
      %v1157 = vmul.f32 %v1151, 1.442695
      %v1158 = vpow.pop %v1157
      %v1159 = vmul.f32 %v1152, 1.442695
      %v1160 = vpow.pop %v1159
      %v1161 = vsel %vm1028, %v1154, 0.0
      %1162 = vadd.xlane.f32.xlu0 %v1161
      %v1163 = vpop.xlane.xlu0 %1162
      %v1164 = vsel %vm1028, %v1156, 0.0
      %1165 = vadd.xlane.f32.xlu0 %v1164
      %v1166 = vpop.xlane.xlu0 %1165
      %v1167 = vsel %vm1028, %v1158, 0.0
      %1168 = vadd.xlane.f32.xlu0 %v1167
      %v1169 = vpop.xlane.xlu0 %1168
      %v1170 = vsel %vm1028, %v1160, 0.0
      %1171 = vadd.xlane.f32.xlu0 %v1170
      %v1172 = vpop.xlane.xlu0 %1171
      %v1173 = vrcp.pop %v1163
      %v1174 = vmul.f32 %v1163, %v1173
      %v1175 = vsub.f32 1.0, %v1174
      %v1176 = vmul.f32 %v1173, %v1175
      %v1177 = vadd.f32 %v1173, %v1176
      %vm1178 = vweird.f32 %v1163
      %vm1179 = vweird.f32 %v1173
      %vm1180 = vmor %vm1178, %vm1179
      %v1181 = vsel %vm1180, %v1173, %v1177
      %v1182 = vand.u32 2147483647, %v1163
      %vm1183 = vcmp.eq.f32.partialorder %v1182, 8.507059e+37
      %v1184 = vand.u32 %v1163, 2147483648
      %v1185 = vor.u32 1.1754944e-38, %v1184
      %v1186 = vsel %vm1183, %v1185, %v1181
      %v1187 = vmul.f32 %v1154, %v1186
      %v1188 = vrcp.pop %v1166
      %v1189 = vmul.f32 %v1166, %v1188
      %v1190 = vsub.f32 1.0, %v1189
      %v1191 = vmul.f32 %v1188, %v1190
      %v1192 = vadd.f32 %v1188, %v1191
      %vm1193 = vweird.f32 %v1166
      %vm1194 = vweird.f32 %v1188
      %vm1195 = vmor %vm1193, %vm1194
      %v1196 = vsel %vm1195, %v1188, %v1192
      %v1197 = vand.u32 2147483647, %v1166
      %vm1198 = vcmp.eq.f32.partialorder %v1197, 8.507059e+37
      %v1199 = vand.u32 %v1166, 2147483648
      %v1200 = vor.u32 1.1754944e-38, %v1199
      %v1201 = vsel %vm1198, %v1200, %v1196
      %v1202 = vmul.f32 %v1156, %v1201
      %v1203 = vrcp.pop %v1169
      %v1204 = vmul.f32 %v1169, %v1203
      %v1205 = vsub.f32 1.0, %v1204
      %v1206 = vmul.f32 %v1203, %v1205
      %v1207 = vadd.f32 %v1203, %v1206
      %vm1208 = vweird.f32 %v1169
      %vm1209 = vweird.f32 %v1203
      %vm1210 = vmor %vm1208, %vm1209
      %v1211 = vsel %vm1210, %v1203, %v1207
      %v1212 = vand.u32 2147483647, %v1169
      %vm1213 = vcmp.eq.f32.partialorder %v1212, 8.507059e+37
      %v1214 = vand.u32 %v1169, 2147483648
      %v1215 = vor.u32 1.1754944e-38, %v1214
      %v1216 = vsel %vm1213, %v1215, %v1211
      %v1217 = vmul.f32 %v1158, %v1216
      %v1218 = vrcp.pop %v1172
      %v1219 = vmul.f32 %v1172, %v1218
      %v1220 = vsub.f32 1.0, %v1219
      %v1221 = vmul.f32 %v1218, %v1220
      %v1222 = vadd.f32 %v1218, %v1221
      %vm1223 = vweird.f32 %v1172
      %vm1224 = vweird.f32 %v1218
      %vm1225 = vmor %vm1223, %vm1224
      %v1226 = vsel %vm1225, %v1218, %v1222
      %v1227 = vand.u32 2147483647, %v1172
      %vm1228 = vcmp.eq.f32.partialorder %v1227, 8.507059e+37
      %v1229 = vand.u32 %v1172, 2147483648
      %v1230 = vor.u32 1.1754944e-38, %v1229
      %v1231 = vsel %vm1228, %v1230, %v1226
      %v1232 = vmul.f32 %v1160, %v1231
      %v1234 = vsel %vm1028, %v1187, 0
      %1236 = vmatpush.msra.mxu0 0.0
      %1237 = vmatpush.msra.mxu0 0.0
      %1238 = vmatpush.msra.mxu0 0.0
      %1239 = vmatpush.msra.mxu0 0.0
      %1240 = vmatpush.msra.mxu0 0.0
      %1241 = vmatpush.msra.mxu0 0.0
      %1242 = vmatpush.msra.mxu0 0.0
      %1243 = vmatpush.msra.mxu0 0.0
      %1244 = vmatpush.msra.mxu0 0.0
      %1245 = vmatpush.msra.mxu0 0.0
      %1246 = vmatpush.msra.mxu0 0.0
      %1247 = vmatpush.msra.mxu0 0.0
      %1248 = vmatpush.msra.mxu0 0.0
      %1249 = vmatpush.msra.mxu0 0.0
      %1250 = vmatpush.msra.mxu0 0.0
      %1251 = vmatpush.msra.mxu0 %v966
      %1252 = vmatmul.f32.gmra.mxu0 %v1234
      %v1253 = vpop.f32.mrf.mxu0
      %v1254 = vadd.f32 0.0, %v1253
      %1255 = vdwg.mxu0
      %v1257 = vsel %vm1028, %v1202, 0
      %1259 = vmatpush.msra.mxu0 0.0
      %1260 = vmatpush.msra.mxu0 0.0
      %1261 = vmatpush.msra.mxu0 0.0
      %1262 = vmatpush.msra.mxu0 0.0
      %1263 = vmatpush.msra.mxu0 0.0
      %1264 = vmatpush.msra.mxu0 0.0
      %1265 = vmatpush.msra.mxu0 0.0
      %1266 = vmatpush.msra.mxu0 0.0
      %1267 = vmatpush.msra.mxu0 0.0
      %1268 = vmatpush.msra.mxu0 0.0
      %1269 = vmatpush.msra.mxu0 0.0
      %1270 = vmatpush.msra.mxu0 0.0
      %1271 = vmatpush.msra.mxu0 0.0
      %1272 = vmatpush.msra.mxu0 0.0
      %1273 = vmatpush.msra.mxu0 0.0
      %1274 = vmatpush.msra.mxu0 %v986
      %1275 = vmatmul.f32.gmra.mxu0 %v1257
      %v1276 = vpop.f32.mrf.mxu0
      %v1277 = vadd.f32 0.0, %v1276
      %1278 = vdwg.mxu0
      %v1280 = vsel %vm1028, %v1217, 0
      %1282 = vmatpush.msra.mxu0 0.0
      %1283 = vmatpush.msra.mxu0 0.0
      %1284 = vmatpush.msra.mxu0 0.0
      %1285 = vmatpush.msra.mxu0 0.0
      %1286 = vmatpush.msra.mxu0 0.0
      %1287 = vmatpush.msra.mxu0 0.0
      %1288 = vmatpush.msra.mxu0 0.0
      %1289 = vmatpush.msra.mxu0 0.0
      %1290 = vmatpush.msra.mxu0 0.0
      %1291 = vmatpush.msra.mxu0 0.0
      %1292 = vmatpush.msra.mxu0 0.0
      %1293 = vmatpush.msra.mxu0 0.0
      %1294 = vmatpush.msra.mxu0 0.0
      %1295 = vmatpush.msra.mxu0 0.0
      %1296 = vmatpush.msra.mxu0 0.0
      %1297 = vmatpush.msra.mxu0 %v1006
      %1298 = vmatmul.f32.gmra.mxu0 %v1280
      %v1299 = vpop.f32.mrf.mxu0
      %v1300 = vadd.f32 0.0, %v1299
      %1301 = vdwg.mxu0
      %v1303 = vsel %vm1028, %v1232, 0
      %1305 = vmatpush.msra.mxu0 0.0
      %1306 = vmatpush.msra.mxu0 0.0
      %1307 = vmatpush.msra.mxu0 0.0
      %1308 = vmatpush.msra.mxu0 0.0
      %1309 = vmatpush.msra.mxu0 0.0
      %1310 = vmatpush.msra.mxu0 0.0
      %1311 = vmatpush.msra.mxu0 0.0
      %1312 = vmatpush.msra.mxu0 0.0
      %1313 = vmatpush.msra.mxu0 0.0
      %1314 = vmatpush.msra.mxu0 0.0
      %1315 = vmatpush.msra.mxu0 0.0
      %1316 = vmatpush.msra.mxu0 0.0
      %1317 = vmatpush.msra.mxu0 0.0
      %1318 = vmatpush.msra.mxu0 0.0
      %1319 = vmatpush.msra.mxu0 0.0
      %1320 = vmatpush.msra.mxu0 %v1026
      %1321 = vmatmul.f32.gmra.mxu0 %v1303
      %v1322 = vpop.f32.mrf.mxu0
      %v1323 = vadd.f32 0.0, %v1322
      %1324 = vdwg.mxu0
      %v1326 = vsel %vm1028, %v1254, 0
      %1328 = vmatpush.msra.mxu0 0.0
      %1329 = vmatpush.msra.mxu0 0.0
      %1330 = vmatpush.msra.mxu0 0.0
      %1331 = vmatpush.msra.mxu0 0.0
      %1332 = vmatpush.msra.mxu0 0.0
      %1333 = vmatpush.msra.mxu0 0.0
      %1334 = vmatpush.msra.mxu0 0.0
      %1335 = vmatpush.msra.mxu0 0.0
      %1336 = vmatpush.msra.mxu0 0.0
      %1337 = vmatpush.msra.mxu0 0.0
      %1338 = vmatpush.msra.mxu0 0.0
      %1339 = vmatpush.msra.mxu0 0.0
      %1340 = vmatpush.msra.mxu0 0.0
      %1341 = vmatpush.msra.mxu0 0.0
      %1342 = vmatpush.msra.mxu0 0.0
      %1343 = vmatpush.msra.mxu0 %v744
      %1344 = vmatmul.f32.gmra.mxu0 %v1326
      %v1345 = vpop.f32.mrf.mxu0
      %v1346 = vadd.f32 0.0, %v1345
      %1347 = vdwg.mxu0
      %v1349 = vsel %vm1028, %v1277, 0
      %1351 = vmatpush.msra.mxu0 0.0
      %1352 = vmatpush.msra.mxu0 0.0
      %1353 = vmatpush.msra.mxu0 0.0
      %1354 = vmatpush.msra.mxu0 0.0
      %1355 = vmatpush.msra.mxu0 0.0
      %1356 = vmatpush.msra.mxu0 0.0
      %1357 = vmatpush.msra.mxu0 0.0
      %1358 = vmatpush.msra.mxu0 0.0
      %1359 = vmatpush.msra.mxu0 0.0
      %1360 = vmatpush.msra.mxu0 0.0
      %1361 = vmatpush.msra.mxu0 0.0
      %1362 = vmatpush.msra.mxu0 0.0
      %1363 = vmatpush.msra.mxu0 0.0
      %1364 = vmatpush.msra.mxu0 0.0
      %1365 = vmatpush.msra.mxu0 0.0
      %1366 = vmatpush.msra.mxu0 %v745
      %1367 = vmatmul.f32.gmra.mxu0 %v1349
      %v1368 = vpop.f32.mrf.mxu0
      %v1369 = vadd.f32 0.0, %v1368
      %1370 = vdwg.mxu0
      %v1372 = vsel %vm1028, %v1300, 0
      %1374 = vmatpush.msra.mxu0 0.0
      %1375 = vmatpush.msra.mxu0 0.0
      %1376 = vmatpush.msra.mxu0 0.0
      %1377 = vmatpush.msra.mxu0 0.0
      %1378 = vmatpush.msra.mxu0 0.0
      %1379 = vmatpush.msra.mxu0 0.0
      %1380 = vmatpush.msra.mxu0 0.0
      %1381 = vmatpush.msra.mxu0 0.0
      %1382 = vmatpush.msra.mxu0 0.0
      %1383 = vmatpush.msra.mxu0 0.0
      %1384 = vmatpush.msra.mxu0 0.0
      %1385 = vmatpush.msra.mxu0 0.0
      %1386 = vmatpush.msra.mxu0 0.0
      %1387 = vmatpush.msra.mxu0 0.0
      %1388 = vmatpush.msra.mxu0 0.0
      %1389 = vmatpush.msra.mxu0 %v746
      %1390 = vmatmul.f32.gmra.mxu0 %v1372
      %v1391 = vpop.f32.mrf.mxu0
      %v1392 = vadd.f32 0.0, %v1391
      %1393 = vdwg.mxu0
      %v1395 = vsel %vm1028, %v1323, 0
      %1397 = vmatpush.msra.mxu0 0.0
      %1398 = vmatpush.msra.mxu0 0.0
      %1399 = vmatpush.msra.mxu0 0.0
      %1400 = vmatpush.msra.mxu0 0.0
      %1401 = vmatpush.msra.mxu0 0.0
      %1402 = vmatpush.msra.mxu0 0.0
      %1403 = vmatpush.msra.mxu0 0.0
      %1404 = vmatpush.msra.mxu0 0.0
      %1405 = vmatpush.msra.mxu0 0.0
      %1406 = vmatpush.msra.mxu0 0.0
      %1407 = vmatpush.msra.mxu0 0.0
      %1408 = vmatpush.msra.mxu0 0.0
      %1409 = vmatpush.msra.mxu0 0.0
      %1410 = vmatpush.msra.mxu0 0.0
      %1411 = vmatpush.msra.mxu0 0.0
      %1412 = vmatpush.msra.mxu0 %v747
      %1413 = vmatmul.f32.gmra.mxu0 %v1395
      %v1414 = vpop.f32.mrf.mxu0
      %v1415 = vadd.f32 0.0, %v1414
      %1416 = vdwg.mxu0
      %v1417 = vadd.f32 %v1346, %v1369
      %v1418 = vadd.f32 %v1417, %v1392
      %v1419 = vadd.f32 %v1418, %v1415
      %v1421 = vperm.slane %v748, 0
      %v1423 = vadd.f32 %v1419, %v1421
      %v1424 = vadd.f32 %v642, %v1423
      %v1425 = vld [vmem:[%s8] sm:$0x1]
      %v1426 = vld [vmem:[%s9] sm:$0x1]
      %v1427 = vsel %vm646, %v1424, 0.0
      %1428 = vadd.xlane.f32.xlu0 %v1427
      %v1429 = vpop.xlane.xlu0 %1428
      %v1430 = vmul.f32 %v1429, %v656
      %v1431 = vsub.f32 %v1424, %v1430
      %v1432 = vmul.f32 %v1431, %v1431
      %v1433 = vsel %vm646, %v1432, 0.0
      %1434 = vadd.xlane.f32.xlu0 %v1433
      %v1435 = vpop.xlane.xlu0 %1434
      %v1436 = vmul.f32 %v1435, %v656
      %v1437 = vadd.f32 %v1436, 1e-05
      %v1438 = vrsqrt.pop %v1437
      %v1439 = vmul.f32 %v1438, %v1437
      %v1440 = vmul.f32 %v1439, %v1438
      %v1441 = vmul.f32 0.5, %v1440
      %v1442 = vsub.f32 1.5, %v1441
      %v1443 = vmul.f32 %v1438, %v1442
      %vm1444 = vweird.f32 %v1437
      %vm1445 = vweird.f32 %v1438
      %vm1446 = vmor %vm1444, %vm1445
      %v1447 = vsel %vm1446, %v1438, %v1443
      %v1448 = vmul.f32 %v1431, %v1447
      %v1450 = vperm.slane %v1425, 0
      %v1452 = vmul.f32 %v1448, %v1450
      %v1454 = vperm.slane %v1426, 0
      %v1456 = vadd.f32 %v1452, %v1454
      %v1457 = vld [vmem:[%s10] sm:$0xff]
      %v1458 = vld [vmem:[%s10 + $0x8] sm:$0xff]
      %v1459 = vld [vmem:[%s10 + $0x10] sm:$0xff]
      %v1460 = vld [vmem:[%s10 + $0x18] sm:$0xff]
      %v1461 = vld [vmem:[%s10 + $0x20] sm:$0xff]
      %v1462 = vld [vmem:[%s10 + $0x28] sm:$0xff]
      %v1463 = vld [vmem:[%s10 + $0x30] sm:$0xff]
      %v1464 = vld [vmem:[%s10 + $0x38] sm:$0xff]
      %v1465 = vld [vmem:[%s10 + $0x40] sm:$0xff]
      %v1466 = vld [vmem:[%s10 + $0x48] sm:$0xff]
      %v1467 = vld [vmem:[%s10 + $0x50] sm:$0xff]
      %v1468 = vld [vmem:[%s10 + $0x58] sm:$0xff]
      %v1469 = vld [vmem:[%s10 + $0x60] sm:$0xff]
      %v1470 = vld [vmem:[%s10 + $0x68] sm:$0xff]
      %v1471 = vld [vmem:[%s10 + $0x70] sm:$0xff]
      %v1472 = vld [vmem:[%s10 + $0x78] sm:$0xff]
      %v1473 = vld [vmem:[%s10 + $0x80] sm:$0xff]
      %v1474 = vld [vmem:[%s10 + $0x88] sm:$0xff]
      %v1475 = vld [vmem:[%s10 + $0x90] sm:$0xff]
      %v1476 = vld [vmem:[%s10 + $0x98] sm:$0xff]
      %v1477 = vld [vmem:[%s10 + $0xa0] sm:$0xff]
      %v1478 = vld [vmem:[%s10 + $0xa8] sm:$0xff]
      %v1479 = vld [vmem:[%s10 + $0xb0] sm:$0xff]
      %v1480 = vld [vmem:[%s10 + $0xb8] sm:$0xff]
      %v1481 = vld [vmem:[%s10 + $0xc0] sm:$0xff]
      %v1482 = vld [vmem:[%s10 + $0xc8] sm:$0xff]
      %v1483 = vld [vmem:[%s10 + $0xd0] sm:$0xff]
      %v1484 = vld [vmem:[%s10 + $0xd8] sm:$0xff]
      %v1485 = vld [vmem:[%s10 + $0xe0] sm:$0xff]
      %v1486 = vld [vmem:[%s10 + $0xe8] sm:$0xff]
      %v1487 = vld [vmem:[%s10 + $0xf0] sm:$0xff]
      %v1488 = vld [vmem:[%s10 + $0xf8] sm:$0xff]
      %v1489 = vld [vmem:[%s10 + $0x100] sm:$0xff]
      %v1490 = vld [vmem:[%s10 + $0x108] sm:$0xff]
      %v1491 = vld [vmem:[%s10 + $0x110] sm:$0xff]
      %v1492 = vld [vmem:[%s10 + $0x118] sm:$0xff]
      %v1493 = vld [vmem:[%s10 + $0x120] sm:$0xff]
      %v1494 = vld [vmem:[%s10 + $0x128] sm:$0xff]
      %v1495 = vld [vmem:[%s10 + $0x130] sm:$0xff]
      %v1496 = vld [vmem:[%s10 + $0x138] sm:$0xff]
      %v1497 = vld [vmem:[%s10 + $0x140] sm:$0xff]
      %v1498 = vld [vmem:[%s10 + $0x148] sm:$0xff]
      %v1499 = vld [vmem:[%s10 + $0x150] sm:$0xff]
      %v1500 = vld [vmem:[%s10 + $0x158] sm:$0xff]
      %v1501 = vld [vmem:[%s10 + $0x160] sm:$0xff]
      %v1502 = vld [vmem:[%s10 + $0x168] sm:$0xff]
      %v1503 = vld [vmem:[%s10 + $0x170] sm:$0xff]
      %v1504 = vld [vmem:[%s10 + $0x178] sm:$0xff]
      %v1505 = vld [vmem:[%s11] sm:$0x1]
      %v1506 = vld [vmem:[%s11 + $0x1] sm:$0x1]
      %v1507 = vld [vmem:[%s11 + $0x2] sm:$0x1]
      %v1508 = vld [vmem:[%s11 + $0x3] sm:$0x1]
      %v1509 = vld [vmem:[%s11 + $0x4] sm:$0x1]
      %v1510 = vld [vmem:[%s11 + $0x5] sm:$0x1]
      %v1511 = vld [vmem:[%s11 + $0x6] sm:$0x1]
      %v1512 = vld [vmem:[%s11 + $0x7] sm:$0x1]
      %v1513 = vld [vmem:[%s11 + $0x8] sm:$0x1]
      %v1514 = vld [vmem:[%s11 + $0x9] sm:$0x1]
      %v1515 = vld [vmem:[%s11 + $0xa] sm:$0x1]
      %v1516 = vld [vmem:[%s11 + $0xb] sm:$0x1]
      %v1517 = vld [vmem:[%s12] sm:$0xff]
      %v1518 = vld [vmem:[%s12 + $0x8] sm:$0xff]
      %v1519 = vld [vmem:[%s12 + $0x10] sm:$0xff]
      %v1520 = vld [vmem:[%s12 + $0x18] sm:$0xff]
      %v1521 = vld [vmem:[%s13] sm:$0x1]
      %v1526 = vperm.slane %v1505, 0
      %v1527 = vperm.slane %v1506, 0
      %v1528 = vperm.slane %v1507, 0
      %v1529 = vperm.slane %v1508, 0
      %v1535 = vsel %vm646, %v1456, 0
      %1537 = vmatpush.msra.mxu0 0.0
      %1538 = vmatpush.msra.mxu0 0.0
      %1539 = vmatpush.msra.mxu0 0.0
      %1540 = vmatpush.msra.mxu0 0.0
      %1541 = vmatpush.msra.mxu0 0.0
      %1542 = vmatpush.msra.mxu0 0.0
      %1543 = vmatpush.msra.mxu0 0.0
      %1544 = vmatpush.msra.mxu0 0.0
      %1545 = vmatpush.msra.mxu0 0.0
      %1546 = vmatpush.msra.mxu0 0.0
      %1547 = vmatpush.msra.mxu0 0.0
      %1548 = vmatpush.msra.mxu0 0.0
      %1549 = vmatpush.msra.mxu0 %v1460
      %1550 = vmatpush.msra.mxu0 %v1459
      %1551 = vmatpush.msra.mxu0 %v1458
      %1552 = vmatpush.msra.mxu0 %v1457
      %1553 = vmatmul.f32.gmra.mxu0 %v1535
      %v1554 = vpop.f32.mrf.mxu0
      %v1555 = vadd.f32 %v1526, %v1554
      %1556 = vdwg.mxu0
      %1557 = vmatpush.msra.mxu0 0.0
      %1558 = vmatpush.msra.mxu0 0.0
      %1559 = vmatpush.msra.mxu0 0.0
      %1560 = vmatpush.msra.mxu0 0.0
      %1561 = vmatpush.msra.mxu0 0.0
      %1562 = vmatpush.msra.mxu0 0.0
      %1563 = vmatpush.msra.mxu0 0.0
      %1564 = vmatpush.msra.mxu0 0.0
      %1565 = vmatpush.msra.mxu0 0.0
      %1566 = vmatpush.msra.mxu0 0.0
      %1567 = vmatpush.msra.mxu0 0.0
      %1568 = vmatpush.msra.mxu0 0.0
      %1569 = vmatpush.msra.mxu0 %v1464
      %1570 = vmatpush.msra.mxu0 %v1463
      %1571 = vmatpush.msra.mxu0 %v1462
      %1572 = vmatpush.msra.mxu0 %v1461
      %1573 = vmatmul.f32.gmra.mxu0 %v1535
      %v1574 = vpop.f32.mrf.mxu0
      %v1575 = vadd.f32 %v1527, %v1574
      %1576 = vdwg.mxu0
      %1577 = vmatpush.msra.mxu0 0.0
      %1578 = vmatpush.msra.mxu0 0.0
      %1579 = vmatpush.msra.mxu0 0.0
      %1580 = vmatpush.msra.mxu0 0.0
      %1581 = vmatpush.msra.mxu0 0.0
      %1582 = vmatpush.msra.mxu0 0.0
      %1583 = vmatpush.msra.mxu0 0.0
      %1584 = vmatpush.msra.mxu0 0.0
      %1585 = vmatpush.msra.mxu0 0.0
      %1586 = vmatpush.msra.mxu0 0.0
      %1587 = vmatpush.msra.mxu0 0.0
      %1588 = vmatpush.msra.mxu0 0.0
      %1589 = vmatpush.msra.mxu0 %v1468
      %1590 = vmatpush.msra.mxu0 %v1467
      %1591 = vmatpush.msra.mxu0 %v1466
      %1592 = vmatpush.msra.mxu0 %v1465
      %1593 = vmatmul.f32.gmra.mxu0 %v1535
      %v1594 = vpop.f32.mrf.mxu0
      %v1595 = vadd.f32 %v1528, %v1594
      %1596 = vdwg.mxu0
      %1597 = vmatpush.msra.mxu0 0.0
      %1598 = vmatpush.msra.mxu0 0.0
      %1599 = vmatpush.msra.mxu0 0.0
      %1600 = vmatpush.msra.mxu0 0.0
      %1601 = vmatpush.msra.mxu0 0.0
      %1602 = vmatpush.msra.mxu0 0.0
      %1603 = vmatpush.msra.mxu0 0.0
      %1604 = vmatpush.msra.mxu0 0.0
      %1605 = vmatpush.msra.mxu0 0.0
      %1606 = vmatpush.msra.mxu0 0.0
      %1607 = vmatpush.msra.mxu0 0.0
      %1608 = vmatpush.msra.mxu0 0.0
      %1609 = vmatpush.msra.mxu0 %v1472
      %1610 = vmatpush.msra.mxu0 %v1471
      %1611 = vmatpush.msra.mxu0 %v1470
      %1612 = vmatpush.msra.mxu0 %v1469
      %1613 = vmatmul.f32.gmra.mxu0 %v1535
      %v1614 = vpop.f32.mrf.mxu0
      %v1615 = vadd.f32 %v1529, %v1614
      %1616 = vdwg.mxu0
      %v1621 = vperm.slane %v1509, 0
      %v1622 = vperm.slane %v1510, 0
      %v1623 = vperm.slane %v1511, 0
      %v1624 = vperm.slane %v1512, 0
      %v1630 = vsel %vm646, %v643, 0
      %1632 = vmatpush.msra.mxu0 0.0
      %1633 = vmatpush.msra.mxu0 0.0
      %1634 = vmatpush.msra.mxu0 0.0
      %1635 = vmatpush.msra.mxu0 0.0
      %1636 = vmatpush.msra.mxu0 0.0
      %1637 = vmatpush.msra.mxu0 0.0
      %1638 = vmatpush.msra.mxu0 0.0
      %1639 = vmatpush.msra.mxu0 0.0
      %1640 = vmatpush.msra.mxu0 0.0
      %1641 = vmatpush.msra.mxu0 0.0
      %1642 = vmatpush.msra.mxu0 0.0
      %1643 = vmatpush.msra.mxu0 0.0
      %1644 = vmatpush.msra.mxu0 %v1476
      %1645 = vmatpush.msra.mxu0 %v1475
      %1646 = vmatpush.msra.mxu0 %v1474
      %1647 = vmatpush.msra.mxu0 %v1473
      %1648 = vmatmul.f32.gmra.mxu0 %v1630
      %v1649 = vpop.f32.mrf.mxu0
      %v1650 = vadd.f32 %v1621, %v1649
      %1651 = vdwg.mxu0
      %1652 = vmatpush.msra.mxu0 0.0
      %1653 = vmatpush.msra.mxu0 0.0
      %1654 = vmatpush.msra.mxu0 0.0
      %1655 = vmatpush.msra.mxu0 0.0
      %1656 = vmatpush.msra.mxu0 0.0
      %1657 = vmatpush.msra.mxu0 0.0
      %1658 = vmatpush.msra.mxu0 0.0
      %1659 = vmatpush.msra.mxu0 0.0
      %1660 = vmatpush.msra.mxu0 0.0
      %1661 = vmatpush.msra.mxu0 0.0
      %1662 = vmatpush.msra.mxu0 0.0
      %1663 = vmatpush.msra.mxu0 0.0
      %1664 = vmatpush.msra.mxu0 %v1480
      %1665 = vmatpush.msra.mxu0 %v1479
      %1666 = vmatpush.msra.mxu0 %v1478
      %1667 = vmatpush.msra.mxu0 %v1477
      %1668 = vmatmul.f32.gmra.mxu0 %v1630
      %v1669 = vpop.f32.mrf.mxu0
      %v1670 = vadd.f32 %v1622, %v1669
      %1671 = vdwg.mxu0
      %1672 = vmatpush.msra.mxu0 0.0
      %1673 = vmatpush.msra.mxu0 0.0
      %1674 = vmatpush.msra.mxu0 0.0
      %1675 = vmatpush.msra.mxu0 0.0
      %1676 = vmatpush.msra.mxu0 0.0
      %1677 = vmatpush.msra.mxu0 0.0
      %1678 = vmatpush.msra.mxu0 0.0
      %1679 = vmatpush.msra.mxu0 0.0
      %1680 = vmatpush.msra.mxu0 0.0
      %1681 = vmatpush.msra.mxu0 0.0
      %1682 = vmatpush.msra.mxu0 0.0
      %1683 = vmatpush.msra.mxu0 0.0
      %1684 = vmatpush.msra.mxu0 %v1484
      %1685 = vmatpush.msra.mxu0 %v1483
      %1686 = vmatpush.msra.mxu0 %v1482
      %1687 = vmatpush.msra.mxu0 %v1481
      %1688 = vmatmul.f32.gmra.mxu0 %v1630
      %v1689 = vpop.f32.mrf.mxu0
      %v1690 = vadd.f32 %v1623, %v1689
      %1691 = vdwg.mxu0
      %1692 = vmatpush.msra.mxu0 0.0
      %1693 = vmatpush.msra.mxu0 0.0
      %1694 = vmatpush.msra.mxu0 0.0
      %1695 = vmatpush.msra.mxu0 0.0
      %1696 = vmatpush.msra.mxu0 0.0
      %1697 = vmatpush.msra.mxu0 0.0
      %1698 = vmatpush.msra.mxu0 0.0
      %1699 = vmatpush.msra.mxu0 0.0
      %1700 = vmatpush.msra.mxu0 0.0
      %1701 = vmatpush.msra.mxu0 0.0
      %1702 = vmatpush.msra.mxu0 0.0
      %1703 = vmatpush.msra.mxu0 0.0
      %1704 = vmatpush.msra.mxu0 %v1488
      %1705 = vmatpush.msra.mxu0 %v1487
      %1706 = vmatpush.msra.mxu0 %v1486
      %1707 = vmatpush.msra.mxu0 %v1485
      %1708 = vmatmul.f32.gmra.mxu0 %v1630
      %v1709 = vpop.f32.mrf.mxu0
      %v1710 = vadd.f32 %v1624, %v1709
      %1711 = vdwg.mxu0
      %v1716 = vperm.slane %v1513, 0
      %v1717 = vperm.slane %v1514, 0
      %v1718 = vperm.slane %v1515, 0
      %v1719 = vperm.slane %v1516, 0
      %1724 = vmatpush.msra.mxu0 0.0
      %1725 = vmatpush.msra.mxu0 0.0
      %1726 = vmatpush.msra.mxu0 0.0
      %1727 = vmatpush.msra.mxu0 0.0
      %1728 = vmatpush.msra.mxu0 0.0
      %1729 = vmatpush.msra.mxu0 0.0
      %1730 = vmatpush.msra.mxu0 0.0
      %1731 = vmatpush.msra.mxu0 0.0
      %1732 = vmatpush.msra.mxu0 0.0
      %1733 = vmatpush.msra.mxu0 0.0
      %1734 = vmatpush.msra.mxu0 0.0
      %1735 = vmatpush.msra.mxu0 0.0
      %1736 = vmatpush.msra.mxu0 %v1492
      %1737 = vmatpush.msra.mxu0 %v1491
      %1738 = vmatpush.msra.mxu0 %v1490
      %1739 = vmatpush.msra.mxu0 %v1489
      %1740 = vmatmul.f32.gmra.mxu0 %v1630
      %v1741 = vpop.f32.mrf.mxu0
      %v1742 = vadd.f32 %v1716, %v1741
      %1743 = vdwg.mxu0
      %1744 = vmatpush.msra.mxu0 0.0
      %1745 = vmatpush.msra.mxu0 0.0
      %1746 = vmatpush.msra.mxu0 0.0
      %1747 = vmatpush.msra.mxu0 0.0
      %1748 = vmatpush.msra.mxu0 0.0
      %1749 = vmatpush.msra.mxu0 0.0
      %1750 = vmatpush.msra.mxu0 0.0
      %1751 = vmatpush.msra.mxu0 0.0
      %1752 = vmatpush.msra.mxu0 0.0
      %1753 = vmatpush.msra.mxu0 0.0
      %1754 = vmatpush.msra.mxu0 0.0
      %1755 = vmatpush.msra.mxu0 0.0
      %1756 = vmatpush.msra.mxu0 %v1496
      %1757 = vmatpush.msra.mxu0 %v1495
      %1758 = vmatpush.msra.mxu0 %v1494
      %1759 = vmatpush.msra.mxu0 %v1493
      %1760 = vmatmul.f32.gmra.mxu0 %v1630
      %v1761 = vpop.f32.mrf.mxu0
      %v1762 = vadd.f32 %v1717, %v1761
      %1763 = vdwg.mxu0
      %1764 = vmatpush.msra.mxu0 0.0
      %1765 = vmatpush.msra.mxu0 0.0
      %1766 = vmatpush.msra.mxu0 0.0
      %1767 = vmatpush.msra.mxu0 0.0
      %1768 = vmatpush.msra.mxu0 0.0
      %1769 = vmatpush.msra.mxu0 0.0
      %1770 = vmatpush.msra.mxu0 0.0
      %1771 = vmatpush.msra.mxu0 0.0
      %1772 = vmatpush.msra.mxu0 0.0
      %1773 = vmatpush.msra.mxu0 0.0
      %1774 = vmatpush.msra.mxu0 0.0
      %1775 = vmatpush.msra.mxu0 0.0
      %1776 = vmatpush.msra.mxu0 %v1500
      %1777 = vmatpush.msra.mxu0 %v1499
      %1778 = vmatpush.msra.mxu0 %v1498
      %1779 = vmatpush.msra.mxu0 %v1497
      %1780 = vmatmul.f32.gmra.mxu0 %v1630
      %v1781 = vpop.f32.mrf.mxu0
      %v1782 = vadd.f32 %v1718, %v1781
      %1783 = vdwg.mxu0
      %1784 = vmatpush.msra.mxu0 0.0
      %1785 = vmatpush.msra.mxu0 0.0
      %1786 = vmatpush.msra.mxu0 0.0
      %1787 = vmatpush.msra.mxu0 0.0
      %1788 = vmatpush.msra.mxu0 0.0
      %1789 = vmatpush.msra.mxu0 0.0
      %1790 = vmatpush.msra.mxu0 0.0
      %1791 = vmatpush.msra.mxu0 0.0
      %1792 = vmatpush.msra.mxu0 0.0
      %1793 = vmatpush.msra.mxu0 0.0
      %1794 = vmatpush.msra.mxu0 0.0
      %1795 = vmatpush.msra.mxu0 0.0
      %1796 = vmatpush.msra.mxu0 %v1504
      %1797 = vmatpush.msra.mxu0 %v1503
      %1798 = vmatpush.msra.mxu0 %v1502
      %1799 = vmatpush.msra.mxu0 %v1501
      %1800 = vmatmul.f32.gmra.mxu0 %v1630
      %v1801 = vpop.f32.mrf.mxu0
      %v1802 = vadd.f32 %v1719, %v1801
      %1803 = vdwg.mxu0
      %v1805 = vsel %vm1028, %v1555, 0
      %v1808 = vsel %vm1028, %v1650, 0
      %1810 = vmatpush.xpose.msra.mxu0 0.0
      %1811 = vmatpush.xpose.msra.mxu0 0.0
      %1812 = vmatpush.xpose.msra.mxu0 0.0
      %1813 = vmatpush.xpose.msra.mxu0 0.0
      %1814 = vmatpush.xpose.msra.mxu0 0.0
      %1815 = vmatpush.xpose.msra.mxu0 0.0
      %1816 = vmatpush.xpose.msra.mxu0 0.0
      %1817 = vmatpush.xpose.msra.mxu0 0.0
      %1818 = vmatpush.xpose.msra.mxu0 0.0
      %1819 = vmatpush.xpose.msra.mxu0 0.0
      %1820 = vmatpush.xpose.msra.mxu0 0.0
      %1821 = vmatpush.xpose.msra.mxu0 0.0
      %1822 = vmatpush.xpose.msra.mxu0 0.0
      %1823 = vmatpush.xpose.msra.mxu0 0.0
      %1824 = vmatpush.xpose.msra.mxu0 0.0
      %1825 = vmatpush.xpose.msra.mxu0 %v1808
      %1826 = vmatmul.f32.gmra.mxu0 %v1805
      %v1827 = vpop.f32.mrf.mxu0
      %v1828 = vadd.f32 0.0, %v1827
      %1829 = vdwg.mxu0
      %v1831 = vsel %vm1028, %v1575, 0
      %v1834 = vsel %vm1028, %v1670, 0
      %1836 = vmatpush.xpose.msra.mxu0 0.0
      %1837 = vmatpush.xpose.msra.mxu0 0.0
      %1838 = vmatpush.xpose.msra.mxu0 0.0
      %1839 = vmatpush.xpose.msra.mxu0 0.0
      %1840 = vmatpush.xpose.msra.mxu0 0.0
      %1841 = vmatpush.xpose.msra.mxu0 0.0
      %1842 = vmatpush.xpose.msra.mxu0 0.0
      %1843 = vmatpush.xpose.msra.mxu0 0.0
      %1844 = vmatpush.xpose.msra.mxu0 0.0
      %1845 = vmatpush.xpose.msra.mxu0 0.0
      %1846 = vmatpush.xpose.msra.mxu0 0.0
      %1847 = vmatpush.xpose.msra.mxu0 0.0
      %1848 = vmatpush.xpose.msra.mxu0 0.0
      %1849 = vmatpush.xpose.msra.mxu0 0.0
      %1850 = vmatpush.xpose.msra.mxu0 0.0
      %1851 = vmatpush.xpose.msra.mxu0 %v1834
      %1852 = vmatmul.f32.gmra.mxu0 %v1831
      %v1853 = vpop.f32.mrf.mxu0
      %v1854 = vadd.f32 0.0, %v1853
      %1855 = vdwg.mxu0
      %v1857 = vsel %vm1028, %v1595, 0
      %v1860 = vsel %vm1028, %v1690, 0
      %1862 = vmatpush.xpose.msra.mxu0 0.0
      %1863 = vmatpush.xpose.msra.mxu0 0.0
      %1864 = vmatpush.xpose.msra.mxu0 0.0
      %1865 = vmatpush.xpose.msra.mxu0 0.0
      %1866 = vmatpush.xpose.msra.mxu0 0.0
      %1867 = vmatpush.xpose.msra.mxu0 0.0
      %1868 = vmatpush.xpose.msra.mxu0 0.0
      %1869 = vmatpush.xpose.msra.mxu0 0.0
      %1870 = vmatpush.xpose.msra.mxu0 0.0
      %1871 = vmatpush.xpose.msra.mxu0 0.0
      %1872 = vmatpush.xpose.msra.mxu0 0.0
      %1873 = vmatpush.xpose.msra.mxu0 0.0
      %1874 = vmatpush.xpose.msra.mxu0 0.0
      %1875 = vmatpush.xpose.msra.mxu0 0.0
      %1876 = vmatpush.xpose.msra.mxu0 0.0
      %1877 = vmatpush.xpose.msra.mxu0 %v1860
      %1878 = vmatmul.f32.gmra.mxu0 %v1857
      %v1879 = vpop.f32.mrf.mxu0
      %v1880 = vadd.f32 0.0, %v1879
      %1881 = vdwg.mxu0
      %v1883 = vsel %vm1028, %v1615, 0
      %v1886 = vsel %vm1028, %v1710, 0
      %1888 = vmatpush.xpose.msra.mxu0 0.0
      %1889 = vmatpush.xpose.msra.mxu0 0.0
      %1890 = vmatpush.xpose.msra.mxu0 0.0
      %1891 = vmatpush.xpose.msra.mxu0 0.0
      %1892 = vmatpush.xpose.msra.mxu0 0.0
      %1893 = vmatpush.xpose.msra.mxu0 0.0
      %1894 = vmatpush.xpose.msra.mxu0 0.0
      %1895 = vmatpush.xpose.msra.mxu0 0.0
      %1896 = vmatpush.xpose.msra.mxu0 0.0
      %1897 = vmatpush.xpose.msra.mxu0 0.0
      %1898 = vmatpush.xpose.msra.mxu0 0.0
      %1899 = vmatpush.xpose.msra.mxu0 0.0
      %1900 = vmatpush.xpose.msra.mxu0 0.0
      %1901 = vmatpush.xpose.msra.mxu0 0.0
      %1902 = vmatpush.xpose.msra.mxu0 0.0
      %1903 = vmatpush.xpose.msra.mxu0 %v1886
      %1904 = vmatmul.f32.gmra.mxu0 %v1883
      %v1905 = vpop.f32.mrf.mxu0
      %v1906 = vadd.f32 0.0, %v1905
      %1907 = vdwg.mxu0
      %v1908 = vmul.f32 %v1828, 0.35355338
      %v1909 = vmul.f32 %v1854, 0.35355338
      %v1910 = vmul.f32 %v1880, 0.35355338
      %v1911 = vmul.f32 %v1906, 0.35355338
      %v1912 = vsel %vm1028, %v1908, -inf
      %1913 = vmax.xlane.f32.xlu0 %v1912
      %v1914 = vpop.xlane.xlu0 %1913
      %v1915 = vsel %vm1028, %v1909, -inf
      %1916 = vmax.xlane.f32.xlu0 %v1915
      %v1917 = vpop.xlane.xlu0 %1916
      %v1918 = vsel %vm1028, %v1910, -inf
      %1919 = vmax.xlane.f32.xlu0 %v1918
      %v1920 = vpop.xlane.xlu0 %1919
      %v1921 = vsel %vm1028, %v1911, -inf
      %1922 = vmax.xlane.f32.xlu0 %v1921
      %v1923 = vpop.xlane.xlu0 %1922
      %v1924 = vsub.f32 %v1908, %v1914
      %v1925 = vsub.f32 %v1909, %v1917
      %v1926 = vsub.f32 %v1910, %v1920
      %v1927 = vsub.f32 %v1911, %v1923
      %v1928 = vmul.f32 %v1924, 1.442695
      %v1929 = vpow.pop %v1928
      %v1930 = vmul.f32 %v1925, 1.442695
      %v1931 = vpow.pop %v1930
      %v1932 = vmul.f32 %v1926, 1.442695
      %v1933 = vpow.pop %v1932
      %v1934 = vmul.f32 %v1927, 1.442695
      %v1935 = vpow.pop %v1934
      %v1936 = vsel %vm1028, %v1929, 0.0
      %1937 = vadd.xlane.f32.xlu0 %v1936
      %v1938 = vpop.xlane.xlu0 %1937
      %v1939 = vsel %vm1028, %v1931, 0.0
      %1940 = vadd.xlane.f32.xlu0 %v1939
      %v1941 = vpop.xlane.xlu0 %1940
      %v1942 = vsel %vm1028, %v1933, 0.0
      %1943 = vadd.xlane.f32.xlu0 %v1942
      %v1944 = vpop.xlane.xlu0 %1943
      %v1945 = vsel %vm1028, %v1935, 0.0
      %1946 = vadd.xlane.f32.xlu0 %v1945
      %v1947 = vpop.xlane.xlu0 %1946
      %v1948 = vrcp.pop %v1938
      %v1949 = vmul.f32 %v1938, %v1948
      %v1950 = vsub.f32 1.0, %v1949
      %v1951 = vmul.f32 %v1948, %v1950
      %v1952 = vadd.f32 %v1948, %v1951
      %vm1953 = vweird.f32 %v1938
      %vm1954 = vweird.f32 %v1948
      %vm1955 = vmor %vm1953, %vm1954
      %v1956 = vsel %vm1955, %v1948, %v1952
      %v1957 = vand.u32 2147483647, %v1938
      %vm1958 = vcmp.eq.f32.partialorder %v1957, 8.507059e+37
      %v1959 = vand.u32 %v1938, 2147483648
      %v1960 = vor.u32 1.1754944e-38, %v1959
      %v1961 = vsel %vm1958, %v1960, %v1956
      %v1962 = vmul.f32 %v1929, %v1961
      %v1963 = vrcp.pop %v1941
      %v1964 = vmul.f32 %v1941, %v1963
      %v1965 = vsub.f32 1.0, %v1964
      %v1966 = vmul.f32 %v1963, %v1965
      %v1967 = vadd.f32 %v1963, %v1966
      %vm1968 = vweird.f32 %v1941
      %vm1969 = vweird.f32 %v1963
      %vm1970 = vmor %vm1968, %vm1969
      %v1971 = vsel %vm1970, %v1963, %v1967
      %v1972 = vand.u32 2147483647, %v1941
      %vm1973 = vcmp.eq.f32.partialorder %v1972, 8.507059e+37
      %v1974 = vand.u32 %v1941, 2147483648
      %v1975 = vor.u32 1.1754944e-38, %v1974
      %v1976 = vsel %vm1973, %v1975, %v1971
      %v1977 = vmul.f32 %v1931, %v1976
      %v1978 = vrcp.pop %v1944
      %v1979 = vmul.f32 %v1944, %v1978
      %v1980 = vsub.f32 1.0, %v1979
      %v1981 = vmul.f32 %v1978, %v1980
      %v1982 = vadd.f32 %v1978, %v1981
      %vm1983 = vweird.f32 %v1944
      %vm1984 = vweird.f32 %v1978
      %vm1985 = vmor %vm1983, %vm1984
      %v1986 = vsel %vm1985, %v1978, %v1982
      %v1987 = vand.u32 2147483647, %v1944
      %vm1988 = vcmp.eq.f32.partialorder %v1987, 8.507059e+37
      %v1989 = vand.u32 %v1944, 2147483648
      %v1990 = vor.u32 1.1754944e-38, %v1989
      %v1991 = vsel %vm1988, %v1990, %v1986
      %v1992 = vmul.f32 %v1933, %v1991
      %v1993 = vrcp.pop %v1947
      %v1994 = vmul.f32 %v1947, %v1993
      %v1995 = vsub.f32 1.0, %v1994
      %v1996 = vmul.f32 %v1993, %v1995
      %v1997 = vadd.f32 %v1993, %v1996
      %vm1998 = vweird.f32 %v1947
      %vm1999 = vweird.f32 %v1993
      %vm2000 = vmor %vm1998, %vm1999
      %v2001 = vsel %vm2000, %v1993, %v1997
      %v2002 = vand.u32 2147483647, %v1947
      %vm2003 = vcmp.eq.f32.partialorder %v2002, 8.507059e+37
      %v2004 = vand.u32 %v1947, 2147483648
      %v2005 = vor.u32 1.1754944e-38, %v2004
      %v2006 = vsel %vm2003, %v2005, %v2001
      %v2007 = vmul.f32 %v1935, %v2006
      %v2009 = vsel %vm1028, %v1962, 0
      %2011 = vmatpush.msra.mxu0 0.0
      %2012 = vmatpush.msra.mxu0 0.0
      %2013 = vmatpush.msra.mxu0 0.0
      %2014 = vmatpush.msra.mxu0 0.0
      %2015 = vmatpush.msra.mxu0 0.0
      %2016 = vmatpush.msra.mxu0 0.0
      %2017 = vmatpush.msra.mxu0 0.0
      %2018 = vmatpush.msra.mxu0 0.0
      %2019 = vmatpush.msra.mxu0 0.0
      %2020 = vmatpush.msra.mxu0 0.0
      %2021 = vmatpush.msra.mxu0 0.0
      %2022 = vmatpush.msra.mxu0 0.0
      %2023 = vmatpush.msra.mxu0 0.0
      %2024 = vmatpush.msra.mxu0 0.0
      %2025 = vmatpush.msra.mxu0 0.0
      %2026 = vmatpush.msra.mxu0 %v1742
      %2027 = vmatmul.f32.gmra.mxu0 %v2009
      %v2028 = vpop.f32.mrf.mxu0
      %v2029 = vadd.f32 0.0, %v2028
      %2030 = vdwg.mxu0
      %v2032 = vsel %vm1028, %v1977, 0
      %2034 = vmatpush.msra.mxu0 0.0
      %2035 = vmatpush.msra.mxu0 0.0
      %2036 = vmatpush.msra.mxu0 0.0
      %2037 = vmatpush.msra.mxu0 0.0
      %2038 = vmatpush.msra.mxu0 0.0
      %2039 = vmatpush.msra.mxu0 0.0
      %2040 = vmatpush.msra.mxu0 0.0
      %2041 = vmatpush.msra.mxu0 0.0
      %2042 = vmatpush.msra.mxu0 0.0
      %2043 = vmatpush.msra.mxu0 0.0
      %2044 = vmatpush.msra.mxu0 0.0
      %2045 = vmatpush.msra.mxu0 0.0
      %2046 = vmatpush.msra.mxu0 0.0
      %2047 = vmatpush.msra.mxu0 0.0
      %2048 = vmatpush.msra.mxu0 0.0
      %2049 = vmatpush.msra.mxu0 %v1762
      %2050 = vmatmul.f32.gmra.mxu0 %v2032
      %v2051 = vpop.f32.mrf.mxu0
      %v2052 = vadd.f32 0.0, %v2051
      %2053 = vdwg.mxu0
      %v2055 = vsel %vm1028, %v1992, 0
      %2057 = vmatpush.msra.mxu0 0.0
      %2058 = vmatpush.msra.mxu0 0.0
      %2059 = vmatpush.msra.mxu0 0.0
      %2060 = vmatpush.msra.mxu0 0.0
      %2061 = vmatpush.msra.mxu0 0.0
      %2062 = vmatpush.msra.mxu0 0.0
      %2063 = vmatpush.msra.mxu0 0.0
      %2064 = vmatpush.msra.mxu0 0.0
      %2065 = vmatpush.msra.mxu0 0.0
      %2066 = vmatpush.msra.mxu0 0.0
      %2067 = vmatpush.msra.mxu0 0.0
      %2068 = vmatpush.msra.mxu0 0.0
      %2069 = vmatpush.msra.mxu0 0.0
      %2070 = vmatpush.msra.mxu0 0.0
      %2071 = vmatpush.msra.mxu0 0.0
      %2072 = vmatpush.msra.mxu0 %v1782
      %2073 = vmatmul.f32.gmra.mxu0 %v2055
      %v2074 = vpop.f32.mrf.mxu0
      %v2075 = vadd.f32 0.0, %v2074
      %2076 = vdwg.mxu0
      %v2078 = vsel %vm1028, %v2007, 0
      %2080 = vmatpush.msra.mxu0 0.0
      %2081 = vmatpush.msra.mxu0 0.0
      %2082 = vmatpush.msra.mxu0 0.0
      %2083 = vmatpush.msra.mxu0 0.0
      %2084 = vmatpush.msra.mxu0 0.0
      %2085 = vmatpush.msra.mxu0 0.0
      %2086 = vmatpush.msra.mxu0 0.0
      %2087 = vmatpush.msra.mxu0 0.0
      %2088 = vmatpush.msra.mxu0 0.0
      %2089 = vmatpush.msra.mxu0 0.0
      %2090 = vmatpush.msra.mxu0 0.0
      %2091 = vmatpush.msra.mxu0 0.0
      %2092 = vmatpush.msra.mxu0 0.0
      %2093 = vmatpush.msra.mxu0 0.0
      %2094 = vmatpush.msra.mxu0 0.0
      %2095 = vmatpush.msra.mxu0 %v1802
      %2096 = vmatmul.f32.gmra.mxu0 %v2078
      %v2097 = vpop.f32.mrf.mxu0
      %v2098 = vadd.f32 0.0, %v2097
      %2099 = vdwg.mxu0
      %v2101 = vsel %vm1028, %v2029, 0
      %2103 = vmatpush.msra.mxu0 0.0
      %2104 = vmatpush.msra.mxu0 0.0
      %2105 = vmatpush.msra.mxu0 0.0
      %2106 = vmatpush.msra.mxu0 0.0
      %2107 = vmatpush.msra.mxu0 0.0
      %2108 = vmatpush.msra.mxu0 0.0
      %2109 = vmatpush.msra.mxu0 0.0
      %2110 = vmatpush.msra.mxu0 0.0
      %2111 = vmatpush.msra.mxu0 0.0
      %2112 = vmatpush.msra.mxu0 0.0
      %2113 = vmatpush.msra.mxu0 0.0
      %2114 = vmatpush.msra.mxu0 0.0
      %2115 = vmatpush.msra.mxu0 0.0
      %2116 = vmatpush.msra.mxu0 0.0
      %2117 = vmatpush.msra.mxu0 0.0
      %2118 = vmatpush.msra.mxu0 %v1517
      %2119 = vmatmul.f32.gmra.mxu0 %v2101
      %v2120 = vpop.f32.mrf.mxu0
      %v2121 = vadd.f32 0.0, %v2120
      %2122 = vdwg.mxu0
      %v2124 = vsel %vm1028, %v2052, 0
      %2126 = vmatpush.msra.mxu0 0.0
      %2127 = vmatpush.msra.mxu0 0.0
      %2128 = vmatpush.msra.mxu0 0.0
      %2129 = vmatpush.msra.mxu0 0.0
      %2130 = vmatpush.msra.mxu0 0.0
      %2131 = vmatpush.msra.mxu0 0.0
      %2132 = vmatpush.msra.mxu0 0.0
      %2133 = vmatpush.msra.mxu0 0.0
      %2134 = vmatpush.msra.mxu0 0.0
      %2135 = vmatpush.msra.mxu0 0.0
      %2136 = vmatpush.msra.mxu0 0.0
      %2137 = vmatpush.msra.mxu0 0.0
      %2138 = vmatpush.msra.mxu0 0.0
      %2139 = vmatpush.msra.mxu0 0.0
      %2140 = vmatpush.msra.mxu0 0.0
      %2141 = vmatpush.msra.mxu0 %v1518
      %2142 = vmatmul.f32.gmra.mxu0 %v2124
      %v2143 = vpop.f32.mrf.mxu0
      %v2144 = vadd.f32 0.0, %v2143
      %2145 = vdwg.mxu0
      %v2147 = vsel %vm1028, %v2075, 0
      %2149 = vmatpush.msra.mxu0 0.0
      %2150 = vmatpush.msra.mxu0 0.0
      %2151 = vmatpush.msra.mxu0 0.0
      %2152 = vmatpush.msra.mxu0 0.0
      %2153 = vmatpush.msra.mxu0 0.0
      %2154 = vmatpush.msra.mxu0 0.0
      %2155 = vmatpush.msra.mxu0 0.0
      %2156 = vmatpush.msra.mxu0 0.0
      %2157 = vmatpush.msra.mxu0 0.0
      %2158 = vmatpush.msra.mxu0 0.0
      %2159 = vmatpush.msra.mxu0 0.0
      %2160 = vmatpush.msra.mxu0 0.0
      %2161 = vmatpush.msra.mxu0 0.0
      %2162 = vmatpush.msra.mxu0 0.0
      %2163 = vmatpush.msra.mxu0 0.0
      %2164 = vmatpush.msra.mxu0 %v1519
      %2165 = vmatmul.f32.gmra.mxu0 %v2147
      %v2166 = vpop.f32.mrf.mxu0
      %v2167 = vadd.f32 0.0, %v2166
      %2168 = vdwg.mxu0
      %v2170 = vsel %vm1028, %v2098, 0
      %2172 = vmatpush.msra.mxu0 0.0
      %2173 = vmatpush.msra.mxu0 0.0
      %2174 = vmatpush.msra.mxu0 0.0
      %2175 = vmatpush.msra.mxu0 0.0
      %2176 = vmatpush.msra.mxu0 0.0
      %2177 = vmatpush.msra.mxu0 0.0
      %2178 = vmatpush.msra.mxu0 0.0
      %2179 = vmatpush.msra.mxu0 0.0
      %2180 = vmatpush.msra.mxu0 0.0
      %2181 = vmatpush.msra.mxu0 0.0
      %2182 = vmatpush.msra.mxu0 0.0
      %2183 = vmatpush.msra.mxu0 0.0
      %2184 = vmatpush.msra.mxu0 0.0
      %2185 = vmatpush.msra.mxu0 0.0
      %2186 = vmatpush.msra.mxu0 0.0
      %2187 = vmatpush.msra.mxu0 %v1520
      %2188 = vmatmul.f32.gmra.mxu0 %v2170
      %v2189 = vpop.f32.mrf.mxu0
      %v2190 = vadd.f32 0.0, %v2189
      %2191 = vdwg.mxu0
      %v2192 = vadd.f32 %v2121, %v2144
      %v2193 = vadd.f32 %v2192, %v2167
      %v2194 = vadd.f32 %v2193, %v2190
      %v2196 = vperm.slane %v1521, 0
      %v2198 = vadd.f32 %v2194, %v2196
      %v2199 = vadd.f32 %v1424, %v2198
      %v2200 = vld [vmem:[%s14] sm:$0x1]
      %v2201 = vld [vmem:[%s15] sm:$0x1]
      %v2202 = vsel %vm646, %v2199, 0.0
      %2203 = vadd.xlane.f32.xlu0 %v2202
      %v2204 = vpop.xlane.xlu0 %2203
      %v2205 = vmul.f32 %v2204, %v656
      %v2206 = vsub.f32 %v2199, %v2205
      %v2207 = vmul.f32 %v2206, %v2206
      %v2208 = vsel %vm646, %v2207, 0.0
      %2209 = vadd.xlane.f32.xlu0 %v2208
      %v2210 = vpop.xlane.xlu0 %2209
      %v2211 = vmul.f32 %v2210, %v656
      %v2212 = vadd.f32 %v2211, 1e-05
      %v2213 = vrsqrt.pop %v2212
      %v2214 = vmul.f32 %v2213, %v2212
      %v2215 = vmul.f32 %v2214, %v2213
      %v2216 = vmul.f32 0.5, %v2215
      %v2217 = vsub.f32 1.5, %v2216
      %v2218 = vmul.f32 %v2213, %v2217
      %vm2219 = vweird.f32 %v2212
      %vm2220 = vweird.f32 %v2213
      %vm2221 = vmor %vm2219, %vm2220
      %v2222 = vsel %vm2221, %v2213, %v2218
      %v2223 = vmul.f32 %v2206, %v2222
      %v2225 = vperm.slane %v2200, 0
      %v2227 = vmul.f32 %v2223, %v2225
      %v2229 = vperm.slane %v2201, 0
      %v2231 = vadd.f32 %v2227, %v2229
      %v2232 = vld [vmem:[%s16] sm:$0xff]
      %v2233 = vld [vmem:[%s16 + $0x8] sm:$0xff]
      %v2234 = vld [vmem:[%s16 + $0x10] sm:$0xff]
      %v2235 = vld [vmem:[%s16 + $0x18] sm:$0xff]
      %v2236 = vld [vmem:[%s17] sm:$0x1]
      %v2238 = vperm.slane %v2236, 0
      %v2241 = vsel %vm646, %v2231, 0
      %2243 = vmatpush.msra.mxu0 0.0
      %2244 = vmatpush.msra.mxu0 0.0
      %2245 = vmatpush.msra.mxu0 0.0
      %2246 = vmatpush.msra.mxu0 0.0
      %2247 = vmatpush.msra.mxu0 0.0
      %2248 = vmatpush.msra.mxu0 0.0
      %2249 = vmatpush.msra.mxu0 0.0
      %2250 = vmatpush.msra.mxu0 0.0
      %2251 = vmatpush.msra.mxu0 0.0
      %2252 = vmatpush.msra.mxu0 0.0
      %2253 = vmatpush.msra.mxu0 0.0
      %2254 = vmatpush.msra.mxu0 0.0
      %2255 = vmatpush.msra.mxu0 %v2235
      %2256 = vmatpush.msra.mxu0 %v2234
      %2257 = vmatpush.msra.mxu0 %v2233
      %2258 = vmatpush.msra.mxu0 %v2232
      %2259 = vmatmul.f32.gmra.mxu0 %v2241
      %v2260 = vpop.f32.mrf.mxu0
      %v2261 = vadd.f32 %v2238, %v2260
      %2262 = vdwg.mxu0
      %v2263 = vmul.f32 %v2261, 0.5
      %v2264 = vmul.f32 %v2261, 0.70710677
      %vm2265 = vcmp.ge.f32.partialorder %v2264, 0.0
      %v2266 = vsel %vm2265, 1.0, -1.0
      %v2267 = vand.u32 2147483647, %v2264
      %v2268 = vmul.f32 %v2267, 0.3275911
      %v2269 = vadd.f32 %v2268, 1.0
      %v2270 = vrcp.pop %v2269
      %v2271 = vmul.f32 %v2269, %v2270
      %v2272 = vsub.f32 1.0, %v2271
      %v2273 = vmul.f32 %v2270, %v2272
      %v2274 = vadd.f32 %v2270, %v2273
      %vm2275 = vweird.f32 %v2269
      %vm2276 = vweird.f32 %v2270
      %vm2277 = vmor %vm2275, %vm2276
      %v2278 = vsel %vm2277, %v2270, %v2274
      %v2279 = vand.u32 2147483647, %v2269
      %vm2280 = vcmp.eq.f32.partialorder %v2279, 8.507059e+37
      %v2281 = vand.u32 %v2269, 2147483648
      %v2282 = vor.u32 1.1754944e-38, %v2281
      %v2283 = vsel %vm2280, %v2282, %v2278
      %v2284 = vmul.f32 1.0, %v2283
      %v2285 = vmul.f32 %v2284, 1.0614054
      %v2286 = vadd.f32 %v2285, -1.4531521
      %v2287 = vmul.f32 %v2286, %v2284
      %v2288 = vadd.f32 %v2287, 1.4214138
      %v2289 = vmul.f32 %v2288, %v2284
      %v2290 = vadd.f32 %v2289, -0.28449672
      %v2291 = vmul.f32 %v2290, %v2284
      %v2292 = vadd.f32 %v2291, 0.2548296
      %v2293 = vmul.f32 %v2292, %v2284
      %v2294 = vsub.f32 0.0, %v2267
      %v2295 = vmul.f32 %v2294, %v2267
      %v2296 = vmul.f32 %v2295, 1.442695
      %v2297 = vpow.pop %v2296
      %v2298 = vmul.f32 %v2293, %v2297
      %v2299 = vsub.f32 1.0, %v2298
      %v2300 = vmul.f32 %v2266, %v2299
      %v2301 = vadd.f32 %v2300, 1.0
      %v2302 = vmul.f32 %v2263, %v2301
      %v2303 = vld [vmem:[%s18] sm:$0xff]
      %v2304 = vld [vmem:[%s18 + $0x8] sm:$0xff]
      %v2305 = vld [vmem:[%s18 + $0x10] sm:$0xff]
      %v2306 = vld [vmem:[%s18 + $0x18] sm:$0xff]
      %v2307 = vld [vmem:[%s18 + $0x20] sm:$0xff]
      %v2308 = vld [vmem:[%s18 + $0x28] sm:$0xff]
      %v2309 = vld [vmem:[%s18 + $0x30] sm:$0xff]
      %v2310 = vld [vmem:[%s18 + $0x38] sm:$0xff]
      %v2311 = vld [vmem:[%s19] sm:$0x1]
      %v2313 = vperm.slane %v2311, 0
      %vm2315 = vcmask 523264
      %v2317 = vsel %vm2315, %v2302, 0
      %2319 = vmatpush.msra.mxu0 0.0
      %2320 = vmatpush.msra.mxu0 0.0
      %2321 = vmatpush.msra.mxu0 0.0
      %2322 = vmatpush.msra.mxu0 0.0
      %2323 = vmatpush.msra.mxu0 0.0
      %2324 = vmatpush.msra.mxu0 0.0
      %2325 = vmatpush.msra.mxu0 0.0
      %2326 = vmatpush.msra.mxu0 0.0
      %2327 = vmatpush.msra.mxu0 %v2310
      %2328 = vmatpush.msra.mxu0 %v2309
      %2329 = vmatpush.msra.mxu0 %v2308
      %2330 = vmatpush.msra.mxu0 %v2307
      %2331 = vmatpush.msra.mxu0 %v2306
      %2332 = vmatpush.msra.mxu0 %v2305
      %2333 = vmatpush.msra.mxu0 %v2304
      %2334 = vmatpush.msra.mxu0 %v2303
      %2335 = vmatmul.f32.gmra.mxu0 %v2317
      %v2336 = vpop.f32.mrf.mxu0
      %v2337 = vadd.f32 %v2313, %v2336
      %2338 = vdwg.mxu0
      %v2339 = vadd.f32 %v2199, %v2337
      %2340 = vst.msk [vmem:[%s641] sm:$0xff] %vm646, %v2339
      %p2341 = scmp.lt.s32.totalorder %s31, 1
      %s2342 = scalar_select %p2341, %s31, 1
      %s2343 = smul.addr %s2342, 8
      %s2344 = scalar_lea.vmem %s20, %s2343
      // Predicated region
      $region101: #{transformer_forward.7} parent=99 // pred_check
        %p2345 = pneg %p479
      $region102: #{transformer_forward.7} parent=99 // pred_check_branch
        %2347 = sbr.rel (%p2345) target = $region104
      $region103: #{transformer_forward.7} parent=99 // pred_region
        _
      $region104: #{transformer_forward.7} parent=99 // pred_fallthru
        _
    $region100: #{transformer_forward.7} parent=5 // pred_fallthru
      _
    %p2348 = scmp.le.s32.totalorder 2, %s26
    // Predicated region
    $region105: #{transformer_forward.7} parent=5 // pred_check
      %p2349 = pneg %p2348
    $region106: #{transformer_forward.7} parent=5 // pred_check_branch
      %2351 = sbr.rel (%p2349) target = $region108
    $region107: #{transformer_forward.7} parent=5 // pred_region
      %s2352 = ssub.s32 %s26, 2
      // Predicated region
      $region109: #{transformer_forward.7} parent=107 // pred_check
        %p2353 = pneg %p485
      $region110: #{transformer_forward.7} parent=107 // pred_check_branch
        %2355 = sbr.rel (%p2353) target = $region112
      $region111: #{transformer_forward.7} parent=107 // pred_region
        %p2356 = scmp.lt.s32.totalorder %s32, 1
        %s2357 = scalar_select %p2356, %s32, 1
        %s2358 = smul.addr %s2357, 8
        %s2359 = scalar_lea.vmem %s20, %s2358
      $region112: #{transformer_forward.7} parent=107 // pred_fallthru
        _
    $region108: #{transformer_forward.7} parent=5 // pred_fallthru
      _
  $region6: #{transformer_forward.7} parent=0 // loop_footer
    %s30 = sadd.s32 1, %s26
  $region7: #{transformer_forward.7} parent=0 // loop_footer_branch
    %25 = sbr.rel target = $region3
  $region8: #{transformer_forward.7} parent=0 // loop_exit
    _

</llo_original>
